<compile_context>
chip_gen: v7x
topology: tpu7x:2x2x1
jax: 0.10.0
libtpu: 0.0.40
codegen_flags: <defaults>
</compile_context>

<pallas_src>
import math
import functools

import jax
import jax.numpy as jnp
from jax.experimental import pallas as pl
from jax.experimental.pallas import tpu as pltpu

DOWN = 64          # Adapter bottleneck (down_size)
NHEAD_DEC = 2      # nhead of the adapter's TransformerDecoderLayer
EPS = 1e-5         # nn.LayerNorm default eps
NEG_INF = -1e30    # additive mask value for padded keys


# ------------------------------ small helpers -------------------------------

def _row(v):
    return v.reshape(1, -1)


def _mm(a, b):
    return jnp.dot(a, b, preferred_element_type=jnp.float32)


def _layernorm(x, g, b):
    mu = jnp.mean(x, axis=-1, keepdims=True)
    var = jnp.mean((x - mu) ** 2, axis=-1, keepdims=True)
    return (x - mu) * jax.lax.rsqrt(var + EPS) * g + b


def _mha(q, k, v, wo, bo, nheads, add_mask):
    """Multi-head attention on a single batch element.

    q:(Lq,Dm) k,v:(Lk,Dm).  Per-head context is pushed through the matching
    row-slice of the output projection and accumulated (no lane concat)."""
    Lq, Dm = q.shape
    hd = Dm // nheads
    scale = 1.0 / math.sqrt(hd)
    out = jnp.zeros((Lq, wo.shape[1]), jnp.float32)
    for h in range(nheads):                       # static unroll over heads
        sl = slice(h * hd, (h + 1) * hd)
        s = jax.lax.dot_general(q[:, sl], k[:, sl], (((1,), (1,)), ((), ())),
                                preferred_element_type=jnp.float32) * scale
        if add_mask is not None:
            s = s + add_mask
        s = s - jnp.max(s, axis=-1, keepdims=True)
        e = jnp.exp(s)
        p = e / jnp.sum(e, axis=-1, keepdims=True)
        ctx = _mm(p, v[:, sl])                    # (Lq, hd)
        out = out + _mm(ctx, wo[sl, :])           # accumulate out-proj per head
    return out + bo


# ------------------------------ fused kernel --------------------------------

def _residual_block_kernel(x_ref, prior_ref, mask_ref,
                           wd_ref, bd_ref, wu_ref, bu_ref, asc_ref,
                           ln1g_ref, ln1b_ref, wqkv_ref, bqkv_ref, wao_ref, bao_ref,
                           ln2g_ref, ln2b_ref, wfc_ref, bfc_ref, wcp_ref, bcp_ref,
                           *rest, num_layers, n_head):
    # trailing refs: 14 per adapter-decoder layer, then the output ref
    layer_refs = rest[:-1]
    o_ref = rest[-1]

    x = x_ref[0]                                        # (L, D)
    mem = prior_ref[0]                                  # (S, Dd)
    madd = jnp.where(mask_ref[0] > 0, NEG_INF, 0.0)     # (1, S) additive key mask

    D = x.shape[1]
    Dd = mem.shape[1]

    # -------- Adapter: down_proj + ReLU, cross-attn decoder layer(s) ---------
    t = jnp.maximum(_mm(x, wd_ref[...]) + bd_ref[...], 0.0)          # (L, Dd)

    for li in range(num_layers):                         # static unroll
        (wq, bq, wkv, bkv, wo, bo, w1, b1, w2, b2,
         l2g, l2b, l3g, l3b) = layer_refs[li * 14:(li + 1) * 14]
        q = _mm(t, wq[...]) + bq[...]                                 # (L, Dd)
        kv = _mm(mem, wkv[...]) + bkv[...]                            # fused K|V
        k, v = kv[:, :Dd], kv[:, Dd:]
        attn = _mha(q, k, v, wo[...], bo[...], NHEAD_DEC, madd)       # cross-attn
        t = _layernorm(t + attn, l2g[...], l2b[...])                  # norm2
        f = jnp.maximum(_mm(t, w1[...]) + b1[...], 0.0)               # linear1+relu
        f = _mm(f, w2[...]) + b2[...]                                 # linear2
        t = _layernorm(t + f, l3g[...], l3b[...])                     # norm3

    adapt = (_mm(t, wu_ref[...]) + bu_ref[...]) * asc_ref[...]        # up_proj*scale
    x = x + adapt                                                     # x = x + adapt_x

    # -------- Main block: ln_1 -> self-attention -> residual -----------------
    xn = _layernorm(x, ln1g_ref[...], ln1b_ref[...])
    qkv = _mm(xn, wqkv_ref[...]) + bqkv_ref[...]                      # fused QKV
    q, k, v = qkv[:, :D], qkv[:, D:2 * D], qkv[:, 2 * D:]
    # TODO(synk): support a non-None causal attn_mask (additive (L,L) bias).
    attn = _mha(q, k, v, wao_ref[...], bao_ref[...], n_head, None)
    x = x + attn

    # -------- Main block: ln_2 -> c_fc -> QuickGELU -> c_proj -> residual ----
    xn2 = _layernorm(x, ln2g_ref[...], ln2b_ref[...])
    h = _mm(xn2, wfc_ref[...]) + bfc_ref[...]
    h = h * (1.0 / (1.0 + jnp.exp(-1.702 * h)))                       # QuickGELU
    x = x + _mm(h, wcp_ref[...]) + bcp_ref[...]

    o_ref[0] = x.astype(o_ref.dtype)


# --------------------------------- wrapper -----------------------------------

def residual_attention_block_forward(x, prior, mask, params, n_head):
    """Fused Pallas forward of ResidualAttentionBlock(adapter=True), eval mode.

    The PyTorch module returns (x, prior, text_context); prior/mask pass
    through unchanged, so only the new x is returned here.
    # TODO(synk): multi_cross / text_context concatenation path not implemented.
    """
    L, N, D = x.shape
    S = prior.shape[1]
    a = params["adapter"]
    Dd = a["w_down"].shape[1]
    num_layers = len(a["layers"])

    # Single layout transpose so the batch axis is leading (clean (L,D) blocks
    # and a 'parallel' batch grid for v7x's two TensorCores).  The additive
    # mask is built inside the kernel from this raw int mask.
    xb = jnp.transpose(x, (1, 0, 2)).astype(jnp.float32)    # (N, L, D)
    mask_i = mask.astype(jnp.int32).reshape(N, 1, S)

    inputs = [xb, prior.astype(jnp.float32), mask_i,
              a["w_down"], _row(a["b_down"]),
              a["w_up"], _row(a["b_up"]), _row(a["scale"]),
              _row(params["ln1_g"]), _row(params["ln1_b"]),
              params["w_qkv"], _row(params["b_qkv"]),
              params["w_ao"], _row(params["b_ao"]),
              _row(params["ln2_g"]), _row(params["ln2_b"]),
              params["w_fc"], _row(params["b_fc"]),
              params["w_cp"], _row(params["b_cp"])]
    for lp in a["layers"]:
        inputs += [lp["wq"], _row(lp["bq"]), lp["w_kv"], _row(lp["b_kv"]),
                   lp["wo"], _row(lp["bo"]), lp["w1"], _row(lp["b1"]),
                   lp["w2"], _row(lp["b2"]),
                   _row(lp["ln2_g"]), _row(lp["ln2_b"]),
                   _row(lp["ln3_g"]), _row(lp["ln3_b"])]

    def per_batch(shape):
        rest = tuple(shape[1:])
        return pl.BlockSpec((1,) + rest, lambda b, _n=len(rest): (b,) + (0,) * _n)

    def resident(arr):
        # full-array block, constant index map -> stays VMEM-resident across steps
        return pl.BlockSpec(arr.shape, lambda b, _nd=arr.ndim: (0,) * _nd)

    in_specs = [per_batch(xb.shape), per_batch(prior.shape), per_batch(mask_i.shape)]
    in_specs += [resident(arr) for arr in inputs[3:]]

    out = pl.pallas_call(
        functools.partial(_residual_block_kernel,
                          num_layers=num_layers, n_head=n_head),
        grid=(N,),
        in_specs=in_specs,
        out_specs=pl.BlockSpec((1, L, D), lambda b: (b, 0, 0)),
        out_shape=jax.ShapeDtypeStruct((N, L, D), jnp.float32),
        compiler_params=pltpu.CompilerParams(
            dimension_semantics=("parallel",)),   # batch across TCs on v7x
    )(*inputs)

    return jnp.transpose(out, (1, 0, 2))          # back to (L, N, D)


# ------------------------------- parameters ----------------------------------

def init_params(key, d_model, num_adapter_layers=1, dd=DOWN):
    ki = iter(jax.random.split(key, 64))

    def w(shape, s=0.05):
        return jax.random.normal(next(ki), shape, jnp.float32) * s

    def b(shape, s=0.02):
        return jax.random.normal(next(ki), shape, jnp.float32) * s

    def g(shape):
        return 1.0 + jax.random.normal(next(ki), shape, jnp.float32) * 0.05

    # NOTE: the module lora-zero-inits up_proj and scale=1e-9 (learnable vector);
    # small random values are used here so the adapter path is numerically
    # exercised by the correctness check.
    adapter = {
        "w_down": w((d_model, dd)), "b_down": b((dd,)),
        "w_up": w((dd, d_model)), "b_up": b((d_model,)),
        "scale": 0.5 + jax.random.normal(next(ki), (d_model,), jnp.float32) * 0.1,
        "layers": [],
    }
    for _ in range(num_adapter_layers):
        adapter["layers"].append({
            "wq": w((dd, dd)), "bq": b((dd,)),
            "w_kv": w((dd, 2 * dd)), "b_kv": b((2 * dd,)),   # fused K|V weight
            "wo": w((dd, dd)), "bo": b((dd,)),
            "w1": w((dd, 2 * dd)), "b1": b((2 * dd,)),       # dim_feedforward = 2*dd
            "w2": w((2 * dd, dd)), "b2": b((dd,)),
            "ln2_g": g((dd,)), "ln2_b": b((dd,)),
            "ln3_g": g((dd,)), "ln3_b": b((dd,)),
        })
    return {
        "adapter": adapter,
        "ln1_g": g((d_model,)), "ln1_b": b((d_model,)),
        "w_qkv": w((d_model, 3 * d_model)), "b_qkv": b((3 * d_model,)),
        "w_ao": w((d_model, d_model)), "b_ao": b((d_model,)),
        "ln2_g": g((d_model,)), "ln2_b": b((d_model,)),
        "w_fc": w((d_model, 4 * d_model)), "b_fc": b((4 * d_model,)),
        "w_cp": w((4 * d_model, d_model)), "b_cp": b((d_model,)),
    }


# --------------------------- pure-JAX reference ------------------------------

def _ln_ref(x, g, b):
    mu = jnp.mean(x, -1, keepdims=True)
    var = jnp.mean((x - mu) ** 2, -1, keepdims=True)
    return (x - mu) * jax.lax.rsqrt(var + EPS) * g + b


def _mha_ref(q, k, v, wo, bo, nheads, add_mask=None):
    B, Lq, Dm = q.shape
    Lk = k.shape[1]
    hd = Dm // nheads
    qh = q.reshape(B, Lq, nheads, hd).transpose(0, 2, 1, 3)
    kh = k.reshape(B, Lk, nheads, hd).transpose(0, 2, 1, 3)
    vh = v.reshape(B, Lk, nheads, hd).transpose(0, 2, 1, 3)
    s = jnp.einsum("bhqd,bhkd->bhqk", qh, kh) / math.sqrt(hd)
    if add_mask is not None:
        s = s + add_mask
    p = jax.nn.softmax(s, axis=-1)
    c = jnp.einsum("bhqk,bhkd->bhqd", p, vh).transpose(0, 2, 1, 3).reshape(B, Lq, Dm)
    return c @ wo + bo


def reference_forward(x, prior, mask, params, n_head):
    L, N, D = x.shape
    a = params["adapter"]
    dd = a["w_down"].shape[1]
    # adapter
    t = jnp.maximum(x @ a["w_down"] + a["b_down"], 0.0)          # (L,N,dd)
    tgt = t.transpose(1, 0, 2)                                   # (N,L,dd)
    madd = jnp.where(mask, NEG_INF, 0.0)[:, None, None, :]
    for lp in a["layers"]:
        q = tgt @ lp["wq"] + lp["bq"]
        kv = prior @ lp["w_kv"] + lp["b_kv"]
        k, v = kv[..., :dd], kv[..., dd:]
        attn = _mha_ref(q, k, v, lp["wo"], lp["bo"], NHEAD_DEC, madd)
        tgt = _ln_ref(tgt + attn, lp["ln2_g"], lp["ln2_b"])
        f = jnp.maximum(tgt @ lp["w1"] + lp["b1"], 0.0) @ lp["w2"] + lp["b2"]
        tgt = _ln_ref(tgt + f, lp["ln3_g"], lp["ln3_b"])
    adapt = (tgt @ a["w_up"] + a["b_up"]) * a["scale"]           # (N,L,D)
    x = x + adapt.transpose(1, 0, 2)
    # main self-attention
    xn = _ln_ref(x, params["ln1_g"], params["ln1_b"])
    qkv = xn @ params["w_qkv"] + params["b_qkv"]
    q, k, v = qkv[..., :D], qkv[..., D:2 * D], qkv[..., 2 * D:]
    qb, kb, vb = (u.transpose(1, 0, 2) for u in (q, k, v))
    attn = _mha_ref(qb, kb, vb, params["w_ao"], params["b_ao"], n_head, None)
    x = x + attn.transpose(1, 0, 2)
    # MLP (QuickGELU)
    xn2 = _ln_ref(x, params["ln2_g"], params["ln2_b"])
    h = xn2 @ params["w_fc"] + params["b_fc"]
    h = h * jax.nn.sigmoid(1.702 * h)
    return x + h @ params["w_cp"] + params["b_cp"]


# ----------------------------------- main ------------------------------------

if __name__ == "__main__":
    key = jax.random.PRNGKey(0)
    kx, kp, kparam = jax.random.split(key, 3)

    L, N, S = 8, 2, 8       # seq_len, batch, prior tokens (padded to a sublane group)
    D = 128                 # d_model (lane-dense: multiple of 128)
    N_HEAD = 4              # heads of the main CLIP attention

    x = jax.random.normal(kx, (L, N, D), jnp.float32)
    prior = jax.random.normal(kp, (N, S, DOWN), jnp.float32)
    lengths = jnp.array([6, 4])
    mask = jnp.arange(S)[None, :] >= lengths[:, None]    # (N, S) bool, True = pad

    params = init_params(kparam, D, num_adapter_layers=1)

    fwd = jax.jit(functools.partial(residual_attention_block_forward, n_head=N_HEAD))
    out = jax.block_until_ready(fwd(x, prior, mask, params))

    ref = reference_forward(x, prior, mask, params, N_HEAD)
    assert out.shape == x.shape
    err = float(jnp.max(jnp.abs(out - ref)))
    assert jnp.allclose(out, ref, atol=1e-2, rtol=1e-2), err
    print("KERNEL_OK")
</pallas_src>

<mosaic_0001>
module attributes {stable_mosaic.version = 11 : i64} {
  func.func @_residual_block_kernel(%arg0: i32, %arg1: memref<1x8x128xf32, #tpu.memory_space<vmem>>, %arg2: memref<1x8x64xf32, #tpu.memory_space<vmem>>, %arg3: memref<1x1x8xi32, #tpu.memory_space<vmem>>, %arg4: memref<128x64xf32, #tpu.memory_space<vmem>>, %arg5: memref<1x64xf32, #tpu.memory_space<vmem>>, %arg6: memref<64x128xf32, #tpu.memory_space<vmem>>, %arg7: memref<1x128xf32, #tpu.memory_space<vmem>>, %arg8: memref<1x128xf32, #tpu.memory_space<vmem>>, %arg9: memref<1x128xf32, #tpu.memory_space<vmem>>, %arg10: memref<1x128xf32, #tpu.memory_space<vmem>>, %arg11: memref<128x384xf32, #tpu.memory_space<vmem>>, %arg12: memref<1x384xf32, #tpu.memory_space<vmem>>, %arg13: memref<128x128xf32, #tpu.memory_space<vmem>>, %arg14: memref<1x128xf32, #tpu.memory_space<vmem>>, %arg15: memref<1x128xf32, #tpu.memory_space<vmem>>, %arg16: memref<1x128xf32, #tpu.memory_space<vmem>>, %arg17: memref<128x512xf32, #tpu.memory_space<vmem>>, %arg18: memref<1x512xf32, #tpu.memory_space<vmem>>, %arg19: memref<512x128xf32, #tpu.memory_space<vmem>>, %arg20: memref<1x128xf32, #tpu.memory_space<vmem>>, %arg21: memref<64x64xf32, #tpu.memory_space<vmem>>, %arg22: memref<1x64xf32, #tpu.memory_space<vmem>>, %arg23: memref<64x128xf32, #tpu.memory_space<vmem>>, %arg24: memref<1x128xf32, #tpu.memory_space<vmem>>, %arg25: memref<64x64xf32, #tpu.memory_space<vmem>>, %arg26: memref<1x64xf32, #tpu.memory_space<vmem>>, %arg27: memref<64x128xf32, #tpu.memory_space<vmem>>, %arg28: memref<1x128xf32, #tpu.memory_space<vmem>>, %arg29: memref<128x64xf32, #tpu.memory_space<vmem>>, %arg30: memref<1x64xf32, #tpu.memory_space<vmem>>, %arg31: memref<1x64xf32, #tpu.memory_space<vmem>>, %arg32: memref<1x64xf32, #tpu.memory_space<vmem>>, %arg33: memref<1x64xf32, #tpu.memory_space<vmem>>, %arg34: memref<1x64xf32, #tpu.memory_space<vmem>>, %arg35: memref<1x8x128xf32, #tpu.memory_space<vmem>>) attributes {dimension_semantics = [#tpu.dimension_semantics<parallel>], iteration_bounds = array<i64: 2>, scalar_prefetch = 0 : i64, scratch_operands = 0 : i64, tpu.core_type = #tpu.core_type<tc>, window_params = [{transform_indices = @transform_0, window_bounds = array<i64: 1, 8, 128>}, {transform_indices = @transform_1, window_bounds = array<i64: 1, 8, 64>}, {transform_indices = @transform_2, window_bounds = array<i64: 1, 1, 8>}, {pipeline_mode = #tpu.pipeline_mode<synchronous>, transform_indices = @transform_3, window_bounds = array<i64: 128, 64>}, {pipeline_mode = #tpu.pipeline_mode<synchronous>, transform_indices = @transform_4, window_bounds = array<i64: 1, 64>}, {pipeline_mode = #tpu.pipeline_mode<synchronous>, transform_indices = @transform_5, window_bounds = array<i64: 64, 128>}, {pipeline_mode = #tpu.pipeline_mode<synchronous>, transform_indices = @transform_6, window_bounds = array<i64: 1, 128>}, {pipeline_mode = #tpu.pipeline_mode<synchronous>, transform_indices = @transform_7, window_bounds = array<i64: 1, 128>}, {pipeline_mode = #tpu.pipeline_mode<synchronous>, transform_indices = @transform_8, window_bounds = array<i64: 1, 128>}, {pipeline_mode = #tpu.pipeline_mode<synchronous>, transform_indices = @transform_9, window_bounds = array<i64: 1, 128>}, {pipeline_mode = #tpu.pipeline_mode<synchronous>, transform_indices = @transform_10, window_bounds = array<i64: 128, 384>}, {pipeline_mode = #tpu.pipeline_mode<synchronous>, transform_indices = @transform_11, window_bounds = array<i64: 1, 384>}, {pipeline_mode = #tpu.pipeline_mode<synchronous>, transform_indices = @transform_12, window_bounds = array<i64: 128, 128>}, {pipeline_mode = #tpu.pipeline_mode<synchronous>, transform_indices = @transform_13, window_bounds = array<i64: 1, 128>}, {pipeline_mode = #tpu.pipeline_mode<synchronous>, transform_indices = @transform_14, window_bounds = array<i64: 1, 128>}, {pipeline_mode = #tpu.pipeline_mode<synchronous>, transform_indices = @transform_15, window_bounds = array<i64: 1, 128>}, {pipeline_mode = #tpu.pipeline_mode<synchronous>, transform_indices = @transform_16, window_bounds = array<i64: 128, 512>}, {pipeline_mode = #tpu.pipeline_mode<synchronous>, transform_indices = @transform_17, window_bounds = array<i64: 1, 512>}, {pipeline_mode = #tpu.pipeline_mode<synchronous>, transform_indices = @transform_18, window_bounds = array<i64: 512, 128>}, {pipeline_mode = #tpu.pipeline_mode<synchronous>, transform_indices = @transform_19, window_bounds = array<i64: 1, 128>}, {pipeline_mode = #tpu.pipeline_mode<synchronous>, transform_indices = @transform_20, window_bounds = array<i64: 64, 64>}, {pipeline_mode = #tpu.pipeline_mode<synchronous>, transform_indices = @transform_21, window_bounds = array<i64: 1, 64>}, {pipeline_mode = #tpu.pipeline_mode<synchronous>, transform_indices = @transform_22, window_bounds = array<i64: 64, 128>}, {pipeline_mode = #tpu.pipeline_mode<synchronous>, transform_indices = @transform_23, window_bounds = array<i64: 1, 128>}, {pipeline_mode = #tpu.pipeline_mode<synchronous>, transform_indices = @transform_24, window_bounds = array<i64: 64, 64>}, {pipeline_mode = #tpu.pipeline_mode<synchronous>, transform_indices = @transform_25, window_bounds = array<i64: 1, 64>}, {pipeline_mode = #tpu.pipeline_mode<synchronous>, transform_indices = @transform_26, window_bounds = array<i64: 64, 128>}, {pipeline_mode = #tpu.pipeline_mode<synchronous>, transform_indices = @transform_27, window_bounds = array<i64: 1, 128>}, {pipeline_mode = #tpu.pipeline_mode<synchronous>, transform_indices = @transform_28, window_bounds = array<i64: 128, 64>}, {pipeline_mode = #tpu.pipeline_mode<synchronous>, transform_indices = @transform_29, window_bounds = array<i64: 1, 64>}, {pipeline_mode = #tpu.pipeline_mode<synchronous>, transform_indices = @transform_30, window_bounds = array<i64: 1, 64>}, {pipeline_mode = #tpu.pipeline_mode<synchronous>, transform_indices = @transform_31, window_bounds = array<i64: 1, 64>}, {pipeline_mode = #tpu.pipeline_mode<synchronous>, transform_indices = @transform_32, window_bounds = array<i64: 1, 64>}, {pipeline_mode = #tpu.pipeline_mode<synchronous>, transform_indices = @transform_33, window_bounds = array<i64: 1, 64>}, {transform_indices = @transform_34, window_bounds = array<i64: 1, 8, 128>}]} {
    %c0 = arith.constant 0 : index
    %c0_0 = arith.constant 0 : index
    %c0_1 = arith.constant 0 : index
    %0 = vector.load %arg1[%c0, %c0_0, %c0_1] : memref<1x8x128xf32, #tpu.memory_space<vmem>>, vector<1x8x128xf32>
    %1 = vector.shape_cast %0 : vector<1x8x128xf32> to vector<8x128xf32>
    %c0_2 = arith.constant 0 : index
    %c0_3 = arith.constant 0 : index
    %c0_4 = arith.constant 0 : index
    %2 = vector.load %arg2[%c0_2, %c0_3, %c0_4] : memref<1x8x64xf32, #tpu.memory_space<vmem>>, vector<1x8x64xf32>
    %3 = vector.shape_cast %2 : vector<1x8x64xf32> to vector<8x64xf32>
    %c0_5 = arith.constant 0 : index
    %c0_6 = arith.constant 0 : index
    %c0_7 = arith.constant 0 : index
    %4 = vector.load %arg3[%c0_5, %c0_6, %c0_7] : memref<1x1x8xi32, #tpu.memory_space<vmem>>, vector<1x1x8xi32>
    %5 = vector.shape_cast %4 : vector<1x1x8xi32> to vector<1x8xi32>
    %c0_i32 = arith.constant 0 : i32
    %6 = vector.broadcast %c0_i32 : i32 to vector<1x8xi32>
    %7 = arith.cmpi sgt, %5, %6 : vector<1x8xi32>
    %cst = arith.constant -1.000000e+30 : f32
    %cst_8 = arith.constant 0.000000e+00 : f32
    %8 = vector.broadcast %cst : f32 to vector<1x8xf32>
    %9 = vector.broadcast %cst_8 : f32 to vector<1x8xf32>
    %10 = arith.select %7, %8, %9 : vector<1x8xi1>, vector<1x8xf32>
    %c0_9 = arith.constant 0 : index
    %c0_10 = arith.constant 0 : index
    %11 = vector.load %arg4[%c0_9, %c0_10] : memref<128x64xf32, #tpu.memory_space<vmem>>, vector<128x64xf32>
    %cst_11 = arith.constant dense<0.000000e+00> : vector<8x64xf32>
    %12 = tpu.matmul %1, %11, %cst_11 {dimension_numbers = #tpu.dot_dimension_numbers<[1], [0], [0], [1], [0, 0, 1, 1], [], []>} : vector<8x128xf32>, vector<128x64xf32>, vector<8x64xf32> -> vector<8x64xf32>
    %c0_12 = arith.constant 0 : index
    %c0_13 = arith.constant 0 : index
    %13 = vector.load %arg5[%c0_12, %c0_13] : memref<1x64xf32, #tpu.memory_space<vmem>>, vector<1x64xf32>
    %14 = vector.broadcast %13 : vector<1x64xf32> to vector<8x64xf32>
    %15 = arith.addf %12, %14 : vector<8x64xf32>
    %cst_14 = arith.constant 0.000000e+00 : f32
    %16 = vector.broadcast %cst_14 : f32 to vector<8x64xf32>
    %17 = arith.maximumf %15, %16 : vector<8x64xf32>
    %c0_15 = arith.constant 0 : index
    %c0_16 = arith.constant 0 : index
    %18 = vector.load %arg21[%c0_15, %c0_16] : memref<64x64xf32, #tpu.memory_space<vmem>>, vector<64x64xf32>
    %cst_17 = arith.constant dense<0.000000e+00> : vector<8x64xf32>
    %19 = tpu.matmul %17, %18, %cst_17 {dimension_numbers = #tpu.dot_dimension_numbers<[1], [0], [0], [1], [0, 0, 1, 1], [], []>} : vector<8x64xf32>, vector<64x64xf32>, vector<8x64xf32> -> vector<8x64xf32>
    %c0_18 = arith.constant 0 : index
    %c0_19 = arith.constant 0 : index
    %20 = vector.load %arg22[%c0_18, %c0_19] : memref<1x64xf32, #tpu.memory_space<vmem>>, vector<1x64xf32>
    %21 = vector.broadcast %20 : vector<1x64xf32> to vector<8x64xf32>
    %22 = arith.addf %19, %21 : vector<8x64xf32>
    %c0_20 = arith.constant 0 : index
    %c0_21 = arith.constant 0 : index
    %23 = vector.load %arg23[%c0_20, %c0_21] : memref<64x128xf32, #tpu.memory_space<vmem>>, vector<64x128xf32>
    %cst_22 = arith.constant dense<0.000000e+00> : vector<8x128xf32>
    %24 = tpu.matmul %3, %23, %cst_22 {dimension_numbers = #tpu.dot_dimension_numbers<[1], [0], [0], [1], [0, 0, 1, 1], [], []>} : vector<8x64xf32>, vector<64x128xf32>, vector<8x128xf32> -> vector<8x128xf32>
    %c0_23 = arith.constant 0 : index
    %c0_24 = arith.constant 0 : index
    %25 = vector.load %arg24[%c0_23, %c0_24] : memref<1x128xf32, #tpu.memory_space<vmem>>, vector<1x128xf32>
    %26 = vector.broadcast %25 : vector<1x128xf32> to vector<8x128xf32>
    %27 = arith.addf %24, %26 : vector<8x128xf32>
    %28 = vector.extract_strided_slice %27 {offsets = [0, 0], sizes = [8, 64], strides = [1, 1]} : vector<8x128xf32> to vector<8x64xf32>
    %29 = vector.extract_strided_slice %27 {offsets = [0, 64], sizes = [8, 64], strides = [1, 1]} : vector<8x128xf32> to vector<8x64xf32>
    %c0_25 = arith.constant 0 : index
    %c0_26 = arith.constant 0 : index
    %30 = vector.load %arg25[%c0_25, %c0_26] : memref<64x64xf32, #tpu.memory_space<vmem>>, vector<64x64xf32>
    %c0_27 = arith.constant 0 : index
    %c0_28 = arith.constant 0 : index
    %31 = vector.load %arg26[%c0_27, %c0_28] : memref<1x64xf32, #tpu.memory_space<vmem>>, vector<1x64xf32>
    %cst_29 = arith.constant 0.000000e+00 : f32
    %32 = vector.broadcast %cst_29 : f32 to vector<8x64xf32>
    %33 = vector.extract_strided_slice %22 {offsets = [0, 0], sizes = [8, 32], strides = [1, 1]} : vector<8x64xf32> to vector<8x32xf32>
    %34 = vector.extract_strided_slice %28 {offsets = [0, 0], sizes = [8, 32], strides = [1, 1]} : vector<8x64xf32> to vector<8x32xf32>
    %cst_30 = arith.constant dense<0.000000e+00> : vector<8x8xf32>
    %35 = tpu.matmul %33, %34, %cst_30 {dimension_numbers = #tpu.dot_dimension_numbers<[1], [1], [0], [0], [0, 0, 1, 0], [], []>} : vector<8x32xf32>, vector<8x32xf32>, vector<8x8xf32> -> vector<8x8xf32>
    %cst_31 = arith.constant 0.176776692 : f32
    %36 = vector.broadcast %cst_31 : f32 to vector<8x8xf32>
    %37 = arith.mulf %35, %36 : vector<8x8xf32>
    %38 = vector.broadcast %10 : vector<1x8xf32> to vector<8x8xf32>
    %39 = arith.addf %37, %38 : vector<8x8xf32>
    %cst_32 = arith.constant dense<0xFF800000> : vector<8xf32>
    %40 = vector.multi_reduction <maximumf>, %39, %cst_32 [1] : vector<8x8xf32> to vector<8xf32>
    %41 = vector.shape_cast %40 : vector<8xf32> to vector<8x1xf32>
    %42 = vector.broadcast %41 : vector<8x1xf32> to vector<8x8xf32>
    %43 = arith.subf %39, %42 : vector<8x8xf32>
    %44 = math.exp %43 : vector<8x8xf32>
    %cst_33 = arith.constant dense<0.000000e+00> : vector<8xf32>
    %45 = vector.multi_reduction <add>, %44, %cst_33 [1] : vector<8x8xf32> to vector<8xf32>
    %46 = vector.shape_cast %45 : vector<8xf32> to vector<8x1xf32>
    %47 = vector.broadcast %46 : vector<8x1xf32> to vector<8x8xf32>
    %48 = arith.divf %44, %47 : vector<8x8xf32>
    %49 = vector.extract_strided_slice %29 {offsets = [0, 0], sizes = [8, 32], strides = [1, 1]} : vector<8x64xf32> to vector<8x32xf32>
    %cst_34 = arith.constant dense<0.000000e+00> : vector<8x32xf32>
    %50 = tpu.matmul %48, %49, %cst_34 {dimension_numbers = #tpu.dot_dimension_numbers<[1], [0], [0], [1], [0, 0, 1, 1], [], []>} : vector<8x8xf32>, vector<8x32xf32>, vector<8x32xf32> -> vector<8x32xf32>
    %51 = vector.extract_strided_slice %30 {offsets = [0, 0], sizes = [32, 64], strides = [1, 1]} : vector<64x64xf32> to vector<32x64xf32>
    %cst_35 = arith.constant dense<0.000000e+00> : vector<8x64xf32>
    %52 = tpu.matmul %50, %51, %cst_35 {dimension_numbers = #tpu.dot_dimension_numbers<[1], [0], [0], [1], [0, 0, 1, 1], [], []>} : vector<8x32xf32>, vector<32x64xf32>, vector<8x64xf32> -> vector<8x64xf32>
    %53 = arith.addf %32, %52 : vector<8x64xf32>
    %54 = vector.extract_strided_slice %22 {offsets = [0, 32], sizes = [8, 32], strides = [1, 1]} : vector<8x64xf32> to vector<8x32xf32>
    %55 = vector.extract_strided_slice %28 {offsets = [0, 32], sizes = [8, 32], strides = [1, 1]} : vector<8x64xf32> to vector<8x32xf32>
    %cst_36 = arith.constant dense<0.000000e+00> : vector<8x8xf32>
    %56 = tpu.matmul %54, %55, %cst_36 {dimension_numbers = #tpu.dot_dimension_numbers<[1], [1], [0], [0], [0, 0, 1, 0], [], []>} : vector<8x32xf32>, vector<8x32xf32>, vector<8x8xf32> -> vector<8x8xf32>
    %cst_37 = arith.constant 0.176776692 : f32
    %57 = vector.broadcast %cst_37 : f32 to vector<8x8xf32>
    %58 = arith.mulf %56, %57 : vector<8x8xf32>
    %59 = vector.broadcast %10 : vector<1x8xf32> to vector<8x8xf32>
    %60 = arith.addf %58, %59 : vector<8x8xf32>
    %cst_38 = arith.constant dense<0xFF800000> : vector<8xf32>
    %61 = vector.multi_reduction <maximumf>, %60, %cst_38 [1] : vector<8x8xf32> to vector<8xf32>
    %62 = vector.shape_cast %61 : vector<8xf32> to vector<8x1xf32>
    %63 = vector.broadcast %62 : vector<8x1xf32> to vector<8x8xf32>
    %64 = arith.subf %60, %63 : vector<8x8xf32>
    %65 = math.exp %64 : vector<8x8xf32>
    %cst_39 = arith.constant dense<0.000000e+00> : vector<8xf32>
    %66 = vector.multi_reduction <add>, %65, %cst_39 [1] : vector<8x8xf32> to vector<8xf32>
    %67 = vector.shape_cast %66 : vector<8xf32> to vector<8x1xf32>
    %68 = vector.broadcast %67 : vector<8x1xf32> to vector<8x8xf32>
    %69 = arith.divf %65, %68 : vector<8x8xf32>
    %70 = vector.extract_strided_slice %29 {offsets = [0, 32], sizes = [8, 32], strides = [1, 1]} : vector<8x64xf32> to vector<8x32xf32>
    %cst_40 = arith.constant dense<0.000000e+00> : vector<8x32xf32>
    %71 = tpu.matmul %69, %70, %cst_40 {dimension_numbers = #tpu.dot_dimension_numbers<[1], [0], [0], [1], [0, 0, 1, 1], [], []>} : vector<8x8xf32>, vector<8x32xf32>, vector<8x32xf32> -> vector<8x32xf32>
    %72 = vector.extract_strided_slice %30 {offsets = [32, 0], sizes = [32, 64], strides = [1, 1]} : vector<64x64xf32> to vector<32x64xf32>
    %cst_41 = arith.constant dense<0.000000e+00> : vector<8x64xf32>
    %73 = tpu.matmul %71, %72, %cst_41 {dimension_numbers = #tpu.dot_dimension_numbers<[1], [0], [0], [1], [0, 0, 1, 1], [], []>} : vector<8x32xf32>, vector<32x64xf32>, vector<8x64xf32> -> vector<8x64xf32>
    %74 = arith.addf %53, %73 : vector<8x64xf32>
    %75 = vector.broadcast %31 : vector<1x64xf32> to vector<8x64xf32>
    %76 = arith.addf %74, %75 : vector<8x64xf32>
    %77 = arith.addf %17, %76 : vector<8x64xf32>
    %c0_42 = arith.constant 0 : index
    %c0_43 = arith.constant 0 : index
    %78 = vector.load %arg31[%c0_42, %c0_43] : memref<1x64xf32, #tpu.memory_space<vmem>>, vector<1x64xf32>
    %c0_44 = arith.constant 0 : index
    %c0_45 = arith.constant 0 : index
    %79 = vector.load %arg32[%c0_44, %c0_45] : memref<1x64xf32, #tpu.memory_space<vmem>>, vector<1x64xf32>
    %cst_46 = arith.constant dense<0.000000e+00> : vector<8xf32>
    %80 = vector.multi_reduction <add>, %77, %cst_46 [1] : vector<8x64xf32> to vector<8xf32>
    %81 = vector.shape_cast %80 : vector<8xf32> to vector<8x1xf32>
    %cst_47 = arith.constant 6.400000e+01 : f32
    %82 = vector.broadcast %cst_47 : f32 to vector<8x1xf32>
    %83 = arith.divf %81, %82 : vector<8x1xf32>
    %84 = vector.broadcast %83 : vector<8x1xf32> to vector<8x64xf32>
    %85 = arith.subf %77, %84 : vector<8x64xf32>
    %86 = arith.mulf %85, %85 : vector<8x64xf32>
    %cst_48 = arith.constant dense<0.000000e+00> : vector<8xf32>
    %87 = vector.multi_reduction <add>, %86, %cst_48 [1] : vector<8x64xf32> to vector<8xf32>
    %88 = vector.shape_cast %87 : vector<8xf32> to vector<8x1xf32>
    %cst_49 = arith.constant 6.400000e+01 : f32
    %89 = vector.broadcast %cst_49 : f32 to vector<8x1xf32>
    %90 = arith.divf %88, %89 : vector<8x1xf32>
    %91 = vector.broadcast %83 : vector<8x1xf32> to vector<8x64xf32>
    %92 = arith.subf %77, %91 : vector<8x64xf32>
    %cst_50 = arith.constant 9.99999974E-6 : f32
    %93 = vector.broadcast %cst_50 : f32 to vector<8x1xf32>
    %94 = arith.addf %90, %93 : vector<8x1xf32>
    %95 = math.rsqrt %94 : vector<8x1xf32>
    %96 = vector.broadcast %95 : vector<8x1xf32> to vector<8x64xf32>
    %97 = arith.mulf %92, %96 : vector<8x64xf32>
    %98 = vector.broadcast %78 : vector<1x64xf32> to vector<8x64xf32>
    %99 = arith.mulf %97, %98 : vector<8x64xf32>
    %100 = vector.broadcast %79 : vector<1x64xf32> to vector<8x64xf32>
    %101 = arith.addf %99, %100 : vector<8x64xf32>
    %c0_51 = arith.constant 0 : index
    %c0_52 = arith.constant 0 : index
    %102 = vector.load %arg27[%c0_51, %c0_52] : memref<64x128xf32, #tpu.memory_space<vmem>>, vector<64x128xf32>
    %cst_53 = arith.constant dense<0.000000e+00> : vector<8x128xf32>
    %103 = tpu.matmul %101, %102, %cst_53 {dimension_numbers = #tpu.dot_dimension_numbers<[1], [0], [0], [1], [0, 0, 1, 1], [], []>} : vector<8x64xf32>, vector<64x128xf32>, vector<8x128xf32> -> vector<8x128xf32>
    %c0_54 = arith.constant 0 : index
    %c0_55 = arith.constant 0 : index
    %104 = vector.load %arg28[%c0_54, %c0_55] : memref<1x128xf32, #tpu.memory_space<vmem>>, vector<1x128xf32>
    %105 = vector.broadcast %104 : vector<1x128xf32> to vector<8x128xf32>
    %106 = arith.addf %103, %105 : vector<8x128xf32>
    %cst_56 = arith.constant 0.000000e+00 : f32
    %107 = vector.broadcast %cst_56 : f32 to vector<8x128xf32>
    %108 = arith.maximumf %106, %107 : vector<8x128xf32>
    %c0_57 = arith.constant 0 : index
    %c0_58 = arith.constant 0 : index
    %109 = vector.load %arg29[%c0_57, %c0_58] : memref<128x64xf32, #tpu.memory_space<vmem>>, vector<128x64xf32>
    %cst_59 = arith.constant dense<0.000000e+00> : vector<8x64xf32>
    %110 = tpu.matmul %108, %109, %cst_59 {dimension_numbers = #tpu.dot_dimension_numbers<[1], [0], [0], [1], [0, 0, 1, 1], [], []>} : vector<8x128xf32>, vector<128x64xf32>, vector<8x64xf32> -> vector<8x64xf32>
    %c0_60 = arith.constant 0 : index
    %c0_61 = arith.constant 0 : index
    %111 = vector.load %arg30[%c0_60, %c0_61] : memref<1x64xf32, #tpu.memory_space<vmem>>, vector<1x64xf32>
    %112 = vector.broadcast %111 : vector<1x64xf32> to vector<8x64xf32>
    %113 = arith.addf %110, %112 : vector<8x64xf32>
    %114 = arith.addf %101, %113 : vector<8x64xf32>
    %c0_62 = arith.constant 0 : index
    %c0_63 = arith.constant 0 : index
    %115 = vector.load %arg33[%c0_62, %c0_63] : memref<1x64xf32, #tpu.memory_space<vmem>>, vector<1x64xf32>
    %c0_64 = arith.constant 0 : index
    %c0_65 = arith.constant 0 : index
    %116 = vector.load %arg34[%c0_64, %c0_65] : memref<1x64xf32, #tpu.memory_space<vmem>>, vector<1x64xf32>
    %cst_66 = arith.constant dense<0.000000e+00> : vector<8xf32>
    %117 = vector.multi_reduction <add>, %114, %cst_66 [1] : vector<8x64xf32> to vector<8xf32>
    %118 = vector.shape_cast %117 : vector<8xf32> to vector<8x1xf32>
    %cst_67 = arith.constant 6.400000e+01 : f32
    %119 = vector.broadcast %cst_67 : f32 to vector<8x1xf32>
    %120 = arith.divf %118, %119 : vector<8x1xf32>
    %121 = vector.broadcast %120 : vector<8x1xf32> to vector<8x64xf32>
    %122 = arith.subf %114, %121 : vector<8x64xf32>
    %123 = arith.mulf %122, %122 : vector<8x64xf32>
    %cst_68 = arith.constant dense<0.000000e+00> : vector<8xf32>
    %124 = vector.multi_reduction <add>, %123, %cst_68 [1] : vector<8x64xf32> to vector<8xf32>
    %125 = vector.shape_cast %124 : vector<8xf32> to vector<8x1xf32>
    %cst_69 = arith.constant 6.400000e+01 : f32
    %126 = vector.broadcast %cst_69 : f32 to vector<8x1xf32>
    %127 = arith.divf %125, %126 : vector<8x1xf32>
    %128 = vector.broadcast %120 : vector<8x1xf32> to vector<8x64xf32>
    %129 = arith.subf %114, %128 : vector<8x64xf32>
    %cst_70 = arith.constant 9.99999974E-6 : f32
    %130 = vector.broadcast %cst_70 : f32 to vector<8x1xf32>
    %131 = arith.addf %127, %130 : vector<8x1xf32>
    %132 = math.rsqrt %131 : vector<8x1xf32>
    %133 = vector.broadcast %132 : vector<8x1xf32> to vector<8x64xf32>
    %134 = arith.mulf %129, %133 : vector<8x64xf32>
    %135 = vector.broadcast %115 : vector<1x64xf32> to vector<8x64xf32>
    %136 = arith.mulf %134, %135 : vector<8x64xf32>
    %137 = vector.broadcast %116 : vector<1x64xf32> to vector<8x64xf32>
    %138 = arith.addf %136, %137 : vector<8x64xf32>
    %c0_71 = arith.constant 0 : index
    %c0_72 = arith.constant 0 : index
    %139 = vector.load %arg6[%c0_71, %c0_72] : memref<64x128xf32, #tpu.memory_space<vmem>>, vector<64x128xf32>
    %cst_73 = arith.constant dense<0.000000e+00> : vector<8x128xf32>
    %140 = tpu.matmul %138, %139, %cst_73 {dimension_numbers = #tpu.dot_dimension_numbers<[1], [0], [0], [1], [0, 0, 1, 1], [], []>} : vector<8x64xf32>, vector<64x128xf32>, vector<8x128xf32> -> vector<8x128xf32>
    %c0_74 = arith.constant 0 : index
    %c0_75 = arith.constant 0 : index
    %141 = vector.load %arg7[%c0_74, %c0_75] : memref<1x128xf32, #tpu.memory_space<vmem>>, vector<1x128xf32>
    %142 = vector.broadcast %141 : vector<1x128xf32> to vector<8x128xf32>
    %143 = arith.addf %140, %142 : vector<8x128xf32>
    %c0_76 = arith.constant 0 : index
    %c0_77 = arith.constant 0 : index
    %144 = vector.load %arg8[%c0_76, %c0_77] : memref<1x128xf32, #tpu.memory_space<vmem>>, vector<1x128xf32>
    %145 = vector.broadcast %144 : vector<1x128xf32> to vector<8x128xf32>
    %146 = arith.mulf %143, %145 : vector<8x128xf32>
    %147 = arith.addf %1, %146 : vector<8x128xf32>
    %c0_78 = arith.constant 0 : index
    %c0_79 = arith.constant 0 : index
    %148 = vector.load %arg9[%c0_78, %c0_79] : memref<1x128xf32, #tpu.memory_space<vmem>>, vector<1x128xf32>
    %c0_80 = arith.constant 0 : index
    %c0_81 = arith.constant 0 : index
    %149 = vector.load %arg10[%c0_80, %c0_81] : memref<1x128xf32, #tpu.memory_space<vmem>>, vector<1x128xf32>
    %cst_82 = arith.constant dense<0.000000e+00> : vector<8xf32>
    %150 = vector.multi_reduction <add>, %147, %cst_82 [1] : vector<8x128xf32> to vector<8xf32>
    %151 = vector.shape_cast %150 : vector<8xf32> to vector<8x1xf32>
    %cst_83 = arith.constant 1.280000e+02 : f32
    %152 = vector.broadcast %cst_83 : f32 to vector<8x1xf32>
    %153 = arith.divf %151, %152 : vector<8x1xf32>
    %154 = vector.broadcast %153 : vector<8x1xf32> to vector<8x128xf32>
    %155 = arith.subf %147, %154 : vector<8x128xf32>
    %156 = arith.mulf %155, %155 : vector<8x128xf32>
    %cst_84 = arith.constant dense<0.000000e+00> : vector<8xf32>
    %157 = vector.multi_reduction <add>, %156, %cst_84 [1] : vector<8x128xf32> to vector<8xf32>
    %158 = vector.shape_cast %157 : vector<8xf32> to vector<8x1xf32>
    %cst_85 = arith.constant 1.280000e+02 : f32
    %159 = vector.broadcast %cst_85 : f32 to vector<8x1xf32>
    %160 = arith.divf %158, %159 : vector<8x1xf32>
    %161 = vector.broadcast %153 : vector<8x1xf32> to vector<8x128xf32>
    %162 = arith.subf %147, %161 : vector<8x128xf32>
    %cst_86 = arith.constant 9.99999974E-6 : f32
    %163 = vector.broadcast %cst_86 : f32 to vector<8x1xf32>
    %164 = arith.addf %160, %163 : vector<8x1xf32>
    %165 = math.rsqrt %164 : vector<8x1xf32>
    %166 = vector.broadcast %165 : vector<8x1xf32> to vector<8x128xf32>
    %167 = arith.mulf %162, %166 : vector<8x128xf32>
    %168 = vector.broadcast %148 : vector<1x128xf32> to vector<8x128xf32>
    %169 = arith.mulf %167, %168 : vector<8x128xf32>
    %170 = vector.broadcast %149 : vector<1x128xf32> to vector<8x128xf32>
    %171 = arith.addf %169, %170 : vector<8x128xf32>
    %c0_87 = arith.constant 0 : index
    %c0_88 = arith.constant 0 : index
    %172 = vector.load %arg11[%c0_87, %c0_88] : memref<128x384xf32, #tpu.memory_space<vmem>>, vector<128x384xf32>
    %cst_89 = arith.constant dense<0.000000e+00> : vector<8x384xf32>
    %173 = tpu.matmul %171, %172, %cst_89 {dimension_numbers = #tpu.dot_dimension_numbers<[1], [0], [0], [1], [0, 0, 1, 1], [], []>} : vector<8x128xf32>, vector<128x384xf32>, vector<8x384xf32> -> vector<8x384xf32>
    %c0_90 = arith.constant 0 : index
    %c0_91 = arith.constant 0 : index
    %174 = vector.load %arg12[%c0_90, %c0_91] : memref<1x384xf32, #tpu.memory_space<vmem>>, vector<1x384xf32>
    %175 = vector.broadcast %174 : vector<1x384xf32> to vector<8x384xf32>
    %176 = arith.addf %173, %175 : vector<8x384xf32>
    %177 = vector.extract_strided_slice %176 {offsets = [0, 0], sizes = [8, 128], strides = [1, 1]} : vector<8x384xf32> to vector<8x128xf32>
    %178 = vector.extract_strided_slice %176 {offsets = [0, 128], sizes = [8, 128], strides = [1, 1]} : vector<8x384xf32> to vector<8x128xf32>
    %179 = vector.extract_strided_slice %176 {offsets = [0, 256], sizes = [8, 128], strides = [1, 1]} : vector<8x384xf32> to vector<8x128xf32>
    %c0_92 = arith.constant 0 : index
    %c0_93 = arith.constant 0 : index
    %180 = vector.load %arg13[%c0_92, %c0_93] : memref<128x128xf32, #tpu.memory_space<vmem>>, vector<128x128xf32>
    %c0_94 = arith.constant 0 : index
    %c0_95 = arith.constant 0 : index
    %181 = vector.load %arg14[%c0_94, %c0_95] : memref<1x128xf32, #tpu.memory_space<vmem>>, vector<1x128xf32>
    %cst_96 = arith.constant 0.000000e+00 : f32
    %182 = vector.broadcast %cst_96 : f32 to vector<8x128xf32>
    %183 = vector.extract_strided_slice %177 {offsets = [0, 0], sizes = [8, 32], strides = [1, 1]} : vector<8x128xf32> to vector<8x32xf32>
    %184 = vector.extract_strided_slice %178 {offsets = [0, 0], sizes = [8, 32], strides = [1, 1]} : vector<8x128xf32> to vector<8x32xf32>
    %cst_97 = arith.constant dense<0.000000e+00> : vector<8x8xf32>
    %185 = tpu.matmul %183, %184, %cst_97 {dimension_numbers = #tpu.dot_dimension_numbers<[1], [1], [0], [0], [0, 0, 1, 0], [], []>} : vector<8x32xf32>, vector<8x32xf32>, vector<8x8xf32> -> vector<8x8xf32>
    %cst_98 = arith.constant 0.176776692 : f32
    %186 = vector.broadcast %cst_98 : f32 to vector<8x8xf32>
    %187 = arith.mulf %185, %186 : vector<8x8xf32>
    %cst_99 = arith.constant dense<0xFF800000> : vector<8xf32>
    %188 = vector.multi_reduction <maximumf>, %187, %cst_99 [1] : vector<8x8xf32> to vector<8xf32>
    %189 = vector.shape_cast %188 : vector<8xf32> to vector<8x1xf32>
    %190 = vector.broadcast %189 : vector<8x1xf32> to vector<8x8xf32>
    %191 = arith.subf %187, %190 : vector<8x8xf32>
    %192 = math.exp %191 : vector<8x8xf32>
    %cst_100 = arith.constant dense<0.000000e+00> : vector<8xf32>
    %193 = vector.multi_reduction <add>, %192, %cst_100 [1] : vector<8x8xf32> to vector<8xf32>
    %194 = vector.shape_cast %193 : vector<8xf32> to vector<8x1xf32>
    %195 = vector.broadcast %194 : vector<8x1xf32> to vector<8x8xf32>
    %196 = arith.divf %192, %195 : vector<8x8xf32>
    %197 = vector.extract_strided_slice %179 {offsets = [0, 0], sizes = [8, 32], strides = [1, 1]} : vector<8x128xf32> to vector<8x32xf32>
    %cst_101 = arith.constant dense<0.000000e+00> : vector<8x32xf32>
    %198 = tpu.matmul %196, %197, %cst_101 {dimension_numbers = #tpu.dot_dimension_numbers<[1], [0], [0], [1], [0, 0, 1, 1], [], []>} : vector<8x8xf32>, vector<8x32xf32>, vector<8x32xf32> -> vector<8x32xf32>
    %199 = vector.extract_strided_slice %180 {offsets = [0, 0], sizes = [32, 128], strides = [1, 1]} : vector<128x128xf32> to vector<32x128xf32>
    %cst_102 = arith.constant dense<0.000000e+00> : vector<8x128xf32>
    %200 = tpu.matmul %198, %199, %cst_102 {dimension_numbers = #tpu.dot_dimension_numbers<[1], [0], [0], [1], [0, 0, 1, 1], [], []>} : vector<8x32xf32>, vector<32x128xf32>, vector<8x128xf32> -> vector<8x128xf32>
    %201 = arith.addf %182, %200 : vector<8x128xf32>
    %202 = vector.extract_strided_slice %177 {offsets = [0, 32], sizes = [8, 32], strides = [1, 1]} : vector<8x128xf32> to vector<8x32xf32>
    %203 = vector.extract_strided_slice %178 {offsets = [0, 32], sizes = [8, 32], strides = [1, 1]} : vector<8x128xf32> to vector<8x32xf32>
    %cst_103 = arith.constant dense<0.000000e+00> : vector<8x8xf32>
    %204 = tpu.matmul %202, %203, %cst_103 {dimension_numbers = #tpu.dot_dimension_numbers<[1], [1], [0], [0], [0, 0, 1, 0], [], []>} : vector<8x32xf32>, vector<8x32xf32>, vector<8x8xf32> -> vector<8x8xf32>
    %cst_104 = arith.constant 0.176776692 : f32
    %205 = vector.broadcast %cst_104 : f32 to vector<8x8xf32>
    %206 = arith.mulf %204, %205 : vector<8x8xf32>
    %cst_105 = arith.constant dense<0xFF800000> : vector<8xf32>
    %207 = vector.multi_reduction <maximumf>, %206, %cst_105 [1] : vector<8x8xf32> to vector<8xf32>
    %208 = vector.shape_cast %207 : vector<8xf32> to vector<8x1xf32>
    %209 = vector.broadcast %208 : vector<8x1xf32> to vector<8x8xf32>
    %210 = arith.subf %206, %209 : vector<8x8xf32>
    %211 = math.exp %210 : vector<8x8xf32>
    %cst_106 = arith.constant dense<0.000000e+00> : vector<8xf32>
    %212 = vector.multi_reduction <add>, %211, %cst_106 [1] : vector<8x8xf32> to vector<8xf32>
    %213 = vector.shape_cast %212 : vector<8xf32> to vector<8x1xf32>
    %214 = vector.broadcast %213 : vector<8x1xf32> to vector<8x8xf32>
    %215 = arith.divf %211, %214 : vector<8x8xf32>
    %216 = vector.extract_strided_slice %179 {offsets = [0, 32], sizes = [8, 32], strides = [1, 1]} : vector<8x128xf32> to vector<8x32xf32>
    %cst_107 = arith.constant dense<0.000000e+00> : vector<8x32xf32>
    %217 = tpu.matmul %215, %216, %cst_107 {dimension_numbers = #tpu.dot_dimension_numbers<[1], [0], [0], [1], [0, 0, 1, 1], [], []>} : vector<8x8xf32>, vector<8x32xf32>, vector<8x32xf32> -> vector<8x32xf32>
    %218 = vector.extract_strided_slice %180 {offsets = [32, 0], sizes = [32, 128], strides = [1, 1]} : vector<128x128xf32> to vector<32x128xf32>
    %cst_108 = arith.constant dense<0.000000e+00> : vector<8x128xf32>
    %219 = tpu.matmul %217, %218, %cst_108 {dimension_numbers = #tpu.dot_dimension_numbers<[1], [0], [0], [1], [0, 0, 1, 1], [], []>} : vector<8x32xf32>, vector<32x128xf32>, vector<8x128xf32> -> vector<8x128xf32>
    %220 = arith.addf %201, %219 : vector<8x128xf32>
    %221 = vector.extract_strided_slice %177 {offsets = [0, 64], sizes = [8, 32], strides = [1, 1]} : vector<8x128xf32> to vector<8x32xf32>
    %222 = vector.extract_strided_slice %178 {offsets = [0, 64], sizes = [8, 32], strides = [1, 1]} : vector<8x128xf32> to vector<8x32xf32>
    %cst_109 = arith.constant dense<0.000000e+00> : vector<8x8xf32>
    %223 = tpu.matmul %221, %222, %cst_109 {dimension_numbers = #tpu.dot_dimension_numbers<[1], [1], [0], [0], [0, 0, 1, 0], [], []>} : vector<8x32xf32>, vector<8x32xf32>, vector<8x8xf32> -> vector<8x8xf32>
    %cst_110 = arith.constant 0.176776692 : f32
    %224 = vector.broadcast %cst_110 : f32 to vector<8x8xf32>
    %225 = arith.mulf %223, %224 : vector<8x8xf32>
    %cst_111 = arith.constant dense<0xFF800000> : vector<8xf32>
    %226 = vector.multi_reduction <maximumf>, %225, %cst_111 [1] : vector<8x8xf32> to vector<8xf32>
    %227 = vector.shape_cast %226 : vector<8xf32> to vector<8x1xf32>
    %228 = vector.broadcast %227 : vector<8x1xf32> to vector<8x8xf32>
    %229 = arith.subf %225, %228 : vector<8x8xf32>
    %230 = math.exp %229 : vector<8x8xf32>
    %cst_112 = arith.constant dense<0.000000e+00> : vector<8xf32>
    %231 = vector.multi_reduction <add>, %230, %cst_112 [1] : vector<8x8xf32> to vector<8xf32>
    %232 = vector.shape_cast %231 : vector<8xf32> to vector<8x1xf32>
    %233 = vector.broadcast %232 : vector<8x1xf32> to vector<8x8xf32>
    %234 = arith.divf %230, %233 : vector<8x8xf32>
    %235 = vector.extract_strided_slice %179 {offsets = [0, 64], sizes = [8, 32], strides = [1, 1]} : vector<8x128xf32> to vector<8x32xf32>
    %cst_113 = arith.constant dense<0.000000e+00> : vector<8x32xf32>
    %236 = tpu.matmul %234, %235, %cst_113 {dimension_numbers = #tpu.dot_dimension_numbers<[1], [0], [0], [1], [0, 0, 1, 1], [], []>} : vector<8x8xf32>, vector<8x32xf32>, vector<8x32xf32> -> vector<8x32xf32>
    %237 = vector.extract_strided_slice %180 {offsets = [64, 0], sizes = [32, 128], strides = [1, 1]} : vector<128x128xf32> to vector<32x128xf32>
    %cst_114 = arith.constant dense<0.000000e+00> : vector<8x128xf32>
    %238 = tpu.matmul %236, %237, %cst_114 {dimension_numbers = #tpu.dot_dimension_numbers<[1], [0], [0], [1], [0, 0, 1, 1], [], []>} : vector<8x32xf32>, vector<32x128xf32>, vector<8x128xf32> -> vector<8x128xf32>
    %239 = arith.addf %220, %238 : vector<8x128xf32>
    %240 = vector.extract_strided_slice %177 {offsets = [0, 96], sizes = [8, 32], strides = [1, 1]} : vector<8x128xf32> to vector<8x32xf32>
    %241 = vector.extract_strided_slice %178 {offsets = [0, 96], sizes = [8, 32], strides = [1, 1]} : vector<8x128xf32> to vector<8x32xf32>
    %cst_115 = arith.constant dense<0.000000e+00> : vector<8x8xf32>
    %242 = tpu.matmul %240, %241, %cst_115 {dimension_numbers = #tpu.dot_dimension_numbers<[1], [1], [0], [0], [0, 0, 1, 0], [], []>} : vector<8x32xf32>, vector<8x32xf32>, vector<8x8xf32> -> vector<8x8xf32>
    %cst_116 = arith.constant 0.176776692 : f32
    %243 = vector.broadcast %cst_116 : f32 to vector<8x8xf32>
    %244 = arith.mulf %242, %243 : vector<8x8xf32>
    %cst_117 = arith.constant dense<0xFF800000> : vector<8xf32>
    %245 = vector.multi_reduction <maximumf>, %244, %cst_117 [1] : vector<8x8xf32> to vector<8xf32>
    %246 = vector.shape_cast %245 : vector<8xf32> to vector<8x1xf32>
    %247 = vector.broadcast %246 : vector<8x1xf32> to vector<8x8xf32>
    %248 = arith.subf %244, %247 : vector<8x8xf32>
    %249 = math.exp %248 : vector<8x8xf32>
    %cst_118 = arith.constant dense<0.000000e+00> : vector<8xf32>
    %250 = vector.multi_reduction <add>, %249, %cst_118 [1] : vector<8x8xf32> to vector<8xf32>
    %251 = vector.shape_cast %250 : vector<8xf32> to vector<8x1xf32>
    %252 = vector.broadcast %251 : vector<8x1xf32> to vector<8x8xf32>
    %253 = arith.divf %249, %252 : vector<8x8xf32>
    %254 = vector.extract_strided_slice %179 {offsets = [0, 96], sizes = [8, 32], strides = [1, 1]} : vector<8x128xf32> to vector<8x32xf32>
    %cst_119 = arith.constant dense<0.000000e+00> : vector<8x32xf32>
    %255 = tpu.matmul %253, %254, %cst_119 {dimension_numbers = #tpu.dot_dimension_numbers<[1], [0], [0], [1], [0, 0, 1, 1], [], []>} : vector<8x8xf32>, vector<8x32xf32>, vector<8x32xf32> -> vector<8x32xf32>
    %256 = vector.extract_strided_slice %180 {offsets = [96, 0], sizes = [32, 128], strides = [1, 1]} : vector<128x128xf32> to vector<32x128xf32>
    %cst_120 = arith.constant dense<0.000000e+00> : vector<8x128xf32>
    %257 = tpu.matmul %255, %256, %cst_120 {dimension_numbers = #tpu.dot_dimension_numbers<[1], [0], [0], [1], [0, 0, 1, 1], [], []>} : vector<8x32xf32>, vector<32x128xf32>, vector<8x128xf32> -> vector<8x128xf32>
    %258 = arith.addf %239, %257 : vector<8x128xf32>
    %259 = vector.broadcast %181 : vector<1x128xf32> to vector<8x128xf32>
    %260 = arith.addf %258, %259 : vector<8x128xf32>
    %261 = arith.addf %147, %260 : vector<8x128xf32>
    %c0_121 = arith.constant 0 : index
    %c0_122 = arith.constant 0 : index
    %262 = vector.load %arg15[%c0_121, %c0_122] : memref<1x128xf32, #tpu.memory_space<vmem>>, vector<1x128xf32>
    %c0_123 = arith.constant 0 : index
    %c0_124 = arith.constant 0 : index
    %263 = vector.load %arg16[%c0_123, %c0_124] : memref<1x128xf32, #tpu.memory_space<vmem>>, vector<1x128xf32>
    %cst_125 = arith.constant dense<0.000000e+00> : vector<8xf32>
    %264 = vector.multi_reduction <add>, %261, %cst_125 [1] : vector<8x128xf32> to vector<8xf32>
    %265 = vector.shape_cast %264 : vector<8xf32> to vector<8x1xf32>
    %cst_126 = arith.constant 1.280000e+02 : f32
    %266 = vector.broadcast %cst_126 : f32 to vector<8x1xf32>
    %267 = arith.divf %265, %266 : vector<8x1xf32>
    %268 = vector.broadcast %267 : vector<8x1xf32> to vector<8x128xf32>
    %269 = arith.subf %261, %268 : vector<8x128xf32>
    %270 = arith.mulf %269, %269 : vector<8x128xf32>
    %cst_127 = arith.constant dense<0.000000e+00> : vector<8xf32>
    %271 = vector.multi_reduction <add>, %270, %cst_127 [1] : vector<8x128xf32> to vector<8xf32>
    %272 = vector.shape_cast %271 : vector<8xf32> to vector<8x1xf32>
    %cst_128 = arith.constant 1.280000e+02 : f32
    %273 = vector.broadcast %cst_128 : f32 to vector<8x1xf32>
    %274 = arith.divf %272, %273 : vector<8x1xf32>
    %275 = vector.broadcast %267 : vector<8x1xf32> to vector<8x128xf32>
    %276 = arith.subf %261, %275 : vector<8x128xf32>
    %cst_129 = arith.constant 9.99999974E-6 : f32
    %277 = vector.broadcast %cst_129 : f32 to vector<8x1xf32>
    %278 = arith.addf %274, %277 : vector<8x1xf32>
    %279 = math.rsqrt %278 : vector<8x1xf32>
    %280 = vector.broadcast %279 : vector<8x1xf32> to vector<8x128xf32>
    %281 = arith.mulf %276, %280 : vector<8x128xf32>
    %282 = vector.broadcast %262 : vector<1x128xf32> to vector<8x128xf32>
    %283 = arith.mulf %281, %282 : vector<8x128xf32>
    %284 = vector.broadcast %263 : vector<1x128xf32> to vector<8x128xf32>
    %285 = arith.addf %283, %284 : vector<8x128xf32>
    %c0_130 = arith.constant 0 : index
    %c0_131 = arith.constant 0 : index
    %286 = vector.load %arg17[%c0_130, %c0_131] : memref<128x512xf32, #tpu.memory_space<vmem>>, vector<128x512xf32>
    %cst_132 = arith.constant dense<0.000000e+00> : vector<8x512xf32>
    %287 = tpu.matmul %285, %286, %cst_132 {dimension_numbers = #tpu.dot_dimension_numbers<[1], [0], [0], [1], [0, 0, 1, 1], [], []>} : vector<8x128xf32>, vector<128x512xf32>, vector<8x512xf32> -> vector<8x512xf32>
    %c0_133 = arith.constant 0 : index
    %c0_134 = arith.constant 0 : index
    %288 = vector.load %arg18[%c0_133, %c0_134] : memref<1x512xf32, #tpu.memory_space<vmem>>, vector<1x512xf32>
    %289 = vector.broadcast %288 : vector<1x512xf32> to vector<8x512xf32>
    %290 = arith.addf %287, %289 : vector<8x512xf32>
    %cst_135 = arith.constant -1.702000e+00 : f32
    %291 = vector.broadcast %cst_135 : f32 to vector<8x512xf32>
    %292 = arith.mulf %291, %290 : vector<8x512xf32>
    %293 = math.exp %292 : vector<8x512xf32>
    %cst_136 = arith.constant 1.000000e+00 : f32
    %294 = vector.broadcast %cst_136 : f32 to vector<8x512xf32>
    %295 = arith.addf %294, %293 : vector<8x512xf32>
    %cst_137 = arith.constant 1.000000e+00 : f32
    %296 = vector.broadcast %cst_137 : f32 to vector<8x512xf32>
    %297 = arith.divf %296, %295 : vector<8x512xf32>
    %298 = arith.mulf %290, %297 : vector<8x512xf32>
    %c0_138 = arith.constant 0 : index
    %c0_139 = arith.constant 0 : index
    %299 = vector.load %arg19[%c0_138, %c0_139] : memref<512x128xf32, #tpu.memory_space<vmem>>, vector<512x128xf32>
    %cst_140 = arith.constant dense<0.000000e+00> : vector<8x128xf32>
    %300 = tpu.matmul %298, %299, %cst_140 {dimension_numbers = #tpu.dot_dimension_numbers<[1], [0], [0], [1], [0, 0, 1, 1], [], []>} : vector<8x512xf32>, vector<512x128xf32>, vector<8x128xf32> -> vector<8x128xf32>
    %301 = arith.addf %261, %300 : vector<8x128xf32>
    %c0_141 = arith.constant 0 : index
    %c0_142 = arith.constant 0 : index
    %302 = vector.load %arg20[%c0_141, %c0_142] : memref<1x128xf32, #tpu.memory_space<vmem>>, vector<1x128xf32>
    %303 = vector.broadcast %302 : vector<1x128xf32> to vector<8x128xf32>
    %304 = arith.addf %301, %303 : vector<8x128xf32>
    %c0_143 = arith.constant 0 : index
    %c0_144 = arith.constant 0 : index
    %c0_145 = arith.constant 0 : index
    %305 = vector.load %arg35[%c0_143, %c0_144, %c0_145] : memref<1x8x128xf32, #tpu.memory_space<vmem>>, vector<1x8x128xf32>
    %306 = vector.shape_cast %305 : vector<1x8x128xf32> to vector<8x128xf32>
    %307 = vector.shape_cast %304 : vector<8x128xf32> to vector<1x8x128xf32>
    tpu.vector_store %arg35[%c0_143, %c0_144, %c0_145], %307 {strides = array<i32>} : memref<1x8x128xf32, #tpu.memory_space<vmem>>, vector<1x8x128xf32>,
    return
  }
  func.func @transform_0(%arg0: i32) -> (i32, i32, i32) {
    %c0_i32 = arith.constant 0 : i32
    %c0_i32_0 = arith.constant 0 : i32
    %c0_i32_1 = arith.constant 0 : i32
    return %arg0, %c0_i32, %c0_i32_0 : i32, i32, i32
  }
  func.func @transform_1(%arg0: i32) -> (i32, i32, i32) {
    %c0_i32 = arith.constant 0 : i32
    %c0_i32_0 = arith.constant 0 : i32
    %c0_i32_1 = arith.constant 0 : i32
    return %arg0, %c0_i32, %c0_i32_0 : i32, i32, i32
  }
  func.func @transform_2(%arg0: i32) -> (i32, i32, i32) {
    %c0_i32 = arith.constant 0 : i32
    %c0_i32_0 = arith.constant 0 : i32
    %c0_i32_1 = arith.constant 0 : i32
    return %arg0, %c0_i32, %c0_i32_0 : i32, i32, i32
  }
  func.func @transform_3(%arg0: i32) -> (i32, i32) {
    %c0_i32 = arith.constant 0 : i32
    %c0_i32_0 = arith.constant 0 : i32
    %c0_i32_1 = arith.constant 0 : i32
    return %c0_i32, %c0_i32_0 : i32, i32
  }
  func.func @transform_4(%arg0: i32) -> (i32, i32) {
    %c0_i32 = arith.constant 0 : i32
    %c0_i32_0 = arith.constant 0 : i32
    %c0_i32_1 = arith.constant 0 : i32
    return %c0_i32, %c0_i32_0 : i32, i32
  }
  func.func @transform_5(%arg0: i32) -> (i32, i32) {
    %c0_i32 = arith.constant 0 : i32
    %c0_i32_0 = arith.constant 0 : i32
    %c0_i32_1 = arith.constant 0 : i32
    return %c0_i32, %c0_i32_0 : i32, i32
  }
  func.func @transform_6(%arg0: i32) -> (i32, i32) {
    %c0_i32 = arith.constant 0 : i32
    %c0_i32_0 = arith.constant 0 : i32
    %c0_i32_1 = arith.constant 0 : i32
    return %c0_i32, %c0_i32_0 : i32, i32
  }
  func.func @transform_7(%arg0: i32) -> (i32, i32) {
    %c0_i32 = arith.constant 0 : i32
    %c0_i32_0 = arith.constant 0 : i32
    %c0_i32_1 = arith.constant 0 : i32
    return %c0_i32, %c0_i32_0 : i32, i32
  }
  func.func @transform_8(%arg0: i32) -> (i32, i32) {
    %c0_i32 = arith.constant 0 : i32
    %c0_i32_0 = arith.constant 0 : i32
    %c0_i32_1 = arith.constant 0 : i32
    return %c0_i32, %c0_i32_0 : i32, i32
  }
  func.func @transform_9(%arg0: i32) -> (i32, i32) {
    %c0_i32 = arith.constant 0 : i32
    %c0_i32_0 = arith.constant 0 : i32
    %c0_i32_1 = arith.constant 0 : i32
    return %c0_i32, %c0_i32_0 : i32, i32
  }
  func.func @transform_10(%arg0: i32) -> (i32, i32) {
    %c0_i32 = arith.constant 0 : i32
    %c0_i32_0 = arith.constant 0 : i32
    %c0_i32_1 = arith.constant 0 : i32
    return %c0_i32, %c0_i32_0 : i32, i32
  }
  func.func @transform_11(%arg0: i32) -> (i32, i32) {
    %c0_i32 = arith.constant 0 : i32
    %c0_i32_0 = arith.constant 0 : i32
    %c0_i32_1 = arith.constant 0 : i32
    return %c0_i32, %c0_i32_0 : i32, i32
  }
  func.func @transform_12(%arg0: i32) -> (i32, i32) {
    %c0_i32 = arith.constant 0 : i32
    %c0_i32_0 = arith.constant 0 : i32
    %c0_i32_1 = arith.constant 0 : i32
    return %c0_i32, %c0_i32_0 : i32, i32
  }
  func.func @transform_13(%arg0: i32) -> (i32, i32) {
    %c0_i32 = arith.constant 0 : i32
    %c0_i32_0 = arith.constant 0 : i32
    %c0_i32_1 = arith.constant 0 : i32
    return %c0_i32, %c0_i32_0 : i32, i32
  }
  func.func @transform_14(%arg0: i32) -> (i32, i32) {
    %c0_i32 = arith.constant 0 : i32
    %c0_i32_0 = arith.constant 0 : i32
    %c0_i32_1 = arith.constant 0 : i32
    return %c0_i32, %c0_i32_0 : i32, i32
  }
  func.func @transform_15(%arg0: i32) -> (i32, i32) {
    %c0_i32 = arith.constant 0 : i32
    %c0_i32_0 = arith.constant 0 : i32
    %c0_i32_1 = arith.constant 0 : i32
    return %c0_i32, %c0_i32_0 : i32, i32
  }
  func.func @transform_16(%arg0: i32) -> (i32, i32) {
    %c0_i32 = arith.constant 0 : i32
    %c0_i32_0 = arith.constant 0 : i32
    %c0_i32_1 = arith.constant 0 : i32
    return %c0_i32, %c0_i32_0 : i32, i32
  }
  func.func @transform_17(%arg0: i32) -> (i32, i32) {
    %c0_i32 = arith.constant 0 : i32
    %c0_i32_0 = arith.constant 0 : i32
    %c0_i32_1 = arith.constant 0 : i32
    return %c0_i32, %c0_i32_0 : i32, i32
  }
  func.func @transform_18(%arg0: i32) -> (i32, i32) {
    %c0_i32 = arith.constant 0 : i32
    %c0_i32_0 = arith.constant 0 : i32
    %c0_i32_1 = arith.constant 0 : i32
    return %c0_i32, %c0_i32_0 : i32, i32
  }
  func.func @transform_19(%arg0: i32) -> (i32, i32) {
    %c0_i32 = arith.constant 0 : i32
    %c0_i32_0 = arith.constant 0 : i32
    %c0_i32_1 = arith.constant 0 : i32
    return %c0_i32, %c0_i32_0 : i32, i32
  }
  func.func @transform_20(%arg0: i32) -> (i32, i32) {
    %c0_i32 = arith.constant 0 : i32
    %c0_i32_0 = arith.constant 0 : i32
    %c0_i32_1 = arith.constant 0 : i32
    return %c0_i32, %c0_i32_0 : i32, i32
  }
  func.func @transform_21(%arg0: i32) -> (i32, i32) {
    %c0_i32 = arith.constant 0 : i32
    %c0_i32_0 = arith.constant 0 : i32
    %c0_i32_1 = arith.constant 0 : i32
    return %c0_i32, %c0_i32_0 : i32, i32
  }
  func.func @transform_22(%arg0: i32) -> (i32, i32) {
    %c0_i32 = arith.constant 0 : i32
    %c0_i32_0 = arith.constant 0 : i32
    %c0_i32_1 = arith.constant 0 : i32
    return %c0_i32, %c0_i32_0 : i32, i32
  }
  func.func @transform_23(%arg0: i32) -> (i32, i32) {
    %c0_i32 = arith.constant 0 : i32
    %c0_i32_0 = arith.constant 0 : i32
    %c0_i32_1 = arith.constant 0 : i32
    return %c0_i32, %c0_i32_0 : i32, i32
  }
  func.func @transform_24(%arg0: i32) -> (i32, i32) {
    %c0_i32 = arith.constant 0 : i32
    %c0_i32_0 = arith.constant 0 : i32
    %c0_i32_1 = arith.constant 0 : i32
    return %c0_i32, %c0_i32_0 : i32, i32
  }
  func.func @transform_25(%arg0: i32) -> (i32, i32) {
    %c0_i32 = arith.constant 0 : i32
    %c0_i32_0 = arith.constant 0 : i32
    %c0_i32_1 = arith.constant 0 : i32
    return %c0_i32, %c0_i32_0 : i32, i32
  }
  func.func @transform_26(%arg0: i32) -> (i32, i32) {
    %c0_i32 = arith.constant 0 : i32
    %c0_i32_0 = arith.constant 0 : i32
    %c0_i32_1 = arith.constant 0 : i32
    return %c0_i32, %c0_i32_0 : i32, i32
  }
  func.func @transform_27(%arg0: i32) -> (i32, i32) {
    %c0_i32 = arith.constant 0 : i32
    %c0_i32_0 = arith.constant 0 : i32
    %c0_i32_1 = arith.constant 0 : i32
    return %c0_i32, %c0_i32_0 : i32, i32
  }
  func.func @transform_28(%arg0: i32) -> (i32, i32) {
    %c0_i32 = arith.constant 0 : i32
    %c0_i32_0 = arith.constant 0 : i32
    %c0_i32_1 = arith.constant 0 : i32
    return %c0_i32, %c0_i32_0 : i32, i32
  }
  func.func @transform_29(%arg0: i32) -> (i32, i32) {
    %c0_i32 = arith.constant 0 : i32
    %c0_i32_0 = arith.constant 0 : i32
    %c0_i32_1 = arith.constant 0 : i32
    return %c0_i32, %c0_i32_0 : i32, i32
  }
  func.func @transform_30(%arg0: i32) -> (i32, i32) {
    %c0_i32 = arith.constant 0 : i32
    %c0_i32_0 = arith.constant 0 : i32
    %c0_i32_1 = arith.constant 0 : i32
    return %c0_i32, %c0_i32_0 : i32, i32
  }
  func.func @transform_31(%arg0: i32) -> (i32, i32) {
    %c0_i32 = arith.constant 0 : i32
    %c0_i32_0 = arith.constant 0 : i32
    %c0_i32_1 = arith.constant 0 : i32
    return %c0_i32, %c0_i32_0 : i32, i32
  }
  func.func @transform_32(%arg0: i32) -> (i32, i32) {
    %c0_i32 = arith.constant 0 : i32
    %c0_i32_0 = arith.constant 0 : i32
    %c0_i32_1 = arith.constant 0 : i32
    return %c0_i32, %c0_i32_0 : i32, i32
  }
  func.func @transform_33(%arg0: i32) -> (i32, i32) {
    %c0_i32 = arith.constant 0 : i32
    %c0_i32_0 = arith.constant 0 : i32
    %c0_i32_1 = arith.constant 0 : i32
    return %c0_i32, %c0_i32_0 : i32, i32
  }
  func.func @transform_34(%arg0: i32) -> (i32, i32, i32) {
    %c0_i32 = arith.constant 0 : i32
    %c0_i32_0 = arith.constant 0 : i32
    %c0_i32_1 = arith.constant 0 : i32
    return %arg0, %c0_i32, %c0_i32_0 : i32, i32, i32
  }
}

</mosaic_0001>

<llo_original>
// kernel: residual_attention_block_forward.1
$region0: #{residual_attention_block_forward.1}
  #allocation0 [shape = 'u32[]', space=smem, size = 0x4, offset = 0x4, fixed_abs, tag = 'smem constant byte address 0x4 - core index']
  #allocation1 [shape = 'u32[144,128]{1,0:T(1,128)}', space=vmem, size = 0x12000, scoped, tag = 'internal scratch']
  %s0 = inlined_call_operand.smem [shape: u32[35], index: -1, kind: input, shape index: {}]
  %s1 = sld [smem:[%s0]]
  %s2 = scalar_lea.smem %s0, 1
  %s3 = sld [smem:[%s2]]
  %s4 = scalar_lea.smem %s0, 2
  %s5 = sld [smem:[%s4]]
  %s6 = scalar_lea.smem %s0, 3
  %s7 = sld [smem:[%s6]]
  %s8 = scalar_lea.smem %s0, 4
  %s9 = sld [smem:[%s8]]
  %s10 = scalar_lea.smem %s0, 5
  %s11 = sld [smem:[%s10]]
  %s12 = scalar_lea.smem %s0, 6
  %s13 = sld [smem:[%s12]]
  %s14 = scalar_lea.smem %s0, 7
  %s15 = sld [smem:[%s14]]
  %s16 = scalar_lea.smem %s0, 8
  %s17 = sld [smem:[%s16]]
  %s18 = scalar_lea.smem %s0, 9
  %s19 = sld [smem:[%s18]]
  %s20 = scalar_lea.smem %s0, 10
  %s21 = sld [smem:[%s20]]
  %s22 = scalar_lea.smem %s0, 11
  %s23 = sld [smem:[%s22]]
  %s24 = scalar_lea.smem %s0, 12
  %s25 = sld [smem:[%s24]]
  %s26 = scalar_lea.smem %s0, 13
  %s27 = sld [smem:[%s26]]
  %s28 = scalar_lea.smem %s0, 14
  %s29 = sld [smem:[%s28]]
  %s30 = scalar_lea.smem %s0, 15
  %s31 = sld [smem:[%s30]]
  %s32 = scalar_lea.smem %s0, 16
  %s33 = sld [smem:[%s32]]
  %s34 = scalar_lea.smem %s0, 17
  %s35 = sld [smem:[%s34]]
  %s36 = scalar_lea.smem %s0, 18
  %s37 = sld [smem:[%s36]]
  %s38 = scalar_lea.smem %s0, 19
  %s39 = sld [smem:[%s38]]
  %s40 = scalar_lea.smem %s0, 20
  %s41 = sld [smem:[%s40]]
  %s42 = scalar_lea.smem %s0, 21
  %s43 = sld [smem:[%s42]]
  %s44 = scalar_lea.smem %s0, 22
  %s45 = sld [smem:[%s44]]
  %s46 = scalar_lea.smem %s0, 23
  %s47 = sld [smem:[%s46]]
  %s48 = scalar_lea.smem %s0, 24
  %s49 = sld [smem:[%s48]]
  %s50 = scalar_lea.smem %s0, 25
  %s51 = sld [smem:[%s50]]
  %s52 = scalar_lea.smem %s0, 26
  %s53 = sld [smem:[%s52]]
  %s54 = scalar_lea.smem %s0, 27
  %s55 = sld [smem:[%s54]]
  %s56 = scalar_lea.smem %s0, 28
  %s57 = sld [smem:[%s56]]
  %s58 = scalar_lea.smem %s0, 29
  %s59 = sld [smem:[%s58]]
  %s60 = scalar_lea.smem %s0, 30
  %s61 = sld [smem:[%s60]]
  %s62 = scalar_lea.smem %s0, 31
  %s63 = sld [smem:[%s62]]
  %s64 = scalar_lea.smem %s0, 32
  %s65 = sld [smem:[%s64]]
  %s66 = scalar_lea.smem %s0, 33
  %s67 = sld [smem:[%s66]]
  %s68 = scalar_lea.smem %s0, 34
  %s69 = sld [smem:[%s68]]
  %s70 = sld [smem:[#allocation0]]
  $region197: #{residual_attention_block_forward.1} parent=0
    _
  %s72 = ssub.s32 1, %s70
  %s73 = scalar_select 0, %s72, %s70
  $region1: #{residual_attention_block_forward.1} parent=0
    #allocation2 [shape = 'u8[196608]{0}', space=vmem, size = 0x30000, scoped, tag = 'input window, operand 10, single buffered']
    #allocation3 [shape = 's32[2]{0}', space=sflag, size = 0x8, scoped, tag = 'scoped memory for residual_attention_block_forward.1']
    #allocation4 [shape = 'u8[65536]{0}', space=vmem, size = 0x10000, scoped, tag = 'input window, operand 12, single buffered']
    #allocation5 [shape = 's32[1]{0}', space=sflag, size = 0x4, scoped, tag = 'scoped memory for residual_attention_block_forward.1']
    #allocation6 [shape = 'u8[262144]{0}', space=vmem, size = 0x40000, scoped, tag = 'input window, operand 18, single buffered']
    #allocation7 [shape = 'u8[32768]{0}', space=vmem, size = 0x8000, scoped, tag = 'input window, operand 20, single buffered']
    #allocation8 [shape = 's32[1]{0}', space=sflag, size = 0x4, scoped, tag = 'scoped memory for residual_attention_block_forward.1']
    #allocation9 [shape = 'u8[32768]{0}', space=vmem, size = 0x8000, scoped, tag = 'input window, operand 22, single buffered']
    #allocation10 [shape = 'u8[32768]{0}', space=vmem, size = 0x8000, scoped, tag = 'input window, operand 24, single buffered']
    #allocation11 [shape = 's32[1]{0}', space=sflag, size = 0x4, scoped, tag = 'scoped memory for residual_attention_block_forward.1']
    #allocation12 [shape = 'u8[32768]{0}', space=vmem, size = 0x8000, scoped, tag = 'input window, operand 26, single buffered']
    %74 = vsyncpa [#allocation3], 0
    %75 = vsyncpa [#allocation5], 0
    %76 = vsyncpa [#allocation8], 0
    %77 = vsyncpa [#allocation11], 0
    loop: start=0, step=1, limit=4
    $region2: #{residual_attention_block_forward.1} parent=1 // loop_pre_header
      _
    $region3: #{residual_attention_block_forward.1} parent=1 // loop_header
      %s79 = sphi 0, %s83
      %p80 = scmp.ge.s32.totalorder %s79, 4
      %s89 = sphi 0, %s91
      %s92 = sphi 0, %s89
      %s93 = sphi 0, %s92
      %s109 = sphi 0, %s93
      %s115 = sphi 0, %s117
      %s118 = sphi 0, %s115
      %s119 = sphi 0, %s118
      %s135 = sphi 0, %s119
      %s141 = sphi 0, %s143
      %s144 = sphi 0, %s141
      %s145 = sphi 0, %s144
      %s161 = sphi 0, %s145
      %s165 = sphi 0, %s165
      %s167 = sphi 0, %s165
      %s168 = sphi 0, %s167
      %s182 = sphi 0, %s168
      %s186 = sphi 0, %s186
      %s188 = sphi 0, %s186
      %s189 = sphi 0, %s188
      %s203 = sphi 0, %s189
      %s207 = sphi 0, %s207
      %s209 = sphi 0, %s207
      %s210 = sphi 0, %s209
      %s224 = sphi 0, %s210
      %s228 = sphi 0, %s228
      %s230 = sphi 0, %s228
      %s231 = sphi 0, %s230
      %s245 = sphi 0, %s231
      %s249 = sphi 0, %s249
      %s251 = sphi 0, %s249
      %s252 = sphi 0, %s251
      %s266 = sphi 0, %s252
      %s270 = sphi 0, %s270
      %s272 = sphi 0, %s270
      %s273 = sphi 0, %s272
      %s287 = sphi 0, %s273
      %s291 = sphi 0, %s291
      %s293 = sphi 0, %s291
      %s294 = sphi 0, %s293
      %s308 = sphi 0, %s294
      %s312 = sphi 0, %s312
      %s314 = sphi 0, %s312
      %s315 = sphi 0, %s314
      %s329 = sphi 0, %s315
      %s333 = sphi 0, %s333
      %s335 = sphi 0, %s333
      %s336 = sphi 0, %s335
      %s350 = sphi 0, %s336
      %s354 = sphi 0, %s354
      %s356 = sphi 0, %s354
      %s357 = sphi 0, %s356
      %s371 = sphi 0, %s357
      %s375 = sphi 0, %s375
      %s377 = sphi 0, %s375
      %s378 = sphi 0, %s377
      %s392 = sphi 0, %s378
      %s396 = sphi 0, %s396
      %s398 = sphi 0, %s396
      %s399 = sphi 0, %s398
      %s413 = sphi 0, %s399
      %s417 = sphi 0, %s417
      %s419 = sphi 0, %s417
      %s420 = sphi 0, %s419
      %s434 = sphi 0, %s420
      %s438 = sphi 0, %s438
      %s440 = sphi 0, %s438
      %s441 = sphi 0, %s440
      %s455 = sphi 0, %s441
      %s459 = sphi 0, %s459
      %s461 = sphi 0, %s459
      %s462 = sphi 0, %s461
      %s476 = sphi 0, %s462
      %s480 = sphi 0, %s480
      %s482 = sphi 0, %s480
      %s483 = sphi 0, %s482
      %s497 = sphi 0, %s483
      %s501 = sphi 0, %s501
      %s503 = sphi 0, %s501
      %s504 = sphi 0, %s503
      %s518 = sphi 0, %s504
      %s522 = sphi 0, %s522
      %s524 = sphi 0, %s522
      %s525 = sphi 0, %s524
      %s539 = sphi 0, %s525
      %s543 = sphi 0, %s543
      %s545 = sphi 0, %s543
      %s546 = sphi 0, %s545
      %s560 = sphi 0, %s546
      %s564 = sphi 0, %s564
      %s566 = sphi 0, %s564
      %s567 = sphi 0, %s566
      %s581 = sphi 0, %s567
      %s585 = sphi 0, %s585
      %s587 = sphi 0, %s585
      %s588 = sphi 0, %s587
      %s602 = sphi 0, %s588
      %s606 = sphi 0, %s606
      %s608 = sphi 0, %s606
      %s609 = sphi 0, %s608
      %s623 = sphi 0, %s609
      %s627 = sphi 0, %s627
      %s629 = sphi 0, %s627
      %s630 = sphi 0, %s629
      %s644 = sphi 0, %s630
      %s648 = sphi 0, %s648
      %s650 = sphi 0, %s648
      %s651 = sphi 0, %s650
      %s665 = sphi 0, %s651
      %s669 = sphi 0, %s669
      %s671 = sphi 0, %s669
      %s672 = sphi 0, %s671
      %s686 = sphi 0, %s672
      %s690 = sphi 0, %s690
      %s692 = sphi 0, %s690
      %s693 = sphi 0, %s692
      %s707 = sphi 0, %s693
      %s711 = sphi 0, %s711
      %s713 = sphi 0, %s711
      %s714 = sphi 0, %s713
      %s728 = sphi 0, %s714
      %s732 = sphi 0, %s732
      %s734 = sphi 0, %s732
      %s735 = sphi 0, %s734
      %s749 = sphi 0, %s735
      %s753 = sphi 0, %s753
      %s755 = sphi 0, %s753
      %s756 = sphi 0, %s755
      %s770 = sphi 0, %s756
      %s774 = sphi 0, %s774
      %s776 = sphi 0, %s774
      %s777 = sphi 0, %s776
      %s791 = sphi 0, %s777
      %s795 = sphi 0, %s795
      %s797 = sphi 0, %s795
      %s798 = sphi 0, %s797
      %s812 = sphi 0, %s798
      %s818 = sphi 0, %s820
      %s821 = sphi 0, %s818
      %s822 = sphi 0, %s821
      %s838 = sphi 0, %s822
    $region4: #{residual_attention_block_forward.1} parent=1 // loop_header_branch
      %82 = sbr.rel (%p80) target = $region8
    $region5: #{residual_attention_block_forward.1} parent=1 // loop_body
      %s84 = ssub.s32 %s79, 1
      %s85 = ssub.s32 %s79, 2
      %s86 = sadd.s32 %s79, 1
      %s87 = ssub.s32 %s79, %s86
      %p88 = scmp.eq.s32.totalorder %s87, 0
      %s90 = sadd.s32 %s89, 1
      %s91 = scalar_select %p88, %s89, %s90
      %p94 = pneg %p88
      %p95 = scmp.eq.s32.totalorder %s79, 1
      %p96 = por %p94, %p95
      %p97 = scmp.ne.s32.totalorder %s89, %s92
      %p98 = scmp.eq.s32.totalorder %s79, 0
      %p99 = por %p97, %p98
      %p100 = scmp.ne.s32.totalorder %s89, %s92
      %p101 = scmp.eq.s32.totalorder %s84, 1
      %p102 = por %p100, %p101
      %p103 = scmp.ne.s32.totalorder %s92, %s93
      %p104 = scmp.eq.s32.totalorder %s84, 0
      %p105 = por %p103, %p104
      %p106 = scmp.ne.s32.totalorder %s92, %s93
      %p107 = scmp.eq.s32.totalorder %s85, 1
      %p108 = por %p106, %p107
      %p110 = scmp.ne.s32.totalorder %s93, %s109
      %p111 = scmp.eq.s32.totalorder %s85, 0
      %p112 = por %p110, %p111
      %s113 = ssub.s32 %s79, %s86
      %p114 = scmp.eq.s32.totalorder %s113, 0
      %s116 = sadd.s32 %s115, 1
      %s117 = scalar_select %p114, %s115, %s116
      %p120 = pneg %p114
      %p121 = scmp.eq.s32.totalorder %s79, 1
      %p122 = por %p120, %p121
      %p123 = scmp.ne.s32.totalorder %s115, %s118
      %p124 = scmp.eq.s32.totalorder %s79, 0
      %p125 = por %p123, %p124
      %p126 = scmp.ne.s32.totalorder %s115, %s118
      %p127 = scmp.eq.s32.totalorder %s84, 1
      %p128 = por %p126, %p127
      %p129 = scmp.ne.s32.totalorder %s118, %s119
      %p130 = scmp.eq.s32.totalorder %s84, 0
      %p131 = por %p129, %p130
      %p132 = scmp.ne.s32.totalorder %s118, %s119
      %p133 = scmp.eq.s32.totalorder %s85, 1
      %p134 = por %p132, %p133
      %p136 = scmp.ne.s32.totalorder %s119, %s135
      %p137 = scmp.eq.s32.totalorder %s85, 0
      %p138 = por %p136, %p137
      %s139 = ssub.s32 %s79, %s86
      %p140 = scmp.eq.s32.totalorder %s139, 0
      %s142 = sadd.s32 %s141, 1
      %s143 = scalar_select %p140, %s141, %s142
      %p146 = pneg %p140
      %p147 = scmp.eq.s32.totalorder %s79, 1
      %p148 = por %p146, %p147
      %p149 = scmp.ne.s32.totalorder %s141, %s144
      %p150 = scmp.eq.s32.totalorder %s79, 0
      %p151 = por %p149, %p150
      %p152 = scmp.ne.s32.totalorder %s141, %s144
      %p153 = scmp.eq.s32.totalorder %s84, 1
      %p154 = por %p152, %p153
      %p155 = scmp.ne.s32.totalorder %s144, %s145
      %p156 = scmp.eq.s32.totalorder %s84, 0
      %p157 = por %p155, %p156
      %p158 = scmp.ne.s32.totalorder %s144, %s145
      %p159 = scmp.eq.s32.totalorder %s85, 1
      %p160 = por %p158, %p159
      %p162 = scmp.ne.s32.totalorder %s145, %s161
      %p163 = scmp.eq.s32.totalorder %s85, 0
      %p164 = por %p162, %p163
      %s166 = sadd.s32 %s165, 1
      %p169 = scmp.eq.s32.totalorder %s79, 1
      %p170 = scmp.ne.s32.totalorder %s165, %s167
      %p171 = scmp.eq.s32.totalorder %s79, 0
      %p172 = por %p170, %p171
      %p173 = scmp.ne.s32.totalorder %s165, %s167
      %p174 = scmp.eq.s32.totalorder %s84, 1
      %p175 = por %p173, %p174
      %p176 = scmp.ne.s32.totalorder %s167, %s168
      %p177 = scmp.eq.s32.totalorder %s84, 0
      %p178 = por %p176, %p177
      %p179 = scmp.ne.s32.totalorder %s167, %s168
      %p180 = scmp.eq.s32.totalorder %s85, 1
      %p181 = por %p179, %p180
      %p183 = scmp.ne.s32.totalorder %s168, %s182
      %p184 = scmp.eq.s32.totalorder %s85, 0
      %p185 = por %p183, %p184
      %s187 = sadd.s32 %s186, 1
      %p190 = scmp.eq.s32.totalorder %s79, 1
      %p191 = scmp.ne.s32.totalorder %s186, %s188
      %p192 = scmp.eq.s32.totalorder %s79, 0
      %p193 = por %p191, %p192
      %p194 = scmp.ne.s32.totalorder %s186, %s188
      %p195 = scmp.eq.s32.totalorder %s84, 1
      %p196 = por %p194, %p195
      %p197 = scmp.ne.s32.totalorder %s188, %s189
      %p198 = scmp.eq.s32.totalorder %s84, 0
      %p199 = por %p197, %p198
      %p200 = scmp.ne.s32.totalorder %s188, %s189
      %p201 = scmp.eq.s32.totalorder %s85, 1
      %p202 = por %p200, %p201
      %p204 = scmp.ne.s32.totalorder %s189, %s203
      %p205 = scmp.eq.s32.totalorder %s85, 0
      %p206 = por %p204, %p205
      %s208 = sadd.s32 %s207, 1
      %p211 = scmp.eq.s32.totalorder %s79, 1
      %p212 = scmp.ne.s32.totalorder %s207, %s209
      %p213 = scmp.eq.s32.totalorder %s79, 0
      %p214 = por %p212, %p213
      %p215 = scmp.ne.s32.totalorder %s207, %s209
      %p216 = scmp.eq.s32.totalorder %s84, 1
      %p217 = por %p215, %p216
      %p218 = scmp.ne.s32.totalorder %s209, %s210
      %p219 = scmp.eq.s32.totalorder %s84, 0
      %p220 = por %p218, %p219
      %p221 = scmp.ne.s32.totalorder %s209, %s210
      %p222 = scmp.eq.s32.totalorder %s85, 1
      %p223 = por %p221, %p222
      %p225 = scmp.ne.s32.totalorder %s210, %s224
      %p226 = scmp.eq.s32.totalorder %s85, 0
      %p227 = por %p225, %p226
      %s229 = sadd.s32 %s228, 1
      %p232 = scmp.eq.s32.totalorder %s79, 1
      %p233 = scmp.ne.s32.totalorder %s228, %s230
      %p234 = scmp.eq.s32.totalorder %s79, 0
      %p235 = por %p233, %p234
      %p236 = scmp.ne.s32.totalorder %s228, %s230
      %p237 = scmp.eq.s32.totalorder %s84, 1
      %p238 = por %p236, %p237
      %p239 = scmp.ne.s32.totalorder %s230, %s231
      %p240 = scmp.eq.s32.totalorder %s84, 0
      %p241 = por %p239, %p240
      %p242 = scmp.ne.s32.totalorder %s230, %s231
      %p243 = scmp.eq.s32.totalorder %s85, 1
      %p244 = por %p242, %p243
      %p246 = scmp.ne.s32.totalorder %s231, %s245
      %p247 = scmp.eq.s32.totalorder %s85, 0
      %p248 = por %p246, %p247
      %s250 = sadd.s32 %s249, 1
      %p253 = scmp.eq.s32.totalorder %s79, 1
      %p254 = scmp.ne.s32.totalorder %s249, %s251
      %p255 = scmp.eq.s32.totalorder %s79, 0
      %p256 = por %p254, %p255
      %p257 = scmp.ne.s32.totalorder %s249, %s251
      %p258 = scmp.eq.s32.totalorder %s84, 1
      %p259 = por %p257, %p258
      %p260 = scmp.ne.s32.totalorder %s251, %s252
      %p261 = scmp.eq.s32.totalorder %s84, 0
      %p262 = por %p260, %p261
      %p263 = scmp.ne.s32.totalorder %s251, %s252
      %p264 = scmp.eq.s32.totalorder %s85, 1
      %p265 = por %p263, %p264
      %p267 = scmp.ne.s32.totalorder %s252, %s266
      %p268 = scmp.eq.s32.totalorder %s85, 0
      %p269 = por %p267, %p268
      %s271 = sadd.s32 %s270, 1
      %p274 = scmp.eq.s32.totalorder %s79, 1
      %p275 = scmp.ne.s32.totalorder %s270, %s272
      %p276 = scmp.eq.s32.totalorder %s79, 0
      %p277 = por %p275, %p276
      %p278 = scmp.ne.s32.totalorder %s270, %s272
      %p279 = scmp.eq.s32.totalorder %s84, 1
      %p280 = por %p278, %p279
      %p281 = scmp.ne.s32.totalorder %s272, %s273
      %p282 = scmp.eq.s32.totalorder %s84, 0
      %p283 = por %p281, %p282
      %p284 = scmp.ne.s32.totalorder %s272, %s273
      %p285 = scmp.eq.s32.totalorder %s85, 1
      %p286 = por %p284, %p285
      %p288 = scmp.ne.s32.totalorder %s273, %s287
      %p289 = scmp.eq.s32.totalorder %s85, 0
      %p290 = por %p288, %p289
      %s292 = sadd.s32 %s291, 1
      %p295 = scmp.eq.s32.totalorder %s79, 1
      %p296 = scmp.ne.s32.totalorder %s291, %s293
      %p297 = scmp.eq.s32.totalorder %s79, 0
      %p298 = por %p296, %p297
      %p299 = scmp.ne.s32.totalorder %s291, %s293
      %p300 = scmp.eq.s32.totalorder %s84, 1
      %p301 = por %p299, %p300
      %p302 = scmp.ne.s32.totalorder %s293, %s294
      %p303 = scmp.eq.s32.totalorder %s84, 0
      %p304 = por %p302, %p303
      %p305 = scmp.ne.s32.totalorder %s293, %s294
      %p306 = scmp.eq.s32.totalorder %s85, 1
      %p307 = por %p305, %p306
      %p309 = scmp.ne.s32.totalorder %s294, %s308
      %p310 = scmp.eq.s32.totalorder %s85, 0
      %p311 = por %p309, %p310
      %s313 = sadd.s32 %s312, 1
      %p316 = scmp.eq.s32.totalorder %s79, 1
      %p317 = scmp.ne.s32.totalorder %s312, %s314
      %p318 = scmp.eq.s32.totalorder %s79, 0
      %p319 = por %p317, %p318
      %p320 = scmp.ne.s32.totalorder %s312, %s314
      %p321 = scmp.eq.s32.totalorder %s84, 1
      %p322 = por %p320, %p321
      %p323 = scmp.ne.s32.totalorder %s314, %s315
      %p324 = scmp.eq.s32.totalorder %s84, 0
      %p325 = por %p323, %p324
      %p326 = scmp.ne.s32.totalorder %s314, %s315
      %p327 = scmp.eq.s32.totalorder %s85, 1
      %p328 = por %p326, %p327
      %p330 = scmp.ne.s32.totalorder %s315, %s329
      %p331 = scmp.eq.s32.totalorder %s85, 0
      %p332 = por %p330, %p331
      %s334 = sadd.s32 %s333, 1
      %p337 = scmp.eq.s32.totalorder %s79, 1
      %p338 = scmp.ne.s32.totalorder %s333, %s335
      %p339 = scmp.eq.s32.totalorder %s79, 0
      %p340 = por %p338, %p339
      %p341 = scmp.ne.s32.totalorder %s333, %s335
      %p342 = scmp.eq.s32.totalorder %s84, 1
      %p343 = por %p341, %p342
      %p344 = scmp.ne.s32.totalorder %s335, %s336
      %p345 = scmp.eq.s32.totalorder %s84, 0
      %p346 = por %p344, %p345
      %p347 = scmp.ne.s32.totalorder %s335, %s336
      %p348 = scmp.eq.s32.totalorder %s85, 1
      %p349 = por %p347, %p348
      %p351 = scmp.ne.s32.totalorder %s336, %s350
      %p352 = scmp.eq.s32.totalorder %s85, 0
      %p353 = por %p351, %p352
      %s355 = sadd.s32 %s354, 1
      %p358 = scmp.eq.s32.totalorder %s79, 1
      %p359 = scmp.ne.s32.totalorder %s354, %s356
      %p360 = scmp.eq.s32.totalorder %s79, 0
      %p361 = por %p359, %p360
      %p362 = scmp.ne.s32.totalorder %s354, %s356
      %p363 = scmp.eq.s32.totalorder %s84, 1
      %p364 = por %p362, %p363
      %p365 = scmp.ne.s32.totalorder %s356, %s357
      %p366 = scmp.eq.s32.totalorder %s84, 0
      %p367 = por %p365, %p366
      %p368 = scmp.ne.s32.totalorder %s356, %s357
      %p369 = scmp.eq.s32.totalorder %s85, 1
      %p370 = por %p368, %p369
      %p372 = scmp.ne.s32.totalorder %s357, %s371
      %p373 = scmp.eq.s32.totalorder %s85, 0
      %p374 = por %p372, %p373
      %s376 = sadd.s32 %s375, 1
      %p379 = scmp.eq.s32.totalorder %s79, 1
      %p380 = scmp.ne.s32.totalorder %s375, %s377
      %p381 = scmp.eq.s32.totalorder %s79, 0
      %p382 = por %p380, %p381
      %p383 = scmp.ne.s32.totalorder %s375, %s377
      %p384 = scmp.eq.s32.totalorder %s84, 1
      %p385 = por %p383, %p384
      %p386 = scmp.ne.s32.totalorder %s377, %s378
      %p387 = scmp.eq.s32.totalorder %s84, 0
      %p388 = por %p386, %p387
      %p389 = scmp.ne.s32.totalorder %s377, %s378
      %p390 = scmp.eq.s32.totalorder %s85, 1
      %p391 = por %p389, %p390
      %p393 = scmp.ne.s32.totalorder %s378, %s392
      %p394 = scmp.eq.s32.totalorder %s85, 0
      %p395 = por %p393, %p394
      %s397 = sadd.s32 %s396, 1
      %p400 = scmp.eq.s32.totalorder %s79, 1
      %p401 = scmp.ne.s32.totalorder %s396, %s398
      %p402 = scmp.eq.s32.totalorder %s79, 0
      %p403 = por %p401, %p402
      %p404 = scmp.ne.s32.totalorder %s396, %s398
      %p405 = scmp.eq.s32.totalorder %s84, 1
      %p406 = por %p404, %p405
      %p407 = scmp.ne.s32.totalorder %s398, %s399
      %p408 = scmp.eq.s32.totalorder %s84, 0
      %p409 = por %p407, %p408
      %p410 = scmp.ne.s32.totalorder %s398, %s399
      %p411 = scmp.eq.s32.totalorder %s85, 1
      %p412 = por %p410, %p411
      %p414 = scmp.ne.s32.totalorder %s399, %s413
      %p415 = scmp.eq.s32.totalorder %s85, 0
      %p416 = por %p414, %p415
      %s418 = sadd.s32 %s417, 1
      %p421 = scmp.eq.s32.totalorder %s79, 1
      %p422 = scmp.ne.s32.totalorder %s417, %s419
      %p423 = scmp.eq.s32.totalorder %s79, 0
      %p424 = por %p422, %p423
      %p425 = scmp.ne.s32.totalorder %s417, %s419
      %p426 = scmp.eq.s32.totalorder %s84, 1
      %p427 = por %p425, %p426
      %p428 = scmp.ne.s32.totalorder %s419, %s420
      %p429 = scmp.eq.s32.totalorder %s84, 0
      %p430 = por %p428, %p429
      %p431 = scmp.ne.s32.totalorder %s419, %s420
      %p432 = scmp.eq.s32.totalorder %s85, 1
      %p433 = por %p431, %p432
      %p435 = scmp.ne.s32.totalorder %s420, %s434
      %p436 = scmp.eq.s32.totalorder %s85, 0
      %p437 = por %p435, %p436
      %s439 = sadd.s32 %s438, 1
      %p442 = scmp.eq.s32.totalorder %s79, 1
      %p443 = scmp.ne.s32.totalorder %s438, %s440
      %p444 = scmp.eq.s32.totalorder %s79, 0
      %p445 = por %p443, %p444
      %p446 = scmp.ne.s32.totalorder %s438, %s440
      %p447 = scmp.eq.s32.totalorder %s84, 1
      %p448 = por %p446, %p447
      %p449 = scmp.ne.s32.totalorder %s440, %s441
      %p450 = scmp.eq.s32.totalorder %s84, 0
      %p451 = por %p449, %p450
      %p452 = scmp.ne.s32.totalorder %s440, %s441
      %p453 = scmp.eq.s32.totalorder %s85, 1
      %p454 = por %p452, %p453
      %p456 = scmp.ne.s32.totalorder %s441, %s455
      %p457 = scmp.eq.s32.totalorder %s85, 0
      %p458 = por %p456, %p457
      %s460 = sadd.s32 %s459, 1
      %p463 = scmp.eq.s32.totalorder %s79, 1
      %p464 = scmp.ne.s32.totalorder %s459, %s461
      %p465 = scmp.eq.s32.totalorder %s79, 0
      %p466 = por %p464, %p465
      %p467 = scmp.ne.s32.totalorder %s459, %s461
      %p468 = scmp.eq.s32.totalorder %s84, 1
      %p469 = por %p467, %p468
      %p470 = scmp.ne.s32.totalorder %s461, %s462
      %p471 = scmp.eq.s32.totalorder %s84, 0
      %p472 = por %p470, %p471
      %p473 = scmp.ne.s32.totalorder %s461, %s462
      %p474 = scmp.eq.s32.totalorder %s85, 1
      %p475 = por %p473, %p474
      %p477 = scmp.ne.s32.totalorder %s462, %s476
      %p478 = scmp.eq.s32.totalorder %s85, 0
      %p479 = por %p477, %p478
      %s481 = sadd.s32 %s480, 1
      %p484 = scmp.eq.s32.totalorder %s79, 1
      %p485 = scmp.ne.s32.totalorder %s480, %s482
      %p486 = scmp.eq.s32.totalorder %s79, 0
      %p487 = por %p485, %p486
      %p488 = scmp.ne.s32.totalorder %s480, %s482
      %p489 = scmp.eq.s32.totalorder %s84, 1
      %p490 = por %p488, %p489
      %p491 = scmp.ne.s32.totalorder %s482, %s483
      %p492 = scmp.eq.s32.totalorder %s84, 0
      %p493 = por %p491, %p492
      %p494 = scmp.ne.s32.totalorder %s482, %s483
      %p495 = scmp.eq.s32.totalorder %s85, 1
      %p496 = por %p494, %p495
      %p498 = scmp.ne.s32.totalorder %s483, %s497
      %p499 = scmp.eq.s32.totalorder %s85, 0
      %p500 = por %p498, %p499
      %s502 = sadd.s32 %s501, 1
      %p505 = scmp.eq.s32.totalorder %s79, 1
      %p506 = scmp.ne.s32.totalorder %s501, %s503
      %p507 = scmp.eq.s32.totalorder %s79, 0
      %p508 = por %p506, %p507
      %p509 = scmp.ne.s32.totalorder %s501, %s503
      %p510 = scmp.eq.s32.totalorder %s84, 1
      %p511 = por %p509, %p510
      %p512 = scmp.ne.s32.totalorder %s503, %s504
      %p513 = scmp.eq.s32.totalorder %s84, 0
      %p514 = por %p512, %p513
      %p515 = scmp.ne.s32.totalorder %s503, %s504
      %p516 = scmp.eq.s32.totalorder %s85, 1
      %p517 = por %p515, %p516
      %p519 = scmp.ne.s32.totalorder %s504, %s518
      %p520 = scmp.eq.s32.totalorder %s85, 0
      %p521 = por %p519, %p520
      %s523 = sadd.s32 %s522, 1
      %p526 = scmp.eq.s32.totalorder %s79, 1
      %p527 = scmp.ne.s32.totalorder %s522, %s524
      %p528 = scmp.eq.s32.totalorder %s79, 0
      %p529 = por %p527, %p528
      %p530 = scmp.ne.s32.totalorder %s522, %s524
      %p531 = scmp.eq.s32.totalorder %s84, 1
      %p532 = por %p530, %p531
      %p533 = scmp.ne.s32.totalorder %s524, %s525
      %p534 = scmp.eq.s32.totalorder %s84, 0
      %p535 = por %p533, %p534
      %p536 = scmp.ne.s32.totalorder %s524, %s525
      %p537 = scmp.eq.s32.totalorder %s85, 1
      %p538 = por %p536, %p537
      %p540 = scmp.ne.s32.totalorder %s525, %s539
      %p541 = scmp.eq.s32.totalorder %s85, 0
      %p542 = por %p540, %p541
      %s544 = sadd.s32 %s543, 1
      %p547 = scmp.eq.s32.totalorder %s79, 1
      %p548 = scmp.ne.s32.totalorder %s543, %s545
      %p549 = scmp.eq.s32.totalorder %s79, 0
      %p550 = por %p548, %p549
      %p551 = scmp.ne.s32.totalorder %s543, %s545
      %p552 = scmp.eq.s32.totalorder %s84, 1
      %p553 = por %p551, %p552
      %p554 = scmp.ne.s32.totalorder %s545, %s546
      %p555 = scmp.eq.s32.totalorder %s84, 0
      %p556 = por %p554, %p555
      %p557 = scmp.ne.s32.totalorder %s545, %s546
      %p558 = scmp.eq.s32.totalorder %s85, 1
      %p559 = por %p557, %p558
      %p561 = scmp.ne.s32.totalorder %s546, %s560
      %p562 = scmp.eq.s32.totalorder %s85, 0
      %p563 = por %p561, %p562
      %s565 = sadd.s32 %s564, 1
      %p568 = scmp.eq.s32.totalorder %s79, 1
      %p569 = scmp.ne.s32.totalorder %s564, %s566
      %p570 = scmp.eq.s32.totalorder %s79, 0
      %p571 = por %p569, %p570
      %p572 = scmp.ne.s32.totalorder %s564, %s566
      %p573 = scmp.eq.s32.totalorder %s84, 1
      %p574 = por %p572, %p573
      %p575 = scmp.ne.s32.totalorder %s566, %s567
      %p576 = scmp.eq.s32.totalorder %s84, 0
      %p577 = por %p575, %p576
      %p578 = scmp.ne.s32.totalorder %s566, %s567
      %p579 = scmp.eq.s32.totalorder %s85, 1
      %p580 = por %p578, %p579
      %p582 = scmp.ne.s32.totalorder %s567, %s581
      %p583 = scmp.eq.s32.totalorder %s85, 0
      %p584 = por %p582, %p583
      %s586 = sadd.s32 %s585, 1
      %p589 = scmp.eq.s32.totalorder %s79, 1
      %p590 = scmp.ne.s32.totalorder %s585, %s587
      %p591 = scmp.eq.s32.totalorder %s79, 0
      %p592 = por %p590, %p591
      %p593 = scmp.ne.s32.totalorder %s585, %s587
      %p594 = scmp.eq.s32.totalorder %s84, 1
      %p595 = por %p593, %p594
      %p596 = scmp.ne.s32.totalorder %s587, %s588
      %p597 = scmp.eq.s32.totalorder %s84, 0
      %p598 = por %p596, %p597
      %p599 = scmp.ne.s32.totalorder %s587, %s588
      %p600 = scmp.eq.s32.totalorder %s85, 1
      %p601 = por %p599, %p600
      %p603 = scmp.ne.s32.totalorder %s588, %s602
      %p604 = scmp.eq.s32.totalorder %s85, 0
      %p605 = por %p603, %p604
      %s607 = sadd.s32 %s606, 1
      %p610 = scmp.eq.s32.totalorder %s79, 1
      %p611 = scmp.ne.s32.totalorder %s606, %s608
      %p612 = scmp.eq.s32.totalorder %s79, 0
      %p613 = por %p611, %p612
      %p614 = scmp.ne.s32.totalorder %s606, %s608
      %p615 = scmp.eq.s32.totalorder %s84, 1
      %p616 = por %p614, %p615
      %p617 = scmp.ne.s32.totalorder %s608, %s609
      %p618 = scmp.eq.s32.totalorder %s84, 0
      %p619 = por %p617, %p618
      %p620 = scmp.ne.s32.totalorder %s608, %s609
      %p621 = scmp.eq.s32.totalorder %s85, 1
      %p622 = por %p620, %p621
      %p624 = scmp.ne.s32.totalorder %s609, %s623
      %p625 = scmp.eq.s32.totalorder %s85, 0
      %p626 = por %p624, %p625
      %s628 = sadd.s32 %s627, 1
      %p631 = scmp.eq.s32.totalorder %s79, 1
      %p632 = scmp.ne.s32.totalorder %s627, %s629
      %p633 = scmp.eq.s32.totalorder %s79, 0
      %p634 = por %p632, %p633
      %p635 = scmp.ne.s32.totalorder %s627, %s629
      %p636 = scmp.eq.s32.totalorder %s84, 1
      %p637 = por %p635, %p636
      %p638 = scmp.ne.s32.totalorder %s629, %s630
      %p639 = scmp.eq.s32.totalorder %s84, 0
      %p640 = por %p638, %p639
      %p641 = scmp.ne.s32.totalorder %s629, %s630
      %p642 = scmp.eq.s32.totalorder %s85, 1
      %p643 = por %p641, %p642
      %p645 = scmp.ne.s32.totalorder %s630, %s644
      %p646 = scmp.eq.s32.totalorder %s85, 0
      %p647 = por %p645, %p646
      %s649 = sadd.s32 %s648, 1
      %p652 = scmp.eq.s32.totalorder %s79, 1
      %p653 = scmp.ne.s32.totalorder %s648, %s650
      %p654 = scmp.eq.s32.totalorder %s79, 0
      %p655 = por %p653, %p654
      %p656 = scmp.ne.s32.totalorder %s648, %s650
      %p657 = scmp.eq.s32.totalorder %s84, 1
      %p658 = por %p656, %p657
      %p659 = scmp.ne.s32.totalorder %s650, %s651
      %p660 = scmp.eq.s32.totalorder %s84, 0
      %p661 = por %p659, %p660
      %p662 = scmp.ne.s32.totalorder %s650, %s651
      %p663 = scmp.eq.s32.totalorder %s85, 1
      %p664 = por %p662, %p663
      %p666 = scmp.ne.s32.totalorder %s651, %s665
      %p667 = scmp.eq.s32.totalorder %s85, 0
      %p668 = por %p666, %p667
      %s670 = sadd.s32 %s669, 1
      %p673 = scmp.eq.s32.totalorder %s79, 1
      %p674 = scmp.ne.s32.totalorder %s669, %s671
      %p675 = scmp.eq.s32.totalorder %s79, 0
      %p676 = por %p674, %p675
      %p677 = scmp.ne.s32.totalorder %s669, %s671
      %p678 = scmp.eq.s32.totalorder %s84, 1
      %p679 = por %p677, %p678
      %p680 = scmp.ne.s32.totalorder %s671, %s672
      %p681 = scmp.eq.s32.totalorder %s84, 0
      %p682 = por %p680, %p681
      %p683 = scmp.ne.s32.totalorder %s671, %s672
      %p684 = scmp.eq.s32.totalorder %s85, 1
      %p685 = por %p683, %p684
      %p687 = scmp.ne.s32.totalorder %s672, %s686
      %p688 = scmp.eq.s32.totalorder %s85, 0
      %p689 = por %p687, %p688
      %s691 = sadd.s32 %s690, 1
      %p694 = scmp.eq.s32.totalorder %s79, 1
      %p695 = scmp.ne.s32.totalorder %s690, %s692
      %p696 = scmp.eq.s32.totalorder %s79, 0
      %p697 = por %p695, %p696
      %p698 = scmp.ne.s32.totalorder %s690, %s692
      %p699 = scmp.eq.s32.totalorder %s84, 1
      %p700 = por %p698, %p699
      %p701 = scmp.ne.s32.totalorder %s692, %s693
      %p702 = scmp.eq.s32.totalorder %s84, 0
      %p703 = por %p701, %p702
      %p704 = scmp.ne.s32.totalorder %s692, %s693
      %p705 = scmp.eq.s32.totalorder %s85, 1
      %p706 = por %p704, %p705
      %p708 = scmp.ne.s32.totalorder %s693, %s707
      %p709 = scmp.eq.s32.totalorder %s85, 0
      %p710 = por %p708, %p709
      %s712 = sadd.s32 %s711, 1
      %p715 = scmp.eq.s32.totalorder %s79, 1
      %p716 = scmp.ne.s32.totalorder %s711, %s713
      %p717 = scmp.eq.s32.totalorder %s79, 0
      %p718 = por %p716, %p717
      %p719 = scmp.ne.s32.totalorder %s711, %s713
      %p720 = scmp.eq.s32.totalorder %s84, 1
      %p721 = por %p719, %p720
      %p722 = scmp.ne.s32.totalorder %s713, %s714
      %p723 = scmp.eq.s32.totalorder %s84, 0
      %p724 = por %p722, %p723
      %p725 = scmp.ne.s32.totalorder %s713, %s714
      %p726 = scmp.eq.s32.totalorder %s85, 1
      %p727 = por %p725, %p726
      %p729 = scmp.ne.s32.totalorder %s714, %s728
      %p730 = scmp.eq.s32.totalorder %s85, 0
      %p731 = por %p729, %p730
      %s733 = sadd.s32 %s732, 1
      %p736 = scmp.eq.s32.totalorder %s79, 1
      %p737 = scmp.ne.s32.totalorder %s732, %s734
      %p738 = scmp.eq.s32.totalorder %s79, 0
      %p739 = por %p737, %p738
      %p740 = scmp.ne.s32.totalorder %s732, %s734
      %p741 = scmp.eq.s32.totalorder %s84, 1
      %p742 = por %p740, %p741
      %p743 = scmp.ne.s32.totalorder %s734, %s735
      %p744 = scmp.eq.s32.totalorder %s84, 0
      %p745 = por %p743, %p744
      %p746 = scmp.ne.s32.totalorder %s734, %s735
      %p747 = scmp.eq.s32.totalorder %s85, 1
      %p748 = por %p746, %p747
      %p750 = scmp.ne.s32.totalorder %s735, %s749
      %p751 = scmp.eq.s32.totalorder %s85, 0
      %p752 = por %p750, %p751
      %s754 = sadd.s32 %s753, 1
      %p757 = scmp.eq.s32.totalorder %s79, 1
      %p758 = scmp.ne.s32.totalorder %s753, %s755
      %p759 = scmp.eq.s32.totalorder %s79, 0
      %p760 = por %p758, %p759
      %p761 = scmp.ne.s32.totalorder %s753, %s755
      %p762 = scmp.eq.s32.totalorder %s84, 1
      %p763 = por %p761, %p762
      %p764 = scmp.ne.s32.totalorder %s755, %s756
      %p765 = scmp.eq.s32.totalorder %s84, 0
      %p766 = por %p764, %p765
      %p767 = scmp.ne.s32.totalorder %s755, %s756
      %p768 = scmp.eq.s32.totalorder %s85, 1
      %p769 = por %p767, %p768
      %p771 = scmp.ne.s32.totalorder %s756, %s770
      %p772 = scmp.eq.s32.totalorder %s85, 0
      %p773 = por %p771, %p772
      %s775 = sadd.s32 %s774, 1
      %p778 = scmp.eq.s32.totalorder %s79, 1
      %p779 = scmp.ne.s32.totalorder %s774, %s776
      %p780 = scmp.eq.s32.totalorder %s79, 0
      %p781 = por %p779, %p780
      %p782 = scmp.ne.s32.totalorder %s774, %s776
      %p783 = scmp.eq.s32.totalorder %s84, 1
      %p784 = por %p782, %p783
      %p785 = scmp.ne.s32.totalorder %s776, %s777
      %p786 = scmp.eq.s32.totalorder %s84, 0
      %p787 = por %p785, %p786
      %p788 = scmp.ne.s32.totalorder %s776, %s777
      %p789 = scmp.eq.s32.totalorder %s85, 1
      %p790 = por %p788, %p789
      %p792 = scmp.ne.s32.totalorder %s777, %s791
      %p793 = scmp.eq.s32.totalorder %s85, 0
      %p794 = por %p792, %p793
      %s796 = sadd.s32 %s795, 1
      %p799 = scmp.eq.s32.totalorder %s79, 1
      %p800 = scmp.ne.s32.totalorder %s795, %s797
      %p801 = scmp.eq.s32.totalorder %s79, 0
      %p802 = por %p800, %p801
      %p803 = scmp.ne.s32.totalorder %s795, %s797
      %p804 = scmp.eq.s32.totalorder %s84, 1
      %p805 = por %p803, %p804
      %p806 = scmp.ne.s32.totalorder %s797, %s798
      %p807 = scmp.eq.s32.totalorder %s84, 0
      %p808 = por %p806, %p807
      %p809 = scmp.ne.s32.totalorder %s797, %s798
      %p810 = scmp.eq.s32.totalorder %s85, 1
      %p811 = por %p809, %p810
      %p813 = scmp.ne.s32.totalorder %s798, %s812
      %p814 = scmp.eq.s32.totalorder %s85, 0
      %p815 = por %p813, %p814
      %s816 = ssub.s32 %s79, %s86
      %p817 = scmp.eq.s32.totalorder %s816, 0
      %s819 = sadd.s32 %s818, 1
      %s820 = scalar_select %p817, %s818, %s819
      %p823 = pneg %p817
      %p824 = scmp.eq.s32.totalorder %s79, 1
      %p825 = por %p823, %p824
      %p826 = scmp.ne.s32.totalorder %s818, %s821
      %p827 = scmp.eq.s32.totalorder %s79, 0
      %p828 = por %p826, %p827
      %p829 = scmp.ne.s32.totalorder %s818, %s821
      %p830 = scmp.eq.s32.totalorder %s84, 1
      %p831 = por %p829, %p830
      %p832 = scmp.ne.s32.totalorder %s821, %s822
      %p833 = scmp.eq.s32.totalorder %s84, 0
      %p834 = por %p832, %p833
      %p835 = scmp.ne.s32.totalorder %s821, %s822
      %p836 = scmp.eq.s32.totalorder %s85, 1
      %p837 = por %p835, %p836
      %p839 = scmp.ne.s32.totalorder %s822, %s838
      %p840 = scmp.eq.s32.totalorder %s85, 0
      %p841 = por %p839, %p840
      %p842 = scmp.le.s32.totalorder 1, %s79
      %p843 = scmp.lt.s32.totalorder %s79, 3
      %p844 = pnand %p842, %p843
      %p845 = pneg %p844
      // Predicated region
      $region9: #{residual_attention_block_forward.1} parent=5 // pred_check
        _
      $region10: #{residual_attention_block_forward.1} parent=5 // pred_check_branch
        %847 = sbr.rel (%p844) target = $region12
      $region11: #{residual_attention_block_forward.1} parent=5 // pred_region
        %s848 = ssub.s32 %s79, 1
        // Predicated region
        $region13: #{residual_attention_block_forward.1} parent=11 // pred_check
          %p849 = pneg %p178
        $region14: #{residual_attention_block_forward.1} parent=11 // pred_check_branch
          %851 = sbr.rel (%p849) target = $region16
        $region15: #{residual_attention_block_forward.1} parent=11 // pred_region
          _
        $region16: #{residual_attention_block_forward.1} parent=11 // pred_fallthru
          _
        // Predicated region
        $region17: #{residual_attention_block_forward.1} parent=11 // pred_check
          %p852 = pneg %p199
        $region18: #{residual_attention_block_forward.1} parent=11 // pred_check_branch
          %854 = sbr.rel (%p852) target = $region20
        $region19: #{residual_attention_block_forward.1} parent=11 // pred_region
          _
        $region20: #{residual_attention_block_forward.1} parent=11 // pred_fallthru
          _
        // Predicated region
        $region21: #{residual_attention_block_forward.1} parent=11 // pred_check
          %p855 = pneg %p220
        $region22: #{residual_attention_block_forward.1} parent=11 // pred_check_branch
          %857 = sbr.rel (%p855) target = $region24
        $region23: #{residual_attention_block_forward.1} parent=11 // pred_region
          _
        $region24: #{residual_attention_block_forward.1} parent=11 // pred_fallthru
          _
        // Predicated region
        $region25: #{residual_attention_block_forward.1} parent=11 // pred_check
          %p858 = pneg %p241
        $region26: #{residual_attention_block_forward.1} parent=11 // pred_check_branch
          %860 = sbr.rel (%p858) target = $region28
        $region27: #{residual_attention_block_forward.1} parent=11 // pred_region
          _
        $region28: #{residual_attention_block_forward.1} parent=11 // pred_fallthru
          _
        // Predicated region
        $region29: #{residual_attention_block_forward.1} parent=11 // pred_check
          %p861 = pneg %p262
        $region30: #{residual_attention_block_forward.1} parent=11 // pred_check_branch
          %863 = sbr.rel (%p861) target = $region32
        $region31: #{residual_attention_block_forward.1} parent=11 // pred_region
          _
        $region32: #{residual_attention_block_forward.1} parent=11 // pred_fallthru
          _
        // Predicated region
        $region33: #{residual_attention_block_forward.1} parent=11 // pred_check
          %p864 = pneg %p283
        $region34: #{residual_attention_block_forward.1} parent=11 // pred_check_branch
          %866 = sbr.rel (%p864) target = $region36
        $region35: #{residual_attention_block_forward.1} parent=11 // pred_region
          _
        $region36: #{residual_attention_block_forward.1} parent=11 // pred_fallthru
          _
        // Predicated region
        $region37: #{residual_attention_block_forward.1} parent=11 // pred_check
          %p867 = pneg %p304
        $region38: #{residual_attention_block_forward.1} parent=11 // pred_check_branch
          %869 = sbr.rel (%p867) target = $region40
        $region39: #{residual_attention_block_forward.1} parent=11 // pred_region
          _
        $region40: #{residual_attention_block_forward.1} parent=11 // pred_fallthru
          _
        // Predicated region
        $region41: #{residual_attention_block_forward.1} parent=11 // pred_check
          %p870 = pneg %p325
        $region42: #{residual_attention_block_forward.1} parent=11 // pred_check_branch
          %872 = sbr.rel (%p870) target = $region44
        $region43: #{residual_attention_block_forward.1} parent=11 // pred_region
          %s874 = ssub.s32 6144, 6144
          %875 = vsyncadd [#allocation3], %s874
          %s876 = sshll.u32 [#allocation2], 4
          %s877 = int_to_ptr.vmem [resolvable:$true] %s876
          %882 = dma.hbm_to_vmem [thread:$0]  %s21, 6144, %s877, [#allocation3], 384, 384, 24
        $region44: #{residual_attention_block_forward.1} parent=11 // pred_fallthru
          _
        // Predicated region
        $region45: #{residual_attention_block_forward.1} parent=11 // pred_check
          %p883 = pneg %p346
        $region46: #{residual_attention_block_forward.1} parent=11 // pred_check_branch
          %885 = sbr.rel (%p883) target = $region48
        $region47: #{residual_attention_block_forward.1} parent=11 // pred_region
          _
        $region48: #{residual_attention_block_forward.1} parent=11 // pred_fallthru
          _
        // Predicated region
        $region49: #{residual_attention_block_forward.1} parent=11 // pred_check
          %p886 = pneg %p367
        $region50: #{residual_attention_block_forward.1} parent=11 // pred_check_branch
          %888 = sbr.rel (%p886) target = $region52
        $region51: #{residual_attention_block_forward.1} parent=11 // pred_region
          %s890 = ssub.s32 2048, 2048
          %891 = vsyncadd [#allocation5], %s890
          %s892 = sshll.u32 [#allocation4], 4
          %s893 = int_to_ptr.vmem [resolvable:$true] %s892
          %898 = dma.hbm_to_vmem [thread:$0]  %s25, 2048, %s893, [#allocation5], 128, 128, 8
        $region52: #{residual_attention_block_forward.1} parent=11 // pred_fallthru
          _
        // Predicated region
        $region53: #{residual_attention_block_forward.1} parent=11 // pred_check
          %p899 = pneg %p388
        $region54: #{residual_attention_block_forward.1} parent=11 // pred_check_branch
          %901 = sbr.rel (%p899) target = $region56
        $region55: #{residual_attention_block_forward.1} parent=11 // pred_region
          _
        $region56: #{residual_attention_block_forward.1} parent=11 // pred_fallthru
          _
        // Predicated region
        $region57: #{residual_attention_block_forward.1} parent=11 // pred_check
          %p902 = pneg %p409
        $region58: #{residual_attention_block_forward.1} parent=11 // pred_check_branch
          %904 = sbr.rel (%p902) target = $region60
        $region59: #{residual_attention_block_forward.1} parent=11 // pred_region
          _
        $region60: #{residual_attention_block_forward.1} parent=11 // pred_fallthru
          _
        // Predicated region
        $region61: #{residual_attention_block_forward.1} parent=11 // pred_check
          %p905 = pneg %p430
        $region62: #{residual_attention_block_forward.1} parent=11 // pred_check_branch
          %907 = sbr.rel (%p905) target = $region64
        $region63: #{residual_attention_block_forward.1} parent=11 // pred_region
          _
        $region64: #{residual_attention_block_forward.1} parent=11 // pred_fallthru
          _
        // Predicated region
        $region65: #{residual_attention_block_forward.1} parent=11 // pred_check
          %p908 = pneg %p451
        $region66: #{residual_attention_block_forward.1} parent=11 // pred_check_branch
          %910 = sbr.rel (%p908) target = $region68
        $region67: #{residual_attention_block_forward.1} parent=11 // pred_region
          _
        $region68: #{residual_attention_block_forward.1} parent=11 // pred_fallthru
          _
        // Predicated region
        $region69: #{residual_attention_block_forward.1} parent=11 // pred_check
          %p911 = pneg %p472
        $region70: #{residual_attention_block_forward.1} parent=11 // pred_check_branch
          %913 = sbr.rel (%p911) target = $region72
        $region71: #{residual_attention_block_forward.1} parent=11 // pred_region
          _
        $region72: #{residual_attention_block_forward.1} parent=11 // pred_fallthru
          _
        // Predicated region
        $region73: #{residual_attention_block_forward.1} parent=11 // pred_check
          %p914 = pneg %p493
        $region74: #{residual_attention_block_forward.1} parent=11 // pred_check_branch
          %916 = sbr.rel (%p914) target = $region76
        $region75: #{residual_attention_block_forward.1} parent=11 // pred_region
          %s918 = ssub.s32 8192, 8192
          %919 = vsyncadd [#allocation5], %s918
          %s920 = sshll.u32 [#allocation6], 4
          %s921 = int_to_ptr.vmem [resolvable:$true] %s920
          %926 = dma.hbm_to_vmem [thread:$0]  %s37, 8192, %s921, [#allocation5], 128, 128, 8
        $region76: #{residual_attention_block_forward.1} parent=11 // pred_fallthru
          _
        // Predicated region
        $region77: #{residual_attention_block_forward.1} parent=11 // pred_check
          %p927 = pneg %p514
        $region78: #{residual_attention_block_forward.1} parent=11 // pred_check_branch
          %929 = sbr.rel (%p927) target = $region80
        $region79: #{residual_attention_block_forward.1} parent=11 // pred_region
          _
        $region80: #{residual_attention_block_forward.1} parent=11 // pred_fallthru
          _
        // Predicated region
        $region81: #{residual_attention_block_forward.1} parent=11 // pred_check
          %p930 = pneg %p535
        $region82: #{residual_attention_block_forward.1} parent=11 // pred_check_branch
          %932 = sbr.rel (%p930) target = $region84
        $region83: #{residual_attention_block_forward.1} parent=11 // pred_region
          %s934 = ssub.s32 1024, 1024
          %935 = vsyncadd [#allocation8], %s934
          %s936 = sshll.u32 [#allocation7], 4
          %s937 = int_to_ptr.vmem [resolvable:$true] %s936
          %942 = dma.hbm_to_vmem [thread:$0]  %s41, 1024, %s937, [#allocation8], 128, 128, 8
        $region84: #{residual_attention_block_forward.1} parent=11 // pred_fallthru
          _
        // Predicated region
        $region85: #{residual_attention_block_forward.1} parent=11 // pred_check
          %p943 = pneg %p556
        $region86: #{residual_attention_block_forward.1} parent=11 // pred_check_branch
          %945 = sbr.rel (%p943) target = $region88
        $region87: #{residual_attention_block_forward.1} parent=11 // pred_region
          _
        $region88: #{residual_attention_block_forward.1} parent=11 // pred_fallthru
          _
        // Predicated region
        $region89: #{residual_attention_block_forward.1} parent=11 // pred_check
          %p946 = pneg %p577
        $region90: #{residual_attention_block_forward.1} parent=11 // pred_check_branch
          %948 = sbr.rel (%p946) target = $region92
        $region91: #{residual_attention_block_forward.1} parent=11 // pred_region
          %s950 = ssub.s32 1024, 1024
          %951 = vsyncadd [#allocation8], %s950
          %s952 = sshll.u32 [#allocation9], 4
          %s953 = int_to_ptr.vmem [resolvable:$true] %s952
          %958 = dma.hbm_to_vmem [thread:$0]  %s45, 1024, %s953, [#allocation8], 128, 128, 8
        $region92: #{residual_attention_block_forward.1} parent=11 // pred_fallthru
          _
        // Predicated region
        $region93: #{residual_attention_block_forward.1} parent=11 // pred_check
          %p959 = pneg %p598
        $region94: #{residual_attention_block_forward.1} parent=11 // pred_check_branch
          %961 = sbr.rel (%p959) target = $region96
        $region95: #{residual_attention_block_forward.1} parent=11 // pred_region
          _
        $region96: #{residual_attention_block_forward.1} parent=11 // pred_fallthru
          _
        // Predicated region
        $region97: #{residual_attention_block_forward.1} parent=11 // pred_check
          %p962 = pneg %p619
        $region98: #{residual_attention_block_forward.1} parent=11 // pred_check_branch
          %964 = sbr.rel (%p962) target = $region100
        $region99: #{residual_attention_block_forward.1} parent=11 // pred_region
          %s966 = ssub.s32 1024, 1024
          %967 = vsyncadd [#allocation11], %s966
          %s968 = sshll.u32 [#allocation10], 4
          %s969 = int_to_ptr.vmem [resolvable:$true] %s968
          %974 = dma.hbm_to_vmem [thread:$0]  %s49, 1024, %s969, [#allocation11], 128, 128, 8
        $region100: #{residual_attention_block_forward.1} parent=11 // pred_fallthru
          _
        // Predicated region
        $region101: #{residual_attention_block_forward.1} parent=11 // pred_check
          %p975 = pneg %p640
        $region102: #{residual_attention_block_forward.1} parent=11 // pred_check_branch
          %977 = sbr.rel (%p975) target = $region104
        $region103: #{residual_attention_block_forward.1} parent=11 // pred_region
          _
        $region104: #{residual_attention_block_forward.1} parent=11 // pred_fallthru
          _
        // Predicated region
        $region105: #{residual_attention_block_forward.1} parent=11 // pred_check
          %p978 = pneg %p661
        $region106: #{residual_attention_block_forward.1} parent=11 // pred_check_branch
          %980 = sbr.rel (%p978) target = $region108
        $region107: #{residual_attention_block_forward.1} parent=11 // pred_region
          %s982 = ssub.s32 1024, 1024
          %983 = vsyncadd [#allocation11], %s982
          %s984 = sshll.u32 [#allocation12], 4
          %s985 = int_to_ptr.vmem [resolvable:$true] %s984
          %990 = dma.hbm_to_vmem [thread:$0]  %s53, 1024, %s985, [#allocation11], 128, 128, 8
        $region108: #{residual_attention_block_forward.1} parent=11 // pred_fallthru
          _
        // Predicated region
        $region109: #{residual_attention_block_forward.1} parent=11 // pred_check
          %p991 = pneg %p682
        $region110: #{residual_attention_block_forward.1} parent=11 // pred_check_branch
          %993 = sbr.rel (%p991) target = $region112
        $region111: #{residual_attention_block_forward.1} parent=11 // pred_region
          _
        $region112: #{residual_attention_block_forward.1} parent=11 // pred_fallthru
          _
        // Predicated region
        $region113: #{residual_attention_block_forward.1} parent=11 // pred_check
          %p994 = pneg %p703
        $region114: #{residual_attention_block_forward.1} parent=11 // pred_check_branch
          %996 = sbr.rel (%p994) target = $region116
        $region115: #{residual_attention_block_forward.1} parent=11 // pred_region
          _
        $region116: #{residual_attention_block_forward.1} parent=11 // pred_fallthru
          _
        // Predicated region
        $region117: #{residual_attention_block_forward.1} parent=11 // pred_check
          %p997 = pneg %p724
        $region118: #{residual_attention_block_forward.1} parent=11 // pred_check_branch
          %999 = sbr.rel (%p997) target = $region120
        $region119: #{residual_attention_block_forward.1} parent=11 // pred_region
          _
        $region120: #{residual_attention_block_forward.1} parent=11 // pred_fallthru
          _
        // Predicated region
        $region121: #{residual_attention_block_forward.1} parent=11 // pred_check
          %p1000 = pneg %p745
        $region122: #{residual_attention_block_forward.1} parent=11 // pred_check_branch
          %1002 = sbr.rel (%p1000) target = $region124
        $region123: #{residual_attention_block_forward.1} parent=11 // pred_region
          _
        $region124: #{residual_attention_block_forward.1} parent=11 // pred_fallthru
          _
        // Predicated region
        $region125: #{residual_attention_block_forward.1} parent=11 // pred_check
          %p1003 = pneg %p766
        $region126: #{residual_attention_block_forward.1} parent=11 // pred_check_branch
          %1005 = sbr.rel (%p1003) target = $region128
        $region127: #{residual_attention_block_forward.1} parent=11 // pred_region
          _
        $region128: #{residual_attention_block_forward.1} parent=11 // pred_fallthru
          _
        // Predicated region
        $region129: #{residual_attention_block_forward.1} parent=11 // pred_check
          %p1006 = pneg %p787
        $region130: #{residual_attention_block_forward.1} parent=11 // pred_check_branch
          %1008 = sbr.rel (%p1006) target = $region132
        $region131: #{residual_attention_block_forward.1} parent=11 // pred_region
          _
        $region132: #{residual_attention_block_forward.1} parent=11 // pred_fallthru
          _
        // Predicated region
        $region133: #{residual_attention_block_forward.1} parent=11 // pred_check
          %p1009 = pneg %p808
        $region134: #{residual_attention_block_forward.1} parent=11 // pred_check_branch
          %1011 = sbr.rel (%p1009) target = $region136
        $region135: #{residual_attention_block_forward.1} parent=11 // pred_region
          _
        $region136: #{residual_attention_block_forward.1} parent=11 // pred_fallthru
          _
      $region12: #{residual_attention_block_forward.1} parent=5 // pred_fallthru
        _
      %p1012 = scmp.lt.s32.totalorder %s79, 2
      // Predicated region
      $region137: #{residual_attention_block_forward.1} parent=5 // pred_check
        %p1013 = pneg %p1012
      $region138: #{residual_attention_block_forward.1} parent=5 // pred_check_branch
        %1015 = sbr.rel (%p1013) target = $region140
      $region139: #{residual_attention_block_forward.1} parent=5 // pred_region
        // Predicated region
        $region141: #{residual_attention_block_forward.1} parent=139 // pred_check
          %p1016 = pneg %p99
        $region142: #{residual_attention_block_forward.1} parent=139 // pred_check_branch
          %1018 = sbr.rel (%p1016) target = $region144
        $region143: #{residual_attention_block_forward.1} parent=139 // pred_region
          %p1019 = scmp.lt.s32.totalorder %s79, 1
          %s1020 = scalar_select %p1019, %s79, 1
          %s1021 = smul.addr %s1020, 8
          %s1022 = scalar_lea.vmem %s1, %s1021
        $region144: #{residual_attention_block_forward.1} parent=139 // pred_fallthru
          _
        // Predicated region
        $region145: #{residual_attention_block_forward.1} parent=139 // pred_check
          %p1023 = pneg %p125
        $region146: #{residual_attention_block_forward.1} parent=139 // pred_check_branch
          %1025 = sbr.rel (%p1023) target = $region148
        $region147: #{residual_attention_block_forward.1} parent=139 // pred_region
          %p1026 = scmp.lt.s32.totalorder %s79, 1
          %s1027 = scalar_select %p1026, %s79, 1
          %s1028 = smul.addr %s1027, 8
          %s1029 = scalar_lea.vmem %s3, %s1028
        $region148: #{residual_attention_block_forward.1} parent=139 // pred_fallthru
          _
        // Predicated region
        $region149: #{residual_attention_block_forward.1} parent=139 // pred_check
          %p1030 = pneg %p151
        $region150: #{residual_attention_block_forward.1} parent=139 // pred_check_branch
          %1032 = sbr.rel (%p1030) target = $region152
        $region151: #{residual_attention_block_forward.1} parent=139 // pred_region
          %p1033 = scmp.lt.s32.totalorder %s79, 1
          %s1034 = scalar_select %p1033, %s79, 1
          %s1035 = scalar_lea.vmem %s5, %s1034
        $region152: #{residual_attention_block_forward.1} parent=139 // pred_fallthru
          _
      $region140: #{residual_attention_block_forward.1} parent=5 // pred_fallthru
        _
      %p1036 = scmp.le.s32.totalorder 1, %s79
      %p1037 = scmp.lt.s32.totalorder %s79, 3
      %p1038 = pnand %p1036, %p1037
      %p1039 = pneg %p1038
      // Predicated region
      $region153: #{residual_attention_block_forward.1} parent=5 // pred_check
        _
      $region154: #{residual_attention_block_forward.1} parent=5 // pred_check_branch
        %1041 = sbr.rel (%p1038) target = $region156
      $region155: #{residual_attention_block_forward.1} parent=5 // pred_region
        %s1042 = ssub.s32 %s79, 1
        // Predicated region
        $region157: #{residual_attention_block_forward.1} parent=155 // pred_check
          %p1043 = pneg %p325
        $region158: #{residual_attention_block_forward.1} parent=155 // pred_check_branch
          %1045 = sbr.rel (%p1043) target = $region160
        $region159: #{residual_attention_block_forward.1} parent=155 // pred_region
          %1046 = dma.done [#allocation3], 6144
        $region160: #{residual_attention_block_forward.1} parent=155 // pred_fallthru
          _
        // Predicated region
        $region161: #{residual_attention_block_forward.1} parent=155 // pred_check
          %p1047 = pneg %p367
        $region162: #{residual_attention_block_forward.1} parent=155 // pred_check_branch
          %1049 = sbr.rel (%p1047) target = $region164
        $region163: #{residual_attention_block_forward.1} parent=155 // pred_region
          %1050 = dma.done [#allocation5], 2048
        $region164: #{residual_attention_block_forward.1} parent=155 // pred_fallthru
          _
        // Predicated region
        $region165: #{residual_attention_block_forward.1} parent=155 // pred_check
          %p1051 = pneg %p493
        $region166: #{residual_attention_block_forward.1} parent=155 // pred_check_branch
          %1053 = sbr.rel (%p1051) target = $region168
        $region167: #{residual_attention_block_forward.1} parent=155 // pred_region
          %1054 = dma.done [#allocation5], 8192
        $region168: #{residual_attention_block_forward.1} parent=155 // pred_fallthru
          _
        // Predicated region
        $region169: #{residual_attention_block_forward.1} parent=155 // pred_check
          %p1055 = pneg %p535
        $region170: #{residual_attention_block_forward.1} parent=155 // pred_check_branch
          %1057 = sbr.rel (%p1055) target = $region172
        $region171: #{residual_attention_block_forward.1} parent=155 // pred_region
          %1058 = dma.done [#allocation8], 1024
        $region172: #{residual_attention_block_forward.1} parent=155 // pred_fallthru
          _
        // Predicated region
        $region173: #{residual_attention_block_forward.1} parent=155 // pred_check
          %p1059 = pneg %p577
        $region174: #{residual_attention_block_forward.1} parent=155 // pred_check_branch
          %1061 = sbr.rel (%p1059) target = $region176
        $region175: #{residual_attention_block_forward.1} parent=155 // pred_region
          %1062 = dma.done [#allocation8], 1024
        $region176: #{residual_attention_block_forward.1} parent=155 // pred_fallthru
          _
        // Predicated region
        $region177: #{residual_attention_block_forward.1} parent=155 // pred_check
          %p1063 = pneg %p619
        $region178: #{residual_attention_block_forward.1} parent=155 // pred_check_branch
          %1065 = sbr.rel (%p1063) target = $region180
        $region179: #{residual_attention_block_forward.1} parent=155 // pred_region
          %1066 = dma.done [#allocation11], 1024
        $region180: #{residual_attention_block_forward.1} parent=155 // pred_fallthru
          _
        // Predicated region
        $region181: #{residual_attention_block_forward.1} parent=155 // pred_check
          %p1067 = pneg %p661
        $region182: #{residual_attention_block_forward.1} parent=155 // pred_check_branch
          %1069 = sbr.rel (%p1067) target = $region184
        $region183: #{residual_attention_block_forward.1} parent=155 // pred_region
          %1070 = dma.done [#allocation11], 1024
        $region184: #{residual_attention_block_forward.1} parent=155 // pred_fallthru
          _
        %p1071 = scmp.lt.s32.totalorder %s84, 1
        %s1072 = scalar_select %p1071, %s84, 1
        %s1073 = smul.addr %s1072, 8
        %s1074 = scalar_lea.vmem %s1, %s1073
        %p1075 = pneg %p105
        %p1076 = pneg %p102
        %p1077 = scmp.lt.s32.totalorder %s84, 1
        %s1078 = scalar_select %p1077, %s84, 1
        %s1079 = smul.addr %s1078, 8
        %s1080 = scalar_lea.vmem %s3, %s1079
        %p1081 = pneg %p131
        %p1082 = pneg %p128
        %p1083 = scmp.lt.s32.totalorder %s84, 1
        %s1084 = scalar_select %p1083, %s84, 1
        %s1085 = scalar_lea.vmem %s5, %s1084
        %p1086 = pneg %p157
        %p1087 = pneg %p154
        %p1088 = pneg %p178
        %p1089 = pneg %p175
        %p1090 = pneg %p199
        %p1091 = pneg %p196
        %p1092 = pneg %p220
        %p1093 = pneg %p217
        %p1094 = pneg %p241
        %p1095 = pneg %p238
        %p1096 = pneg %p262
        %p1097 = pneg %p259
        %p1098 = pneg %p283
        %p1099 = pneg %p280
        %p1100 = pneg %p304
        %p1101 = pneg %p301
        %p1102 = pneg %p325
        %p1103 = pneg %p322
        %p1104 = pneg %p346
        %p1105 = pneg %p343
        %p1106 = pneg %p367
        %p1107 = pneg %p364
        %p1108 = pneg %p388
        %p1109 = pneg %p385
        %p1110 = pneg %p409
        %p1111 = pneg %p406
        %p1112 = pneg %p430
        %p1113 = pneg %p427
        %p1114 = pneg %p451
        %p1115 = pneg %p448
        %p1116 = pneg %p472
        %p1117 = pneg %p469
        %p1118 = pneg %p493
        %p1119 = pneg %p490
        %p1120 = pneg %p514
        %p1121 = pneg %p511
        %p1122 = pneg %p535
        %p1123 = pneg %p532
        %p1124 = pneg %p556
        %p1125 = pneg %p553
        %p1126 = pneg %p577
        %p1127 = pneg %p574
        %p1128 = pneg %p598
        %p1129 = pneg %p595
        %p1130 = pneg %p619
        %p1131 = pneg %p616
        %p1132 = pneg %p640
        %p1133 = pneg %p637
        %p1134 = pneg %p661
        %p1135 = pneg %p658
        %p1136 = pneg %p682
        %p1137 = pneg %p679
        %p1138 = pneg %p703
        %p1139 = pneg %p700
        %p1140 = pneg %p724
        %p1141 = pneg %p721
        %p1142 = pneg %p745
        %p1143 = pneg %p742
        %p1144 = pneg %p766
        %p1145 = pneg %p763
        %p1146 = pneg %p787
        %p1147 = pneg %p784
        %p1148 = pneg %p808
        %p1149 = pneg %p805
        %p1150 = pneg %p834
        %p1151 = pneg %p831
        %p1152 = scmp.lt.s32.totalorder %s84, 1
        %s1153 = scalar_select %p1152, %s84, 1
        %s1154 = smul.addr %s1153, 8
        %s1155 = scalar_lea.vmem %s69, %s1154
        %p1156 = scmp.lt.s32.totalorder %s84, 1
        %s1157 = scalar_select %p1156, %s84, 1
        %s1158 = smul.addr %s1157, 8
        %s1159 = scalar_lea.vmem %s1, %s1158
        %p1160 = scmp.lt.s32.totalorder %s84, 1
        %s1161 = scalar_select %p1160, %s84, 1
        %s1162 = smul.addr %s1161, 8
        %s1163 = scalar_lea.vmem %s3, %s1162
        %p1164 = scmp.lt.s32.totalorder %s84, 1
        %s1165 = scalar_select %p1164, %s84, 1
        %s1166 = scalar_lea.vmem %s5, %s1165
        %p1167 = scmp.lt.s32.totalorder %s84, 1
        %s1168 = scalar_select %p1167, %s84, 1
        %s1169 = smul.addr %s1168, 8
        %s1170 = scalar_lea.vmem %s69, %s1169
        %v1171 = vld [vmem:[%s1159] sm:$0xff]
        %v1172 = vld [vmem:[%s1163] sm:$0xff]
        %v1173 = vld [vmem:[%s1166] sm:$0x1]
        %vm1174 = vcmp.gt.s32.totalorder %v1173, 0
        %v1175 = vsel %vm1174, -1e+30, 0.0
        %v1176 = vld [vmem:[%s7] sm:$0xff]
        %v1177 = vld [vmem:[%s7 + $0x8] sm:$0xff]
        %v1178 = vld [vmem:[%s7 + $0x10] sm:$0xff]
        %v1179 = vld [vmem:[%s7 + $0x18] sm:$0xff]
        %v1180 = vld [vmem:[%s7 + $0x20] sm:$0xff]
        %v1181 = vld [vmem:[%s7 + $0x28] sm:$0xff]
        %v1182 = vld [vmem:[%s7 + $0x30] sm:$0xff]
        %v1183 = vld [vmem:[%s7 + $0x38] sm:$0xff]
        %v1184 = vld [vmem:[%s7 + $0x40] sm:$0xff]
        %v1185 = vld [vmem:[%s7 + $0x48] sm:$0xff]
        %v1186 = vld [vmem:[%s7 + $0x50] sm:$0xff]
        %v1187 = vld [vmem:[%s7 + $0x58] sm:$0xff]
        %v1188 = vld [vmem:[%s7 + $0x60] sm:$0xff]
        %v1189 = vld [vmem:[%s7 + $0x68] sm:$0xff]
        %v1190 = vld [vmem:[%s7 + $0x70] sm:$0xff]
        %v1191 = vld [vmem:[%s7 + $0x78] sm:$0xff]
        %v1192 = vld [vmem:[%s9] sm:$0x1]
        %v1194 = vlaneseq
        %v1195 = vshrl.u32 %v1194, 7
        %v1196 = vsub.s32 0, %v1195
        %v1197 = vrot.slane %v1192, %v1196
        %1199 = vmatprep.subr.mxu0 0.0
        %1200 = vmatpush1.msra.mxu0 %v1176
        %1201 = vmatprep.subr.mxu0 0.0
        %1202 = vmatpush1.msra.mxu0 %v1177
        %1203 = vmatprep.subr.mxu0 0.0
        %1204 = vmatpush1.msra.mxu0 %v1178
        %1205 = vmatprep.subr.mxu0 0.0
        %1206 = vmatpush1.msra.mxu0 %v1179
        %1207 = vmatprep.subr.mxu0 0.0
        %1208 = vmatpush1.msra.mxu0 %v1180
        %1209 = vmatprep.subr.mxu0 0.0
        %1210 = vmatpush1.msra.mxu0 %v1181
        %1211 = vmatprep.subr.mxu0 0.0
        %1212 = vmatpush1.msra.mxu0 %v1182
        %1213 = vmatprep.subr.mxu0 0.0
        %1214 = vmatpush1.msra.mxu0 %v1183
        %1215 = vmatprep.subr.mxu0 0.0
        %1216 = vmatpush1.msra.mxu0 %v1184
        %1217 = vmatprep.subr.mxu0 0.0
        %1218 = vmatpush1.msra.mxu0 %v1185
        %1219 = vmatprep.subr.mxu0 0.0
        %1220 = vmatpush1.msra.mxu0 %v1186
        %1221 = vmatprep.subr.mxu0 0.0
        %1222 = vmatpush1.msra.mxu0 %v1187
        %1223 = vmatprep.subr.mxu0 0.0
        %1224 = vmatpush1.msra.mxu0 %v1188
        %1225 = vmatprep.subr.mxu0 0.0
        %1226 = vmatpush1.msra.mxu0 %v1189
        %1227 = vmatprep.subr.mxu0 0.0
        %1228 = vmatpush1.msra.mxu0 %v1190
        %1229 = vmatprep.subr.mxu0 0.0
        %1230 = vmatpush1.msra.mxu0 %v1191
        %1231 = vmatprep.subr.mxu0 0.0
        %1232 = vmatpush1.msra.mxu0 0.0
        %1233 = vmatprep.subr.mxu0 0.0
        %1234 = vmatpush1.msra.mxu0 0.0
        %1235 = vmatprep.subr.mxu0 0.0
        %1236 = vmatpush1.msra.mxu0 0.0
        %1237 = vmatprep.subr.mxu0 0.0
        %1238 = vmatpush1.msra.mxu0 0.0
        %1239 = vmatprep.subr.mxu0 0.0
        %1240 = vmatpush1.msra.mxu0 0.0
        %1241 = vmatprep.subr.mxu0 0.0
        %1242 = vmatpush1.msra.mxu0 0.0
        %1243 = vmatprep.subr.mxu0 0.0
        %1244 = vmatpush1.msra.mxu0 0.0
        %1245 = vmatprep.subr.mxu0 0.0
        %1246 = vmatpush1.msra.mxu0 0.0
        %1247 = vmatprep.subr.mxu0 0.0
        %1248 = vmatpush1.msra.mxu0 0.0
        %1249 = vmatprep.subr.mxu0 0.0
        %1250 = vmatpush1.msra.mxu0 0.0
        %1251 = vmatprep.subr.mxu0 0.0
        %1252 = vmatpush1.msra.mxu0 0.0
        %1253 = vmatprep.subr.mxu0 0.0
        %1254 = vmatpush1.msra.mxu0 0.0
        %1255 = vmatprep.subr.mxu0 0.0
        %1256 = vmatpush1.msra.mxu0 0.0
        %1257 = vmatprep.subr.mxu0 0.0
        %1258 = vmatpush1.msra.mxu0 0.0
        %1259 = vmatprep.subr.mxu0 0.0
        %1260 = vmatpush1.msra.mxu0 0.0
        %1261 = vmatprep.subr.mxu0 0.0
        %1262 = vmatpush1.msra.mxu0 0.0
        %1263 = vmatprep.mubr.f32.mxu0 0.0
        %1264 = vmatmul.mubr.f32.gmra.mrb[0].mxu0 %v1171
        %v1265 = vpop.f32.mrb[0].mxu0
        %v1266 = vadd.f32 %v1197, %v1265
        %v1267 = vpop.f32.mrb[0].mxu0
        %1268 = vdwg.mxu0
        %v1269 = vmax.f32 %v1266, 0.0
        %v1270 = vld [vmem:[#allocation7] sm:$0xff]
        %v1271 = vld [vmem:[#allocation7 + $0x8] sm:$0xff]
        %v1272 = vld [vmem:[#allocation7 + $0x10] sm:$0xff]
        %v1273 = vld [vmem:[#allocation7 + $0x18] sm:$0xff]
        %v1274 = vld [vmem:[#allocation7 + $0x20] sm:$0xff]
        %v1275 = vld [vmem:[#allocation7 + $0x28] sm:$0xff]
        %v1276 = vld [vmem:[#allocation7 + $0x30] sm:$0xff]
        %v1277 = vld [vmem:[#allocation7 + $0x38] sm:$0xff]
        %v1278 = vld [vmem:[%s43] sm:$0x1]
        %v1280 = vlaneseq
        %v1281 = vshrl.u32 %v1280, 7
        %v1282 = vsub.s32 0, %v1281
        %v1283 = vrot.slane %v1278, %v1282
        %vm1285 = vcmask 523264
        %v1287 = vsel %vm1285, %v1269, 0
        %1289 = vmatprep.subr.mxu0 0.0
        %1290 = vmatpush1.msra.mxu0 %v1270
        %1291 = vmatprep.subr.mxu0 0.0
        %1292 = vmatpush1.msra.mxu0 %v1271
        %1293 = vmatprep.subr.mxu0 0.0
        %1294 = vmatpush1.msra.mxu0 %v1272
        %1295 = vmatprep.subr.mxu0 0.0
        %1296 = vmatpush1.msra.mxu0 %v1273
        %1297 = vmatprep.subr.mxu0 0.0
        %1298 = vmatpush1.msra.mxu0 %v1274
        %1299 = vmatprep.subr.mxu0 0.0
        %1300 = vmatpush1.msra.mxu0 %v1275
        %1301 = vmatprep.subr.mxu0 0.0
        %1302 = vmatpush1.msra.mxu0 %v1276
        %1303 = vmatprep.subr.mxu0 0.0
        %1304 = vmatpush1.msra.mxu0 %v1277
        %1305 = vmatprep.subr.mxu0 0.0
        %1306 = vmatpush1.msra.mxu0 0.0
        %1307 = vmatprep.subr.mxu0 0.0
        %1308 = vmatpush1.msra.mxu0 0.0
        %1309 = vmatprep.subr.mxu0 0.0
        %1310 = vmatpush1.msra.mxu0 0.0
        %1311 = vmatprep.subr.mxu0 0.0
        %1312 = vmatpush1.msra.mxu0 0.0
        %1313 = vmatprep.subr.mxu0 0.0
        %1314 = vmatpush1.msra.mxu0 0.0
        %1315 = vmatprep.subr.mxu0 0.0
        %1316 = vmatpush1.msra.mxu0 0.0
        %1317 = vmatprep.subr.mxu0 0.0
        %1318 = vmatpush1.msra.mxu0 0.0
        %1319 = vmatprep.subr.mxu0 0.0
        %1320 = vmatpush1.msra.mxu0 0.0
        %1321 = vmatprep.subr.mxu0 0.0
        %1322 = vmatpush1.msra.mxu0 0.0
        %1323 = vmatprep.subr.mxu0 0.0
        %1324 = vmatpush1.msra.mxu0 0.0
        %1325 = vmatprep.subr.mxu0 0.0
        %1326 = vmatpush1.msra.mxu0 0.0
        %1327 = vmatprep.subr.mxu0 0.0
        %1328 = vmatpush1.msra.mxu0 0.0
        %1329 = vmatprep.subr.mxu0 0.0
        %1330 = vmatpush1.msra.mxu0 0.0
        %1331 = vmatprep.subr.mxu0 0.0
        %1332 = vmatpush1.msra.mxu0 0.0
        %1333 = vmatprep.subr.mxu0 0.0
        %1334 = vmatpush1.msra.mxu0 0.0
        %1335 = vmatprep.subr.mxu0 0.0
        %1336 = vmatpush1.msra.mxu0 0.0
        %1337 = vmatprep.subr.mxu0 0.0
        %1338 = vmatpush1.msra.mxu0 0.0
        %1339 = vmatprep.subr.mxu0 0.0
        %1340 = vmatpush1.msra.mxu0 0.0
        %1341 = vmatprep.subr.mxu0 0.0
        %1342 = vmatpush1.msra.mxu0 0.0
        %1343 = vmatprep.subr.mxu0 0.0
        %1344 = vmatpush1.msra.mxu0 0.0
        %1345 = vmatprep.subr.mxu0 0.0
        %1346 = vmatpush1.msra.mxu0 0.0
        %1347 = vmatprep.subr.mxu0 0.0
        %1348 = vmatpush1.msra.mxu0 0.0
        %1349 = vmatprep.subr.mxu0 0.0
        %1350 = vmatpush1.msra.mxu0 0.0
        %1351 = vmatprep.subr.mxu0 0.0
        %1352 = vmatpush1.msra.mxu0 0.0
        %1353 = vmatprep.mubr.f32.mxu0 0.0
        %1354 = vmatmul.mubr.f32.gmra.mrb[0].mxu0 %v1287
        %v1355 = vpop.f32.mrb[0].mxu0
        %v1356 = vadd.f32 %v1283, %v1355
        %v1357 = vpop.f32.mrb[0].mxu0
        %1358 = vdwg.mxu0
        %v1359 = vld [vmem:[#allocation9] sm:$0xff]
        %v1360 = vld [vmem:[#allocation9 + $0x8] sm:$0xff]
        %v1361 = vld [vmem:[#allocation9 + $0x10] sm:$0xff]
        %v1362 = vld [vmem:[#allocation9 + $0x18] sm:$0xff]
        %v1363 = vld [vmem:[#allocation9 + $0x20] sm:$0xff]
        %v1364 = vld [vmem:[#allocation9 + $0x28] sm:$0xff]
        %v1365 = vld [vmem:[#allocation9 + $0x30] sm:$0xff]
        %v1366 = vld [vmem:[#allocation9 + $0x38] sm:$0xff]
        %v1367 = vld [vmem:[%s47] sm:$0x1]
        %v1369 = vlaneseq
        %v1370 = vshrl.u32 %v1369, 7
        %v1371 = vsub.s32 0, %v1370
        %v1372 = vrot.slane %v1367, %v1371
        %v1375 = vsel %vm1285, %v1172, 0
        %1377 = vmatprep.subr.mxu0 0.0
        %1378 = vmatpush1.msra.mxu0 %v1359
        %1379 = vmatprep.subr.mxu0 0.0
        %1380 = vmatpush1.msra.mxu0 %v1360
        %1381 = vmatprep.subr.mxu0 0.0
        %1382 = vmatpush1.msra.mxu0 %v1361
        %1383 = vmatprep.subr.mxu0 0.0
        %1384 = vmatpush1.msra.mxu0 %v1362
        %1385 = vmatprep.subr.mxu0 0.0
        %1386 = vmatpush1.msra.mxu0 %v1363
        %1387 = vmatprep.subr.mxu0 0.0
        %1388 = vmatpush1.msra.mxu0 %v1364
        %1389 = vmatprep.subr.mxu0 0.0
        %1390 = vmatpush1.msra.mxu0 %v1365
        %1391 = vmatprep.subr.mxu0 0.0
        %1392 = vmatpush1.msra.mxu0 %v1366
        %1393 = vmatprep.subr.mxu0 0.0
        %1394 = vmatpush1.msra.mxu0 0.0
        %1395 = vmatprep.subr.mxu0 0.0
        %1396 = vmatpush1.msra.mxu0 0.0
        %1397 = vmatprep.subr.mxu0 0.0
        %1398 = vmatpush1.msra.mxu0 0.0
        %1399 = vmatprep.subr.mxu0 0.0
        %1400 = vmatpush1.msra.mxu0 0.0
        %1401 = vmatprep.subr.mxu0 0.0
        %1402 = vmatpush1.msra.mxu0 0.0
        %1403 = vmatprep.subr.mxu0 0.0
        %1404 = vmatpush1.msra.mxu0 0.0
        %1405 = vmatprep.subr.mxu0 0.0
        %1406 = vmatpush1.msra.mxu0 0.0
        %1407 = vmatprep.subr.mxu0 0.0
        %1408 = vmatpush1.msra.mxu0 0.0
        %1409 = vmatprep.subr.mxu0 0.0
        %1410 = vmatpush1.msra.mxu0 0.0
        %1411 = vmatprep.subr.mxu0 0.0
        %1412 = vmatpush1.msra.mxu0 0.0
        %1413 = vmatprep.subr.mxu0 0.0
        %1414 = vmatpush1.msra.mxu0 0.0
        %1415 = vmatprep.subr.mxu0 0.0
        %1416 = vmatpush1.msra.mxu0 0.0
        %1417 = vmatprep.subr.mxu0 0.0
        %1418 = vmatpush1.msra.mxu0 0.0
        %1419 = vmatprep.subr.mxu0 0.0
        %1420 = vmatpush1.msra.mxu0 0.0
        %1421 = vmatprep.subr.mxu0 0.0
        %1422 = vmatpush1.msra.mxu0 0.0
        %1423 = vmatprep.subr.mxu0 0.0
        %1424 = vmatpush1.msra.mxu0 0.0
        %1425 = vmatprep.subr.mxu0 0.0
        %1426 = vmatpush1.msra.mxu0 0.0
        %1427 = vmatprep.subr.mxu0 0.0
        %1428 = vmatpush1.msra.mxu0 0.0
        %1429 = vmatprep.subr.mxu0 0.0
        %1430 = vmatpush1.msra.mxu0 0.0
        %1431 = vmatprep.subr.mxu0 0.0
        %1432 = vmatpush1.msra.mxu0 0.0
        %1433 = vmatprep.subr.mxu0 0.0
        %1434 = vmatpush1.msra.mxu0 0.0
        %1435 = vmatprep.subr.mxu0 0.0
        %1436 = vmatpush1.msra.mxu0 0.0
        %1437 = vmatprep.subr.mxu0 0.0
        %1438 = vmatpush1.msra.mxu0 0.0
        %1439 = vmatprep.subr.mxu0 0.0
        %1440 = vmatpush1.msra.mxu0 0.0
        %1441 = vmatprep.mubr.f32.mxu0 0.0
        %1442 = vmatmul.mubr.f32.gmra.mrb[0].mxu0 %v1375
        %v1443 = vpop.f32.mrb[0].mxu0
        %v1444 = vadd.f32 %v1372, %v1443
        %v1445 = vpop.f32.mrb[0].mxu0
        %1446 = vdwg.mxu0
        %v1447 = vld [vmem:[#allocation10] sm:$0xff]
        %v1448 = vld [vmem:[#allocation10 + $0x8] sm:$0xff]
        %v1449 = vld [vmem:[#allocation10 + $0x10] sm:$0xff]
        %v1450 = vld [vmem:[#allocation10 + $0x18] sm:$0xff]
        %v1451 = vld [vmem:[#allocation10 + $0x20] sm:$0xff]
        %v1452 = vld [vmem:[#allocation10 + $0x28] sm:$0xff]
        %v1453 = vld [vmem:[#allocation10 + $0x30] sm:$0xff]
        %v1454 = vld [vmem:[#allocation10 + $0x38] sm:$0xff]
        %v1455 = vld [vmem:[%s51] sm:$0x1]
        %vm1456 = vcmask 261120
        %v1458 = vsel %vm1456, %v1356, 0
        %v1461 = vsel %vm1456, %v1444, 0
        %1463 = vmatprep.subr.mxu0 0.0
        %1464 = vmatpush1.xpose.msra.mxu0 %v1461
        %1465 = vmatprep.subr.mxu0 0.0
        %1466 = vmatpush1.xpose.msra.mxu0 0.0
        %1467 = vmatprep.subr.mxu0 0.0
        %1468 = vmatpush1.xpose.msra.mxu0 0.0
        %1469 = vmatprep.subr.mxu0 0.0
        %1470 = vmatpush1.xpose.msra.mxu0 0.0
        %1471 = vmatprep.subr.mxu0 0.0
        %1472 = vmatpush1.xpose.msra.mxu0 0.0
        %1473 = vmatprep.subr.mxu0 0.0
        %1474 = vmatpush1.xpose.msra.mxu0 0.0
        %1475 = vmatprep.subr.mxu0 0.0
        %1476 = vmatpush1.xpose.msra.mxu0 0.0
        %1477 = vmatprep.subr.mxu0 0.0
        %1478 = vmatpush1.xpose.msra.mxu0 0.0
        %1479 = vmatprep.subr.mxu0 0.0
        %1480 = vmatpush1.xpose.msra.mxu0 0.0
        %1481 = vmatprep.subr.mxu0 0.0
        %1482 = vmatpush1.xpose.msra.mxu0 0.0
        %1483 = vmatprep.subr.mxu0 0.0
        %1484 = vmatpush1.xpose.msra.mxu0 0.0
        %1485 = vmatprep.subr.mxu0 0.0
        %1486 = vmatpush1.xpose.msra.mxu0 0.0
        %1487 = vmatprep.subr.mxu0 0.0
        %1488 = vmatpush1.xpose.msra.mxu0 0.0
        %1489 = vmatprep.subr.mxu0 0.0
        %1490 = vmatpush1.xpose.msra.mxu0 0.0
        %1491 = vmatprep.subr.mxu0 0.0
        %1492 = vmatpush1.xpose.msra.mxu0 0.0
        %1493 = vmatprep.subr.mxu0 0.0
        %1494 = vmatpush1.xpose.msra.mxu0 0.0
        %1495 = vmatprep.subr.mxu0 0.0
        %1496 = vmatpush1.xpose.msra.mxu0 0.0
        %1497 = vmatprep.subr.mxu0 0.0
        %1498 = vmatpush1.xpose.msra.mxu0 0.0
        %1499 = vmatprep.subr.mxu0 0.0
        %1500 = vmatpush1.xpose.msra.mxu0 0.0
        %1501 = vmatprep.subr.mxu0 0.0
        %1502 = vmatpush1.xpose.msra.mxu0 0.0
        %1503 = vmatprep.subr.mxu0 0.0
        %1504 = vmatpush1.xpose.msra.mxu0 0.0
        %1505 = vmatprep.subr.mxu0 0.0
        %1506 = vmatpush1.xpose.msra.mxu0 0.0
        %1507 = vmatprep.subr.mxu0 0.0
        %1508 = vmatpush1.xpose.msra.mxu0 0.0
        %1509 = vmatprep.subr.mxu0 0.0
        %1510 = vmatpush1.xpose.msra.mxu0 0.0
        %1511 = vmatprep.subr.mxu0 0.0
        %1512 = vmatpush1.xpose.msra.mxu0 0.0
        %1513 = vmatprep.subr.mxu0 0.0
        %1514 = vmatpush1.xpose.msra.mxu0 0.0
        %1515 = vmatprep.subr.mxu0 0.0
        %1516 = vmatpush1.xpose.msra.mxu0 0.0
        %1517 = vmatprep.subr.mxu0 0.0
        %1518 = vmatpush1.xpose.msra.mxu0 0.0
        %1519 = vmatprep.subr.mxu0 0.0
        %1520 = vmatpush1.xpose.msra.mxu0 0.0
        %1521 = vmatprep.subr.mxu0 0.0
        %1522 = vmatpush1.xpose.msra.mxu0 0.0
        %1523 = vmatprep.subr.mxu0 0.0
        %1524 = vmatpush1.xpose.msra.mxu0 0.0
        %1525 = vmatprep.subr.mxu0 0.0
        %1526 = vmatpush1.xpose.msra.mxu0 0.0
        %1527 = vmatprep.mubr.f32.mxu0 0.0
        %1528 = vmatmul.mubr.f32.gmra.mrb[0].mxu0 %v1458
        %v1529 = vpop.f32.mrb[0].mxu0
        %v1530 = vadd.f32 0.0, %v1529
        %v1531 = vpop.f32.mrb[0].mxu0
        %1532 = vdwg.mxu0
        %v1533 = vmul.f32 %v1530, 0.17677669
        %v1535 = vlaneseq
        %v1536 = vshrl.u32 %v1535, 7
        %v1537 = vsub.s32 0, %v1536
        %v1538 = vrot.slane %v1175, %v1537
        %v1540 = vadd.f32 %v1533, %v1538
        %vm1541 = vcmask 64512
        %v1542 = vsel %vm1541, %v1540, -inf
        %1543 = vmax.xlane.f32.xlu0 %v1542
        %v1544 = vpop.xlane.xlu0 %1543
        %v1545 = vsub.f32 %v1540, %v1544
        %v1546 = vmul.f32 %v1545, 1.442695
        %v1547 = vpow.pop %v1546
        %v1548 = vsel %vm1541, %v1547, 0.0
        %1549 = vadd.xlane.f32.xlu0 %v1548
        %v1550 = vpop.xlane.xlu0 %1549
        %v1551 = vrcp.pop %v1550
        %v1552 = vmul.f32 %v1547, %v1551
        %1553 = vrot.lane.b32.xlu0 %v1444, 64
        %v1554 = vpop.permute.xlu0 %1553
        %v1557 = vsel %vm1541, %v1552, 0
        %1559 = vmatprep.subr.mxu0 0.0
        %1560 = vmatpush1.msra.mxu0 %v1554
        %1561 = vmatprep.subr.mxu0 0.0
        %1562 = vmatpush1.msra.mxu0 0.0
        %1563 = vmatprep.subr.mxu0 0.0
        %1564 = vmatpush1.msra.mxu0 0.0
        %1565 = vmatprep.subr.mxu0 0.0
        %1566 = vmatpush1.msra.mxu0 0.0
        %1567 = vmatprep.subr.mxu0 0.0
        %1568 = vmatpush1.msra.mxu0 0.0
        %1569 = vmatprep.subr.mxu0 0.0
        %1570 = vmatpush1.msra.mxu0 0.0
        %1571 = vmatprep.subr.mxu0 0.0
        %1572 = vmatpush1.msra.mxu0 0.0
        %1573 = vmatprep.subr.mxu0 0.0
        %1574 = vmatpush1.msra.mxu0 0.0
        %1575 = vmatprep.subr.mxu0 0.0
        %1576 = vmatpush1.msra.mxu0 0.0
        %1577 = vmatprep.subr.mxu0 0.0
        %1578 = vmatpush1.msra.mxu0 0.0
        %1579 = vmatprep.subr.mxu0 0.0
        %1580 = vmatpush1.msra.mxu0 0.0
        %1581 = vmatprep.subr.mxu0 0.0
        %1582 = vmatpush1.msra.mxu0 0.0
        %1583 = vmatprep.subr.mxu0 0.0
        %1584 = vmatpush1.msra.mxu0 0.0
        %1585 = vmatprep.subr.mxu0 0.0
        %1586 = vmatpush1.msra.mxu0 0.0
        %1587 = vmatprep.subr.mxu0 0.0
        %1588 = vmatpush1.msra.mxu0 0.0
        %1589 = vmatprep.subr.mxu0 0.0
        %1590 = vmatpush1.msra.mxu0 0.0
        %1591 = vmatprep.subr.mxu0 0.0
        %1592 = vmatpush1.msra.mxu0 0.0
        %1593 = vmatprep.subr.mxu0 0.0
        %1594 = vmatpush1.msra.mxu0 0.0
        %1595 = vmatprep.subr.mxu0 0.0
        %1596 = vmatpush1.msra.mxu0 0.0
        %1597 = vmatprep.subr.mxu0 0.0
        %1598 = vmatpush1.msra.mxu0 0.0
        %1599 = vmatprep.subr.mxu0 0.0
        %1600 = vmatpush1.msra.mxu0 0.0
        %1601 = vmatprep.subr.mxu0 0.0
        %1602 = vmatpush1.msra.mxu0 0.0
        %1603 = vmatprep.subr.mxu0 0.0
        %1604 = vmatpush1.msra.mxu0 0.0
        %1605 = vmatprep.subr.mxu0 0.0
        %1606 = vmatpush1.msra.mxu0 0.0
        %1607 = vmatprep.subr.mxu0 0.0
        %1608 = vmatpush1.msra.mxu0 0.0
        %1609 = vmatprep.subr.mxu0 0.0
        %1610 = vmatpush1.msra.mxu0 0.0
        %1611 = vmatprep.subr.mxu0 0.0
        %1612 = vmatpush1.msra.mxu0 0.0
        %1613 = vmatprep.subr.mxu0 0.0
        %1614 = vmatpush1.msra.mxu0 0.0
        %1615 = vmatprep.subr.mxu0 0.0
        %1616 = vmatpush1.msra.mxu0 0.0
        %1617 = vmatprep.subr.mxu0 0.0
        %1618 = vmatpush1.msra.mxu0 0.0
        %1619 = vmatprep.subr.mxu0 0.0
        %1620 = vmatpush1.msra.mxu0 0.0
        %1621 = vmatprep.subr.mxu0 0.0
        %1622 = vmatpush1.msra.mxu0 0.0
        %1623 = vmatprep.mubr.f32.mxu0 0.0
        %1624 = vmatmul.mubr.f32.gmra.mrb[0].mxu0 %v1557
        %v1625 = vpop.f32.mrb[0].mxu0
        %v1626 = vadd.f32 0.0, %v1625
        %v1627 = vpop.f32.mrb[0].mxu0
        %1628 = vdwg.mxu0
        %1629 = vrot.lane.b32.xlu0 %v1356, 96
        %v1630 = vpop.permute.xlu0 %1629
        %1631 = vrot.lane.b32.xlu0 %v1444, 96
        %v1632 = vpop.permute.xlu0 %1631
        %v1633 = vsel %vm1456, %v1630, 0
        %v1635 = vsel %vm1456, %v1632, 0
        %1637 = vmatprep.subr.mxu0 0.0
        %1638 = vmatpush1.xpose.msra.mxu0 %v1635
        %1639 = vmatprep.subr.mxu0 0.0
        %1640 = vmatpush1.xpose.msra.mxu0 0.0
        %1641 = vmatprep.subr.mxu0 0.0
        %1642 = vmatpush1.xpose.msra.mxu0 0.0
        %1643 = vmatprep.subr.mxu0 0.0
        %1644 = vmatpush1.xpose.msra.mxu0 0.0
        %1645 = vmatprep.subr.mxu0 0.0
        %1646 = vmatpush1.xpose.msra.mxu0 0.0
        %1647 = vmatprep.subr.mxu0 0.0
        %1648 = vmatpush1.xpose.msra.mxu0 0.0
        %1649 = vmatprep.subr.mxu0 0.0
        %1650 = vmatpush1.xpose.msra.mxu0 0.0
        %1651 = vmatprep.subr.mxu0 0.0
        %1652 = vmatpush1.xpose.msra.mxu0 0.0
        %1653 = vmatprep.subr.mxu0 0.0
        %1654 = vmatpush1.xpose.msra.mxu0 0.0
        %1655 = vmatprep.subr.mxu0 0.0
        %1656 = vmatpush1.xpose.msra.mxu0 0.0
        %1657 = vmatprep.subr.mxu0 0.0
        %1658 = vmatpush1.xpose.msra.mxu0 0.0
        %1659 = vmatprep.subr.mxu0 0.0
        %1660 = vmatpush1.xpose.msra.mxu0 0.0
        %1661 = vmatprep.subr.mxu0 0.0
        %1662 = vmatpush1.xpose.msra.mxu0 0.0
        %1663 = vmatprep.subr.mxu0 0.0
        %1664 = vmatpush1.xpose.msra.mxu0 0.0
        %1665 = vmatprep.subr.mxu0 0.0
        %1666 = vmatpush1.xpose.msra.mxu0 0.0
        %1667 = vmatprep.subr.mxu0 0.0
        %1668 = vmatpush1.xpose.msra.mxu0 0.0
        %1669 = vmatprep.subr.mxu0 0.0
        %1670 = vmatpush1.xpose.msra.mxu0 0.0
        %1671 = vmatprep.subr.mxu0 0.0
        %1672 = vmatpush1.xpose.msra.mxu0 0.0
        %1673 = vmatprep.subr.mxu0 0.0
        %1674 = vmatpush1.xpose.msra.mxu0 0.0
        %1675 = vmatprep.subr.mxu0 0.0
        %1676 = vmatpush1.xpose.msra.mxu0 0.0
        %1677 = vmatprep.subr.mxu0 0.0
        %1678 = vmatpush1.xpose.msra.mxu0 0.0
        %1679 = vmatprep.subr.mxu0 0.0
        %1680 = vmatpush1.xpose.msra.mxu0 0.0
        %1681 = vmatprep.subr.mxu0 0.0
        %1682 = vmatpush1.xpose.msra.mxu0 0.0
        %1683 = vmatprep.subr.mxu0 0.0
        %1684 = vmatpush1.xpose.msra.mxu0 0.0
        %1685 = vmatprep.subr.mxu0 0.0
        %1686 = vmatpush1.xpose.msra.mxu0 0.0
        %1687 = vmatprep.subr.mxu0 0.0
        %1688 = vmatpush1.xpose.msra.mxu0 0.0
        %1689 = vmatprep.subr.mxu0 0.0
        %1690 = vmatpush1.xpose.msra.mxu0 0.0
        %1691 = vmatprep.subr.mxu0 0.0
        %1692 = vmatpush1.xpose.msra.mxu0 0.0
        %1693 = vmatprep.subr.mxu0 0.0
        %1694 = vmatpush1.xpose.msra.mxu0 0.0
        %1695 = vmatprep.subr.mxu0 0.0
        %1696 = vmatpush1.xpose.msra.mxu0 0.0
        %1697 = vmatprep.subr.mxu0 0.0
        %1698 = vmatpush1.xpose.msra.mxu0 0.0
        %1699 = vmatprep.subr.mxu0 0.0
        %1700 = vmatpush1.xpose.msra.mxu0 0.0
        %1701 = vmatprep.mubr.f32.mxu0 0.0
        %1702 = vmatmul.mubr.f32.gmra.mrb[0].mxu0 %v1633
        %v1703 = vpop.f32.mrb[0].mxu0
        %v1704 = vadd.f32 0.0, %v1703
        %v1705 = vpop.f32.mrb[0].mxu0
        %1706 = vdwg.mxu0
        %v1707 = vmul.f32 %v1704, 0.17677669
        %v1708 = vadd.f32 %v1707, %v1538
        %v1709 = vsel %vm1541, %v1708, -inf
        %1710 = vmax.xlane.f32.xlu0 %v1709
        %v1711 = vpop.xlane.xlu0 %1710
        %v1712 = vsub.f32 %v1708, %v1711
        %v1713 = vmul.f32 %v1712, 1.442695
        %v1714 = vpow.pop %v1713
        %v1715 = vsel %vm1541, %v1714, 0.0
        %1716 = vadd.xlane.f32.xlu0 %v1715
        %v1717 = vpop.xlane.xlu0 %1716
        %v1718 = vrcp.pop %v1717
        %v1719 = vmul.f32 %v1714, %v1718
        %1720 = vrot.lane.b32.xlu0 %v1444, 32
        %v1721 = vpop.permute.xlu0 %1720
        %v1724 = vsel %vm1541, %v1719, 0
        %1726 = vmatprep.subr.mxu0 0.0
        %1727 = vmatpush1.msra.mxu0 %v1721
        %1728 = vmatprep.subr.mxu0 0.0
        %1729 = vmatpush1.msra.mxu0 0.0
        %1730 = vmatprep.subr.mxu0 0.0
        %1731 = vmatpush1.msra.mxu0 0.0
        %1732 = vmatprep.subr.mxu0 0.0
        %1733 = vmatpush1.msra.mxu0 0.0
        %1734 = vmatprep.subr.mxu0 0.0
        %1735 = vmatpush1.msra.mxu0 0.0
        %1736 = vmatprep.subr.mxu0 0.0
        %1737 = vmatpush1.msra.mxu0 0.0
        %1738 = vmatprep.subr.mxu0 0.0
        %1739 = vmatpush1.msra.mxu0 0.0
        %1740 = vmatprep.subr.mxu0 0.0
        %1741 = vmatpush1.msra.mxu0 0.0
        %1742 = vmatprep.subr.mxu0 0.0
        %1743 = vmatpush1.msra.mxu0 0.0
        %1744 = vmatprep.subr.mxu0 0.0
        %1745 = vmatpush1.msra.mxu0 0.0
        %1746 = vmatprep.subr.mxu0 0.0
        %1747 = vmatpush1.msra.mxu0 0.0
        %1748 = vmatprep.subr.mxu0 0.0
        %1749 = vmatpush1.msra.mxu0 0.0
        %1750 = vmatprep.subr.mxu0 0.0
        %1751 = vmatpush1.msra.mxu0 0.0
        %1752 = vmatprep.subr.mxu0 0.0
        %1753 = vmatpush1.msra.mxu0 0.0
        %1754 = vmatprep.subr.mxu0 0.0
        %1755 = vmatpush1.msra.mxu0 0.0
        %1756 = vmatprep.subr.mxu0 0.0
        %1757 = vmatpush1.msra.mxu0 0.0
        %1758 = vmatprep.subr.mxu0 0.0
        %1759 = vmatpush1.msra.mxu0 0.0
        %1760 = vmatprep.subr.mxu0 0.0
        %1761 = vmatpush1.msra.mxu0 0.0
        %1762 = vmatprep.subr.mxu0 0.0
        %1763 = vmatpush1.msra.mxu0 0.0
        %1764 = vmatprep.subr.mxu0 0.0
        %1765 = vmatpush1.msra.mxu0 0.0
        %1766 = vmatprep.subr.mxu0 0.0
        %1767 = vmatpush1.msra.mxu0 0.0
        %1768 = vmatprep.subr.mxu0 0.0
        %1769 = vmatpush1.msra.mxu0 0.0
        %1770 = vmatprep.subr.mxu0 0.0
        %1771 = vmatpush1.msra.mxu0 0.0
        %1772 = vmatprep.subr.mxu0 0.0
        %1773 = vmatpush1.msra.mxu0 0.0
        %1774 = vmatprep.subr.mxu0 0.0
        %1775 = vmatpush1.msra.mxu0 0.0
        %1776 = vmatprep.subr.mxu0 0.0
        %1777 = vmatpush1.msra.mxu0 0.0
        %1778 = vmatprep.subr.mxu0 0.0
        %1779 = vmatpush1.msra.mxu0 0.0
        %1780 = vmatprep.subr.mxu0 0.0
        %1781 = vmatpush1.msra.mxu0 0.0
        %1782 = vmatprep.subr.mxu0 0.0
        %1783 = vmatpush1.msra.mxu0 0.0
        %1784 = vmatprep.subr.mxu0 0.0
        %1785 = vmatpush1.msra.mxu0 0.0
        %1786 = vmatprep.subr.mxu0 0.0
        %1787 = vmatpush1.msra.mxu0 0.0
        %1788 = vmatprep.subr.mxu0 0.0
        %1789 = vmatpush1.msra.mxu0 0.0
        %1790 = vmatprep.mubr.f32.mxu0 0.0
        %1791 = vmatmul.mubr.f32.gmra.mrb[0].mxu0 %v1724
        %v1792 = vpop.f32.mrb[0].mxu0
        %v1793 = vadd.f32 0.0, %v1792
        %v1794 = vpop.f32.mrb[0].mxu0
        %1795 = vdwg.mxu0
        %v1797 = vsel %vm1456, %v1793, 0
        %1799 = vmatprep.subr.mxu0 0.0
        %1800 = vmatpush1.msra.mxu0 %v1451
        %1801 = vmatprep.subr.mxu0 0.0
        %1802 = vmatpush1.msra.mxu0 %v1452
        %1803 = vmatprep.subr.mxu0 0.0
        %1804 = vmatpush1.msra.mxu0 %v1453
        %1805 = vmatprep.subr.mxu0 0.0
        %1806 = vmatpush1.msra.mxu0 %v1454
        %1807 = vmatprep.subr.mxu0 0.0
        %1808 = vmatpush1.msra.mxu0 0.0
        %1809 = vmatprep.subr.mxu0 0.0
        %1810 = vmatpush1.msra.mxu0 0.0
        %1811 = vmatprep.subr.mxu0 0.0
        %1812 = vmatpush1.msra.mxu0 0.0
        %1813 = vmatprep.subr.mxu0 0.0
        %1814 = vmatpush1.msra.mxu0 0.0
        %1815 = vmatprep.subr.mxu0 0.0
        %1816 = vmatpush1.msra.mxu0 0.0
        %1817 = vmatprep.subr.mxu0 0.0
        %1818 = vmatpush1.msra.mxu0 0.0
        %1819 = vmatprep.subr.mxu0 0.0
        %1820 = vmatpush1.msra.mxu0 0.0
        %1821 = vmatprep.subr.mxu0 0.0
        %1822 = vmatpush1.msra.mxu0 0.0
        %1823 = vmatprep.subr.mxu0 0.0
        %1824 = vmatpush1.msra.mxu0 0.0
        %1825 = vmatprep.subr.mxu0 0.0
        %1826 = vmatpush1.msra.mxu0 0.0
        %1827 = vmatprep.subr.mxu0 0.0
        %1828 = vmatpush1.msra.mxu0 0.0
        %1829 = vmatprep.subr.mxu0 0.0
        %1830 = vmatpush1.msra.mxu0 0.0
        %1831 = vmatprep.subr.mxu0 0.0
        %1832 = vmatpush1.msra.mxu0 0.0
        %1833 = vmatprep.subr.mxu0 0.0
        %1834 = vmatpush1.msra.mxu0 0.0
        %1835 = vmatprep.subr.mxu0 0.0
        %1836 = vmatpush1.msra.mxu0 0.0
        %1837 = vmatprep.subr.mxu0 0.0
        %1838 = vmatpush1.msra.mxu0 0.0
        %1839 = vmatprep.subr.mxu0 0.0
        %1840 = vmatpush1.msra.mxu0 0.0
        %1841 = vmatprep.subr.mxu0 0.0
        %1842 = vmatpush1.msra.mxu0 0.0
        %1843 = vmatprep.subr.mxu0 0.0
        %1844 = vmatpush1.msra.mxu0 0.0
        %1845 = vmatprep.subr.mxu0 0.0
        %1846 = vmatpush1.msra.mxu0 0.0
        %1847 = vmatprep.subr.mxu0 0.0
        %1848 = vmatpush1.msra.mxu0 0.0
        %1849 = vmatprep.subr.mxu0 0.0
        %1850 = vmatpush1.msra.mxu0 0.0
        %1851 = vmatprep.subr.mxu0 0.0
        %1852 = vmatpush1.msra.mxu0 0.0
        %1853 = vmatprep.subr.mxu0 0.0
        %1854 = vmatpush1.msra.mxu0 0.0
        %1855 = vmatprep.subr.mxu0 0.0
        %1856 = vmatpush1.msra.mxu0 0.0
        %1857 = vmatprep.subr.mxu0 0.0
        %1858 = vmatpush1.msra.mxu0 0.0
        %1859 = vmatprep.subr.mxu0 0.0
        %1860 = vmatpush1.msra.mxu0 0.0
        %1861 = vmatprep.subr.mxu0 0.0
        %1862 = vmatpush1.msra.mxu0 0.0
        %1863 = vmatprep.mubr.f32.mxu0 0.0
        %1864 = vmatmul.mubr.f32.gmra.mrb[0].mxu0 %v1797
        %v1865 = vpop.f32.mrb[0].mxu0
        %v1866 = vadd.f32 0.0, %v1865
        %v1867 = vpop.f32.mrb[0].mxu0
        %1868 = vdwg.mxu0
        %v1870 = vsel %vm1456, %v1626, 0
        %1872 = vmatprep.subr.mxu0 0.0
        %1873 = vmatpush1.msra.mxu0 %v1447
        %1874 = vmatprep.subr.mxu0 0.0
        %1875 = vmatpush1.msra.mxu0 %v1448
        %1876 = vmatprep.subr.mxu0 0.0
        %1877 = vmatpush1.msra.mxu0 %v1449
        %1878 = vmatprep.subr.mxu0 0.0
        %1879 = vmatpush1.msra.mxu0 %v1450
        %1880 = vmatprep.subr.mxu0 0.0
        %1881 = vmatpush1.msra.mxu0 0.0
        %1882 = vmatprep.subr.mxu0 0.0
        %1883 = vmatpush1.msra.mxu0 0.0
        %1884 = vmatprep.subr.mxu0 0.0
        %1885 = vmatpush1.msra.mxu0 0.0
        %1886 = vmatprep.subr.mxu0 0.0
        %1887 = vmatpush1.msra.mxu0 0.0
        %1888 = vmatprep.subr.mxu0 0.0
        %1889 = vmatpush1.msra.mxu0 0.0
        %1890 = vmatprep.subr.mxu0 0.0
        %1891 = vmatpush1.msra.mxu0 0.0
        %1892 = vmatprep.subr.mxu0 0.0
        %1893 = vmatpush1.msra.mxu0 0.0
        %1894 = vmatprep.subr.mxu0 0.0
        %1895 = vmatpush1.msra.mxu0 0.0
        %1896 = vmatprep.subr.mxu0 0.0
        %1897 = vmatpush1.msra.mxu0 0.0
        %1898 = vmatprep.subr.mxu0 0.0
        %1899 = vmatpush1.msra.mxu0 0.0
        %1900 = vmatprep.subr.mxu0 0.0
        %1901 = vmatpush1.msra.mxu0 0.0
        %1902 = vmatprep.subr.mxu0 0.0
        %1903 = vmatpush1.msra.mxu0 0.0
        %1904 = vmatprep.subr.mxu0 0.0
        %1905 = vmatpush1.msra.mxu0 0.0
        %1906 = vmatprep.subr.mxu0 0.0
        %1907 = vmatpush1.msra.mxu0 0.0
        %1908 = vmatprep.subr.mxu0 0.0
        %1909 = vmatpush1.msra.mxu0 0.0
        %1910 = vmatprep.subr.mxu0 0.0
        %1911 = vmatpush1.msra.mxu0 0.0
        %1912 = vmatprep.subr.mxu0 0.0
        %1913 = vmatpush1.msra.mxu0 0.0
        %1914 = vmatprep.subr.mxu0 0.0
        %1915 = vmatpush1.msra.mxu0 0.0
        %1916 = vmatprep.subr.mxu0 0.0
        %1917 = vmatpush1.msra.mxu0 0.0
        %1918 = vmatprep.subr.mxu0 0.0
        %1919 = vmatpush1.msra.mxu0 0.0
        %1920 = vmatprep.subr.mxu0 0.0
        %1921 = vmatpush1.msra.mxu0 0.0
        %1922 = vmatprep.subr.mxu0 0.0
        %1923 = vmatpush1.msra.mxu0 0.0
        %1924 = vmatprep.subr.mxu0 0.0
        %1925 = vmatpush1.msra.mxu0 0.0
        %1926 = vmatprep.subr.mxu0 0.0
        %1927 = vmatpush1.msra.mxu0 0.0
        %1928 = vmatprep.subr.mxu0 0.0
        %1929 = vmatpush1.msra.mxu0 0.0
        %1930 = vmatprep.subr.mxu0 0.0
        %1931 = vmatpush1.msra.mxu0 0.0
        %1932 = vmatprep.subr.mxu0 0.0
        %1933 = vmatpush1.msra.mxu0 0.0
        %1934 = vmatprep.subr.mxu0 0.0
        %1935 = vmatpush1.msra.mxu0 0.0
        %1936 = vmatprep.mubr.f32.mxu0 0.0
        %1937 = vmatmul.mubr.f32.gmra.mrb[0].mxu0 %v1870
        %v1938 = vpop.f32.mrb[0].mxu0
        %v1939 = vadd.f32 %v1866, %v1938
        %v1940 = vpop.f32.mrb[0].mxu0
        %1941 = vdwg.mxu0
        %v1943 = vlaneseq
        %v1944 = vshrl.u32 %v1943, 7
        %v1945 = vsub.s32 0, %v1944
        %v1946 = vrot.slane %v1455, %v1945
        %v1948 = vadd.f32 %v1939, %v1946
        %v1949 = vadd.f32 %v1269, %v1948
        %v1950 = vld [vmem:[%s61] sm:$0x1]
        %v1951 = vld [vmem:[%s63] sm:$0x1]
        %v1952 = vsel %vm1285, %v1949, 0.0
        %1953 = vadd.xlane.f32.xlu0 %v1952
        %v1954 = vpop.xlane.xlu0 %1953
        %v1955 = vrcp.pop 64.0
        %v1956 = vmul.f32 %v1954, %v1955
        %v1957 = vsub.f32 %v1949, %v1956
        %v1958 = vmul.f32 %v1957, %v1957
        %v1959 = vsel %vm1285, %v1958, 0.0
        %1960 = vadd.xlane.f32.xlu0 %v1959
        %v1961 = vpop.xlane.xlu0 %1960
        %v1962 = vmul.f32 %v1961, %v1955
        %v1963 = vadd.f32 %v1962, 1e-05
        %v1964 = vrsqrt.pop %v1963
        %v1965 = vmul.f32 %v1957, %v1964
        %v1967 = vlaneseq
        %v1968 = vshrl.u32 %v1967, 7
        %v1969 = vsub.s32 0, %v1968
        %v1970 = vrot.slane %v1950, %v1969
        %v1972 = vmul.f32 %v1965, %v1970
        %v1974 = vlaneseq
        %v1975 = vshrl.u32 %v1974, 7
        %v1976 = vsub.s32 0, %v1975
        %v1977 = vrot.slane %v1951, %v1976
        %v1979 = vadd.f32 %v1972, %v1977
        %v1980 = vld [vmem:[#allocation12] sm:$0xff]
        %v1981 = vld [vmem:[#allocation12 + $0x8] sm:$0xff]
        %v1982 = vld [vmem:[#allocation12 + $0x10] sm:$0xff]
        %v1983 = vld [vmem:[#allocation12 + $0x18] sm:$0xff]
        %v1984 = vld [vmem:[#allocation12 + $0x20] sm:$0xff]
        %v1985 = vld [vmem:[#allocation12 + $0x28] sm:$0xff]
        %v1986 = vld [vmem:[#allocation12 + $0x30] sm:$0xff]
        %v1987 = vld [vmem:[#allocation12 + $0x38] sm:$0xff]
        %v1988 = vld [vmem:[%s55] sm:$0x1]
        %v1990 = vlaneseq
        %v1991 = vshrl.u32 %v1990, 7
        %v1992 = vsub.s32 0, %v1991
        %v1993 = vrot.slane %v1988, %v1992
        %v1996 = vsel %vm1285, %v1979, 0
        %1998 = vmatprep.subr.mxu0 0.0
        %1999 = vmatpush1.msra.mxu0 %v1980
        %2000 = vmatprep.subr.mxu0 0.0
        %2001 = vmatpush1.msra.mxu0 %v1981
        %2002 = vmatprep.subr.mxu0 0.0
        %2003 = vmatpush1.msra.mxu0 %v1982
        %2004 = vmatprep.subr.mxu0 0.0
        %2005 = vmatpush1.msra.mxu0 %v1983
        %2006 = vmatprep.subr.mxu0 0.0
        %2007 = vmatpush1.msra.mxu0 %v1984
        %2008 = vmatprep.subr.mxu0 0.0
        %2009 = vmatpush1.msra.mxu0 %v1985
        %2010 = vmatprep.subr.mxu0 0.0
        %2011 = vmatpush1.msra.mxu0 %v1986
        %2012 = vmatprep.subr.mxu0 0.0
        %2013 = vmatpush1.msra.mxu0 %v1987
        %2014 = vmatprep.subr.mxu0 0.0
        %2015 = vmatpush1.msra.mxu0 0.0
        %2016 = vmatprep.subr.mxu0 0.0
        %2017 = vmatpush1.msra.mxu0 0.0
        %2018 = vmatprep.subr.mxu0 0.0
        %2019 = vmatpush1.msra.mxu0 0.0
        %2020 = vmatprep.subr.mxu0 0.0
        %2021 = vmatpush1.msra.mxu0 0.0
        %2022 = vmatprep.subr.mxu0 0.0
        %2023 = vmatpush1.msra.mxu0 0.0
        %2024 = vmatprep.subr.mxu0 0.0
        %2025 = vmatpush1.msra.mxu0 0.0
        %2026 = vmatprep.subr.mxu0 0.0
        %2027 = vmatpush1.msra.mxu0 0.0
        %2028 = vmatprep.subr.mxu0 0.0
        %2029 = vmatpush1.msra.mxu0 0.0
        %2030 = vmatprep.subr.mxu0 0.0
        %2031 = vmatpush1.msra.mxu0 0.0
        %2032 = vmatprep.subr.mxu0 0.0
        %2033 = vmatpush1.msra.mxu0 0.0
        %2034 = vmatprep.subr.mxu0 0.0
        %2035 = vmatpush1.msra.mxu0 0.0
        %2036 = vmatprep.subr.mxu0 0.0
        %2037 = vmatpush1.msra.mxu0 0.0
        %2038 = vmatprep.subr.mxu0 0.0
        %2039 = vmatpush1.msra.mxu0 0.0
        %2040 = vmatprep.subr.mxu0 0.0
        %2041 = vmatpush1.msra.mxu0 0.0
        %2042 = vmatprep.subr.mxu0 0.0
        %2043 = vmatpush1.msra.mxu0 0.0
        %2044 = vmatprep.subr.mxu0 0.0
        %2045 = vmatpush1.msra.mxu0 0.0
        %2046 = vmatprep.subr.mxu0 0.0
        %2047 = vmatpush1.msra.mxu0 0.0
        %2048 = vmatprep.subr.mxu0 0.0
        %2049 = vmatpush1.msra.mxu0 0.0
        %2050 = vmatprep.subr.mxu0 0.0
        %2051 = vmatpush1.msra.mxu0 0.0
        %2052 = vmatprep.subr.mxu0 0.0
        %2053 = vmatpush1.msra.mxu0 0.0
        %2054 = vmatprep.subr.mxu0 0.0
        %2055 = vmatpush1.msra.mxu0 0.0
        %2056 = vmatprep.subr.mxu0 0.0
        %2057 = vmatpush1.msra.mxu0 0.0
        %2058 = vmatprep.subr.mxu0 0.0
        %2059 = vmatpush1.msra.mxu0 0.0
        %2060 = vmatprep.subr.mxu0 0.0
        %2061 = vmatpush1.msra.mxu0 0.0
        %2062 = vmatprep.mubr.f32.mxu0 0.0
        %2063 = vmatmul.mubr.f32.gmra.mrb[0].mxu0 %v1996
        %v2064 = vpop.f32.mrb[0].mxu0
        %v2065 = vadd.f32 %v1993, %v2064
        %v2066 = vpop.f32.mrb[0].mxu0
        %2067 = vdwg.mxu0
        %v2068 = vmax.f32 %v2065, 0.0
        %v2069 = vld [vmem:[%s57] sm:$0xff]
        %v2070 = vld [vmem:[%s57 + $0x8] sm:$0xff]
        %v2071 = vld [vmem:[%s57 + $0x10] sm:$0xff]
        %v2072 = vld [vmem:[%s57 + $0x18] sm:$0xff]
        %v2073 = vld [vmem:[%s57 + $0x20] sm:$0xff]
        %v2074 = vld [vmem:[%s57 + $0x28] sm:$0xff]
        %v2075 = vld [vmem:[%s57 + $0x30] sm:$0xff]
        %v2076 = vld [vmem:[%s57 + $0x38] sm:$0xff]
        %v2077 = vld [vmem:[%s57 + $0x40] sm:$0xff]
        %v2078 = vld [vmem:[%s57 + $0x48] sm:$0xff]
        %v2079 = vld [vmem:[%s57 + $0x50] sm:$0xff]
        %v2080 = vld [vmem:[%s57 + $0x58] sm:$0xff]
        %v2081 = vld [vmem:[%s57 + $0x60] sm:$0xff]
        %v2082 = vld [vmem:[%s57 + $0x68] sm:$0xff]
        %v2083 = vld [vmem:[%s57 + $0x70] sm:$0xff]
        %v2084 = vld [vmem:[%s57 + $0x78] sm:$0xff]
        %v2085 = vld [vmem:[%s59] sm:$0x1]
        %v2087 = vlaneseq
        %v2088 = vshrl.u32 %v2087, 7
        %v2089 = vsub.s32 0, %v2088
        %v2090 = vrot.slane %v2085, %v2089
        %2092 = vmatprep.subr.mxu0 0.0
        %2093 = vmatpush1.msra.mxu0 %v2069
        %2094 = vmatprep.subr.mxu0 0.0
        %2095 = vmatpush1.msra.mxu0 %v2070
        %2096 = vmatprep.subr.mxu0 0.0
        %2097 = vmatpush1.msra.mxu0 %v2071
        %2098 = vmatprep.subr.mxu0 0.0
        %2099 = vmatpush1.msra.mxu0 %v2072
        %2100 = vmatprep.subr.mxu0 0.0
        %2101 = vmatpush1.msra.mxu0 %v2073
        %2102 = vmatprep.subr.mxu0 0.0
        %2103 = vmatpush1.msra.mxu0 %v2074
        %2104 = vmatprep.subr.mxu0 0.0
        %2105 = vmatpush1.msra.mxu0 %v2075
        %2106 = vmatprep.subr.mxu0 0.0
        %2107 = vmatpush1.msra.mxu0 %v2076
        %2108 = vmatprep.subr.mxu0 0.0
        %2109 = vmatpush1.msra.mxu0 %v2077
        %2110 = vmatprep.subr.mxu0 0.0
        %2111 = vmatpush1.msra.mxu0 %v2078
        %2112 = vmatprep.subr.mxu0 0.0
        %2113 = vmatpush1.msra.mxu0 %v2079
        %2114 = vmatprep.subr.mxu0 0.0
        %2115 = vmatpush1.msra.mxu0 %v2080
        %2116 = vmatprep.subr.mxu0 0.0
        %2117 = vmatpush1.msra.mxu0 %v2081
        %2118 = vmatprep.subr.mxu0 0.0
        %2119 = vmatpush1.msra.mxu0 %v2082
        %2120 = vmatprep.subr.mxu0 0.0
        %2121 = vmatpush1.msra.mxu0 %v2083
        %2122 = vmatprep.subr.mxu0 0.0
        %2123 = vmatpush1.msra.mxu0 %v2084
        %2124 = vmatprep.subr.mxu0 0.0
        %2125 = vmatpush1.msra.mxu0 0.0
        %2126 = vmatprep.subr.mxu0 0.0
        %2127 = vmatpush1.msra.mxu0 0.0
        %2128 = vmatprep.subr.mxu0 0.0
        %2129 = vmatpush1.msra.mxu0 0.0
        %2130 = vmatprep.subr.mxu0 0.0
        %2131 = vmatpush1.msra.mxu0 0.0
        %2132 = vmatprep.subr.mxu0 0.0
        %2133 = vmatpush1.msra.mxu0 0.0
        %2134 = vmatprep.subr.mxu0 0.0
        %2135 = vmatpush1.msra.mxu0 0.0
        %2136 = vmatprep.subr.mxu0 0.0
        %2137 = vmatpush1.msra.mxu0 0.0
        %2138 = vmatprep.subr.mxu0 0.0
        %2139 = vmatpush1.msra.mxu0 0.0
        %2140 = vmatprep.subr.mxu0 0.0
        %2141 = vmatpush1.msra.mxu0 0.0
        %2142 = vmatprep.subr.mxu0 0.0
        %2143 = vmatpush1.msra.mxu0 0.0
        %2144 = vmatprep.subr.mxu0 0.0
        %2145 = vmatpush1.msra.mxu0 0.0
        %2146 = vmatprep.subr.mxu0 0.0
        %2147 = vmatpush1.msra.mxu0 0.0
        %2148 = vmatprep.subr.mxu0 0.0
        %2149 = vmatpush1.msra.mxu0 0.0
        %2150 = vmatprep.subr.mxu0 0.0
        %2151 = vmatpush1.msra.mxu0 0.0
        %2152 = vmatprep.subr.mxu0 0.0
        %2153 = vmatpush1.msra.mxu0 0.0
        %2154 = vmatprep.subr.mxu0 0.0
        %2155 = vmatpush1.msra.mxu0 0.0
        %2156 = vmatprep.mubr.f32.mxu0 0.0
        %2157 = vmatmul.mubr.f32.gmra.mrb[0].mxu0 %v2068
        %v2158 = vpop.f32.mrb[0].mxu0
        %v2159 = vadd.f32 %v2090, %v2158
        %v2160 = vpop.f32.mrb[0].mxu0
        %2161 = vdwg.mxu0
        %v2162 = vadd.f32 %v1979, %v2159
        %v2163 = vld [vmem:[%s65] sm:$0x1]
        %v2164 = vld [vmem:[%s67] sm:$0x1]
        %v2165 = vsel %vm1285, %v2162, 0.0
        %2166 = vadd.xlane.f32.xlu0 %v2165
        %v2167 = vpop.xlane.xlu0 %2166
        %v2168 = vmul.f32 %v2167, %v1955
        %v2169 = vsub.f32 %v2162, %v2168
        %v2170 = vmul.f32 %v2169, %v2169
        %v2171 = vsel %vm1285, %v2170, 0.0
        %2172 = vadd.xlane.f32.xlu0 %v2171
        %v2173 = vpop.xlane.xlu0 %2172
        %v2174 = vmul.f32 %v2173, %v1955
        %v2175 = vadd.f32 %v2174, 1e-05
        %v2176 = vrsqrt.pop %v2175
        %v2177 = vmul.f32 %v2169, %v2176
        %v2179 = vlaneseq
        %v2180 = vshrl.u32 %v2179, 7
        %v2181 = vsub.s32 0, %v2180
        %v2182 = vrot.slane %v2163, %v2181
        %v2184 = vmul.f32 %v2177, %v2182
        %v2186 = vlaneseq
        %v2187 = vshrl.u32 %v2186, 7
        %v2188 = vsub.s32 0, %v2187
        %v2189 = vrot.slane %v2164, %v2188
        %v2191 = vadd.f32 %v2184, %v2189
        %v2192 = vld [vmem:[%s11] sm:$0xff]
        %v2193 = vld [vmem:[%s11 + $0x8] sm:$0xff]
        %v2194 = vld [vmem:[%s11 + $0x10] sm:$0xff]
        %v2195 = vld [vmem:[%s11 + $0x18] sm:$0xff]
        %v2196 = vld [vmem:[%s11 + $0x20] sm:$0xff]
        %v2197 = vld [vmem:[%s11 + $0x28] sm:$0xff]
        %v2198 = vld [vmem:[%s11 + $0x30] sm:$0xff]
        %v2199 = vld [vmem:[%s11 + $0x38] sm:$0xff]
        %v2200 = vld [vmem:[%s13] sm:$0x1]
        %v2202 = vlaneseq
        %v2203 = vshrl.u32 %v2202, 7
        %v2204 = vsub.s32 0, %v2203
        %v2205 = vrot.slane %v2200, %v2204
        %v2208 = vsel %vm1285, %v2191, 0
        %2210 = vmatprep.subr.mxu0 0.0
        %2211 = vmatpush1.msra.mxu0 %v2192
        %2212 = vmatprep.subr.mxu0 0.0
        %2213 = vmatpush1.msra.mxu0 %v2193
        %2214 = vmatprep.subr.mxu0 0.0
        %2215 = vmatpush1.msra.mxu0 %v2194
        %2216 = vmatprep.subr.mxu0 0.0
        %2217 = vmatpush1.msra.mxu0 %v2195
        %2218 = vmatprep.subr.mxu0 0.0
        %2219 = vmatpush1.msra.mxu0 %v2196
        %2220 = vmatprep.subr.mxu0 0.0
        %2221 = vmatpush1.msra.mxu0 %v2197
        %2222 = vmatprep.subr.mxu0 0.0
        %2223 = vmatpush1.msra.mxu0 %v2198
        %2224 = vmatprep.subr.mxu0 0.0
        %2225 = vmatpush1.msra.mxu0 %v2199
        %2226 = vmatprep.subr.mxu0 0.0
        %2227 = vmatpush1.msra.mxu0 0.0
        %2228 = vmatprep.subr.mxu0 0.0
        %2229 = vmatpush1.msra.mxu0 0.0
        %2230 = vmatprep.subr.mxu0 0.0
        %2231 = vmatpush1.msra.mxu0 0.0
        %2232 = vmatprep.subr.mxu0 0.0
        %2233 = vmatpush1.msra.mxu0 0.0
        %2234 = vmatprep.subr.mxu0 0.0
        %2235 = vmatpush1.msra.mxu0 0.0
        %2236 = vmatprep.subr.mxu0 0.0
        %2237 = vmatpush1.msra.mxu0 0.0
        %2238 = vmatprep.subr.mxu0 0.0
        %2239 = vmatpush1.msra.mxu0 0.0
        %2240 = vmatprep.subr.mxu0 0.0
        %2241 = vmatpush1.msra.mxu0 0.0
        %2242 = vmatprep.subr.mxu0 0.0
        %2243 = vmatpush1.msra.mxu0 0.0
        %2244 = vmatprep.subr.mxu0 0.0
        %2245 = vmatpush1.msra.mxu0 0.0
        %2246 = vmatprep.subr.mxu0 0.0
        %2247 = vmatpush1.msra.mxu0 0.0
        %2248 = vmatprep.subr.mxu0 0.0
        %2249 = vmatpush1.msra.mxu0 0.0
        %2250 = vmatprep.subr.mxu0 0.0
        %2251 = vmatpush1.msra.mxu0 0.0
        %2252 = vmatprep.subr.mxu0 0.0
        %2253 = vmatpush1.msra.mxu0 0.0
        %2254 = vmatprep.subr.mxu0 0.0
        %2255 = vmatpush1.msra.mxu0 0.0
        %2256 = vmatprep.subr.mxu0 0.0
        %2257 = vmatpush1.msra.mxu0 0.0
        %2258 = vmatprep.subr.mxu0 0.0
        %2259 = vmatpush1.msra.mxu0 0.0
        %2260 = vmatprep.subr.mxu0 0.0
        %2261 = vmatpush1.msra.mxu0 0.0
        %2262 = vmatprep.subr.mxu0 0.0
        %2263 = vmatpush1.msra.mxu0 0.0
        %2264 = vmatprep.subr.mxu0 0.0
        %2265 = vmatpush1.msra.mxu0 0.0
        %2266 = vmatprep.subr.mxu0 0.0
        %2267 = vmatpush1.msra.mxu0 0.0
        %2268 = vmatprep.subr.mxu0 0.0
        %2269 = vmatpush1.msra.mxu0 0.0
        %2270 = vmatprep.subr.mxu0 0.0
        %2271 = vmatpush1.msra.mxu0 0.0
        %2272 = vmatprep.subr.mxu0 0.0
        %2273 = vmatpush1.msra.mxu0 0.0
        %2274 = vmatprep.mubr.f32.mxu0 0.0
        %2275 = vmatmul.mubr.f32.gmra.mrb[0].mxu0 %v2208
        %v2276 = vpop.f32.mrb[0].mxu0
        %v2277 = vadd.f32 %v2205, %v2276
        %v2278 = vpop.f32.mrb[0].mxu0
        %2279 = vdwg.mxu0
        %v2280 = vld [vmem:[%s15] sm:$0x1]
        %v2282 = vlaneseq
        %v2283 = vshrl.u32 %v2282, 7
        %v2284 = vsub.s32 0, %v2283
        %v2285 = vrot.slane %v2280, %v2284
        %v2287 = vmul.f32 %v2277, %v2285
        %v2288 = vadd.f32 %v1171, %v2287
        %v2289 = vld [vmem:[%s17] sm:$0x1]
        %v2290 = vld [vmem:[%s19] sm:$0x1]
        %2291 = vadd.xlane.f32.xlu0 %v2288
        %v2292 = vpop.xlane.xlu0 %2291
        %v2293 = vrcp.pop 128.0
        %v2294 = vmul.f32 %v2292, %v2293
        %v2295 = vsub.f32 %v2288, %v2294
        %v2296 = vmul.f32 %v2295, %v2295
        %2297 = vadd.xlane.f32.xlu0 %v2296
        %v2298 = vpop.xlane.xlu0 %2297
        %v2299 = vmul.f32 %v2298, %v2293
        %v2300 = vadd.f32 %v2299, 1e-05
        %v2301 = vrsqrt.pop %v2300
        %v2302 = vmul.f32 %v2295, %v2301
        %v2304 = vlaneseq
        %v2305 = vshrl.u32 %v2304, 7
        %v2306 = vsub.s32 0, %v2305
        %v2307 = vrot.slane %v2289, %v2306
        %v2309 = vmul.f32 %v2302, %v2307
        %v2311 = vlaneseq
        %v2312 = vshrl.u32 %v2311, 7
        %v2313 = vsub.s32 0, %v2312
        %v2314 = vrot.slane %v2290, %v2313
        %v2316 = vadd.f32 %v2309, %v2314
        %v2317 = vld [vmem:[#allocation2] sm:$0xff]
        %v2318 = vld [vmem:[#allocation2 + $0x8] sm:$0xff]
        %v2319 = vld [vmem:[#allocation2 + $0x10] sm:$0xff]
        %v2320 = vld [vmem:[#allocation2 + $0x18] sm:$0xff]
        %v2321 = vld [vmem:[#allocation2 + $0x20] sm:$0xff]
        %v2322 = vld [vmem:[#allocation2 + $0x28] sm:$0xff]
        %v2323 = vld [vmem:[#allocation2 + $0x30] sm:$0xff]
        %v2324 = vld [vmem:[#allocation2 + $0x38] sm:$0xff]
        %v2325 = vld [vmem:[#allocation2 + $0x40] sm:$0xff]
        %v2326 = vld [vmem:[#allocation2 + $0x48] sm:$0xff]
        %v2327 = vld [vmem:[#allocation2 + $0x50] sm:$0xff]
        %v2328 = vld [vmem:[#allocation2 + $0x58] sm:$0xff]
        %v2329 = vld [vmem:[#allocation2 + $0x60] sm:$0xff]
        %v2330 = vld [vmem:[#allocation2 + $0x68] sm:$0xff]
        %v2331 = vld [vmem:[#allocation2 + $0x70] sm:$0xff]
        %v2332 = vld [vmem:[#allocation2 + $0x78] sm:$0xff]
        %v2333 = vld [vmem:[#allocation2 + $0x80] sm:$0xff]
        %v2334 = vld [vmem:[#allocation2 + $0x88] sm:$0xff]
        %v2335 = vld [vmem:[#allocation2 + $0x90] sm:$0xff]
        %v2336 = vld [vmem:[#allocation2 + $0x98] sm:$0xff]
        %v2337 = vld [vmem:[#allocation2 + $0xa0] sm:$0xff]
        %v2338 = vld [vmem:[#allocation2 + $0xa8] sm:$0xff]
        %v2339 = vld [vmem:[#allocation2 + $0xb0] sm:$0xff]
        %v2340 = vld [vmem:[#allocation2 + $0xb8] sm:$0xff]
        %v2341 = vld [vmem:[#allocation2 + $0xc0] sm:$0xff]
        %v2342 = vld [vmem:[#allocation2 + $0xc8] sm:$0xff]
        %v2343 = vld [vmem:[#allocation2 + $0xd0] sm:$0xff]
        %v2344 = vld [vmem:[#allocation2 + $0xd8] sm:$0xff]
        %v2345 = vld [vmem:[#allocation2 + $0xe0] sm:$0xff]
        %v2346 = vld [vmem:[#allocation2 + $0xe8] sm:$0xff]
        %v2347 = vld [vmem:[#allocation2 + $0xf0] sm:$0xff]
        %v2348 = vld [vmem:[#allocation2 + $0xf8] sm:$0xff]
        %v2349 = vld [vmem:[#allocation2 + $0x100] sm:$0xff]
        %v2350 = vld [vmem:[#allocation2 + $0x108] sm:$0xff]
        %v2351 = vld [vmem:[#allocation2 + $0x110] sm:$0xff]
        %v2352 = vld [vmem:[#allocation2 + $0x118] sm:$0xff]
        %v2353 = vld [vmem:[#allocation2 + $0x120] sm:$0xff]
        %v2354 = vld [vmem:[#allocation2 + $0x128] sm:$0xff]
        %v2355 = vld [vmem:[#allocation2 + $0x130] sm:$0xff]
        %v2356 = vld [vmem:[#allocation2 + $0x138] sm:$0xff]
        %v2357 = vld [vmem:[#allocation2 + $0x140] sm:$0xff]
        %v2358 = vld [vmem:[#allocation2 + $0x148] sm:$0xff]
        %v2359 = vld [vmem:[#allocation2 + $0x150] sm:$0xff]
        %v2360 = vld [vmem:[#allocation2 + $0x158] sm:$0xff]
        %v2361 = vld [vmem:[#allocation2 + $0x160] sm:$0xff]
        %v2362 = vld [vmem:[#allocation2 + $0x168] sm:$0xff]
        %v2363 = vld [vmem:[#allocation2 + $0x170] sm:$0xff]
        %v2364 = vld [vmem:[#allocation2 + $0x178] sm:$0xff]
        %v2365 = vld [vmem:[%s23] sm:$0x7]
        %v2367 = vlaneseq
        %v2368 = vshrl.u32 %v2367, 7
        %v2369 = vsub.s32 0, %v2368
        %v2370 = vrot.slane %v2365, %v2369
        %v2371 = vlaneseq
        %v2372 = vshrl.u32 %v2371, 7
        %v2373 = vsub.s32 1, %v2372
        %v2374 = vrot.slane %v2365, %v2373
        %v2375 = vlaneseq
        %v2376 = vshrl.u32 %v2375, 7
        %v2377 = vsub.s32 2, %v2376
        %v2378 = vrot.slane %v2365, %v2377
        %2382 = vmatprep.subr.mxu0 %v2318
        %2383 = vmatpush1.msra.mxu0 %v2317
        %2384 = vmatprep.subr.mxu0 %v2321
        %2385 = vmatpush1.msra.mxu0 %v2320
        %2386 = vmatprep.subr.mxu0 %v2324
        %2387 = vmatpush1.msra.mxu0 %v2323
        %2388 = vmatprep.subr.mxu0 %v2327
        %2389 = vmatpush1.msra.mxu0 %v2326
        %2390 = vmatprep.subr.mxu0 %v2330
        %2391 = vmatpush1.msra.mxu0 %v2329
        %2392 = vmatprep.subr.mxu0 %v2333
        %2393 = vmatpush1.msra.mxu0 %v2332
        %2394 = vmatprep.subr.mxu0 %v2336
        %2395 = vmatpush1.msra.mxu0 %v2335
        %2396 = vmatprep.subr.mxu0 %v2339
        %2397 = vmatpush1.msra.mxu0 %v2338
        %2398 = vmatprep.subr.mxu0 %v2342
        %2399 = vmatpush1.msra.mxu0 %v2341
        %2400 = vmatprep.subr.mxu0 %v2345
        %2401 = vmatpush1.msra.mxu0 %v2344
        %2402 = vmatprep.subr.mxu0 %v2348
        %2403 = vmatpush1.msra.mxu0 %v2347
        %2404 = vmatprep.subr.mxu0 %v2351
        %2405 = vmatpush1.msra.mxu0 %v2350
        %2406 = vmatprep.subr.mxu0 %v2354
        %2407 = vmatpush1.msra.mxu0 %v2353
        %2408 = vmatprep.subr.mxu0 %v2357
        %2409 = vmatpush1.msra.mxu0 %v2356
        %2410 = vmatprep.subr.mxu0 %v2360
        %2411 = vmatpush1.msra.mxu0 %v2359
        %2412 = vmatprep.subr.mxu0 %v2363
        %2413 = vmatpush1.msra.mxu0 %v2362
        %2414 = vmatprep.subr.mxu0 0.0
        %2415 = vmatpush1.msra.mxu0 0.0
        %2416 = vmatprep.subr.mxu0 0.0
        %2417 = vmatpush1.msra.mxu0 0.0
        %2418 = vmatprep.subr.mxu0 0.0
        %2419 = vmatpush1.msra.mxu0 0.0
        %2420 = vmatprep.subr.mxu0 0.0
        %2421 = vmatpush1.msra.mxu0 0.0
        %2422 = vmatprep.subr.mxu0 0.0
        %2423 = vmatpush1.msra.mxu0 0.0
        %2424 = vmatprep.subr.mxu0 0.0
        %2425 = vmatpush1.msra.mxu0 0.0
        %2426 = vmatprep.subr.mxu0 0.0
        %2427 = vmatpush1.msra.mxu0 0.0
        %2428 = vmatprep.subr.mxu0 0.0
        %2429 = vmatpush1.msra.mxu0 0.0
        %2430 = vmatprep.subr.mxu0 0.0
        %2431 = vmatpush1.msra.mxu0 0.0
        %2432 = vmatprep.subr.mxu0 0.0
        %2433 = vmatpush1.msra.mxu0 0.0
        %2434 = vmatprep.subr.mxu0 0.0
        %2435 = vmatpush1.msra.mxu0 0.0
        %2436 = vmatprep.subr.mxu0 0.0
        %2437 = vmatpush1.msra.mxu0 0.0
        %2438 = vmatprep.subr.mxu0 0.0
        %2439 = vmatpush1.msra.mxu0 0.0
        %2440 = vmatprep.subr.mxu0 0.0
        %2441 = vmatpush1.msra.mxu0 0.0
        %2442 = vmatprep.subr.mxu0 0.0
        %2443 = vmatpush1.msra.mxu0 0.0
        %2444 = vmatprep.subr.mxu0 0.0
        %2445 = vmatpush1.msra.mxu0 0.0
        %2446 = vmatprep.mubr.f32.mxu0 0.0
        %2447 = vmatmul.mubr.f32.gmra.mrb[0].mxu0 %v2316
        %v2448 = vpop.f32.mrb[0].mxu0
        %v2449 = vadd.f32 %v2370, %v2448
        %v2450 = vpop.f32.mrb[0].mxu0
        %v2451 = vadd.f32 %v2374, %v2450
        %2452 = vdwg.mxu0
        %2453 = vmatprep.subr.mxu0 0.0
        %2454 = vmatpush1.msra.mxu0 %v2319
        %2455 = vmatprep.subr.mxu0 0.0
        %2456 = vmatpush1.msra.mxu0 %v2322
        %2457 = vmatprep.subr.mxu0 0.0
        %2458 = vmatpush1.msra.mxu0 %v2325
        %2459 = vmatprep.subr.mxu0 0.0
        %2460 = vmatpush1.msra.mxu0 %v2328
        %2461 = vmatprep.subr.mxu0 0.0
        %2462 = vmatpush1.msra.mxu0 %v2331
        %2463 = vmatprep.subr.mxu0 0.0
        %2464 = vmatpush1.msra.mxu0 %v2334
        %2465 = vmatprep.subr.mxu0 0.0
        %2466 = vmatpush1.msra.mxu0 %v2337
        %2467 = vmatprep.subr.mxu0 0.0
        %2468 = vmatpush1.msra.mxu0 %v2340
        %2469 = vmatprep.subr.mxu0 0.0
        %2470 = vmatpush1.msra.mxu0 %v2343
        %2471 = vmatprep.subr.mxu0 0.0
        %2472 = vmatpush1.msra.mxu0 %v2346
        %2473 = vmatprep.subr.mxu0 0.0
        %2474 = vmatpush1.msra.mxu0 %v2349
        %2475 = vmatprep.subr.mxu0 0.0
        %2476 = vmatpush1.msra.mxu0 %v2352
        %2477 = vmatprep.subr.mxu0 0.0
        %2478 = vmatpush1.msra.mxu0 %v2355
        %2479 = vmatprep.subr.mxu0 0.0
        %2480 = vmatpush1.msra.mxu0 %v2358
        %2481 = vmatprep.subr.mxu0 0.0
        %2482 = vmatpush1.msra.mxu0 %v2361
        %2483 = vmatprep.subr.mxu0 0.0
        %2484 = vmatpush1.msra.mxu0 %v2364
        %2485 = vmatprep.subr.mxu0 0.0
        %2486 = vmatpush1.msra.mxu0 0.0
        %2487 = vmatprep.subr.mxu0 0.0
        %2488 = vmatpush1.msra.mxu0 0.0
        %2489 = vmatprep.subr.mxu0 0.0
        %2490 = vmatpush1.msra.mxu0 0.0
        %2491 = vmatprep.subr.mxu0 0.0
        %2492 = vmatpush1.msra.mxu0 0.0
        %2493 = vmatprep.subr.mxu0 0.0
        %2494 = vmatpush1.msra.mxu0 0.0
        %2495 = vmatprep.subr.mxu0 0.0
        %2496 = vmatpush1.msra.mxu0 0.0
        %2497 = vmatprep.subr.mxu0 0.0
        %2498 = vmatpush1.msra.mxu0 0.0
        %2499 = vmatprep.subr.mxu0 0.0
        %2500 = vmatpush1.msra.mxu0 0.0
        %2501 = vmatprep.subr.mxu0 0.0
        %2502 = vmatpush1.msra.mxu0 0.0
        %2503 = vmatprep.subr.mxu0 0.0
        %2504 = vmatpush1.msra.mxu0 0.0
        %2505 = vmatprep.subr.mxu0 0.0
        %2506 = vmatpush1.msra.mxu0 0.0
        %2507 = vmatprep.subr.mxu0 0.0
        %2508 = vmatpush1.msra.mxu0 0.0
        %2509 = vmatprep.subr.mxu0 0.0
        %2510 = vmatpush1.msra.mxu0 0.0
        %2511 = vmatprep.subr.mxu0 0.0
        %2512 = vmatpush1.msra.mxu0 0.0
        %2513 = vmatprep.subr.mxu0 0.0
        %2514 = vmatpush1.msra.mxu0 0.0
        %2515 = vmatprep.subr.mxu0 0.0
        %2516 = vmatpush1.msra.mxu0 0.0
        %2517 = vmatprep.mubr.f32.mxu0 0.0
        %2518 = vmatmul.mubr.f32.gmra.mrb[0].mxu0 %v2316
        %v2519 = vpop.f32.mrb[0].mxu0
        %v2520 = vadd.f32 %v2378, %v2519
        %v2521 = vpop.f32.mrb[0].mxu0
        %2522 = vdwg.mxu0
        %v2523 = vld [vmem:[#allocation4] sm:$0xff]
        %v2524 = vld [vmem:[#allocation4 + $0x8] sm:$0xff]
        %v2525 = vld [vmem:[#allocation4 + $0x10] sm:$0xff]
        %v2526 = vld [vmem:[#allocation4 + $0x18] sm:$0xff]
        %v2527 = vld [vmem:[#allocation4 + $0x20] sm:$0xff]
        %v2528 = vld [vmem:[#allocation4 + $0x28] sm:$0xff]
        %v2529 = vld [vmem:[#allocation4 + $0x30] sm:$0xff]
        %v2530 = vld [vmem:[#allocation4 + $0x38] sm:$0xff]
        %v2531 = vld [vmem:[#allocation4 + $0x40] sm:$0xff]
        %v2532 = vld [vmem:[#allocation4 + $0x48] sm:$0xff]
        %v2533 = vld [vmem:[#allocation4 + $0x50] sm:$0xff]
        %v2534 = vld [vmem:[#allocation4 + $0x58] sm:$0xff]
        %v2535 = vld [vmem:[#allocation4 + $0x60] sm:$0xff]
        %v2536 = vld [vmem:[#allocation4 + $0x68] sm:$0xff]
        %v2537 = vld [vmem:[#allocation4 + $0x70] sm:$0xff]
        %v2538 = vld [vmem:[#allocation4 + $0x78] sm:$0xff]
        %v2539 = vld [vmem:[%s27] sm:$0x1]
        %v2541 = vsel %vm1456, %v2449, 0
        %v2544 = vsel %vm1456, %v2451, 0
        %2546 = vmatprep.subr.mxu0 0.0
        %2547 = vmatpush1.xpose.msra.mxu0 %v2544
        %2548 = vmatprep.subr.mxu0 0.0
        %2549 = vmatpush1.xpose.msra.mxu0 0.0
        %2550 = vmatprep.subr.mxu0 0.0
        %2551 = vmatpush1.xpose.msra.mxu0 0.0
        %2552 = vmatprep.subr.mxu0 0.0
        %2553 = vmatpush1.xpose.msra.mxu0 0.0
        %2554 = vmatprep.subr.mxu0 0.0
        %2555 = vmatpush1.xpose.msra.mxu0 0.0
        %2556 = vmatprep.subr.mxu0 0.0
        %2557 = vmatpush1.xpose.msra.mxu0 0.0
        %2558 = vmatprep.subr.mxu0 0.0
        %2559 = vmatpush1.xpose.msra.mxu0 0.0
        %2560 = vmatprep.subr.mxu0 0.0
        %2561 = vmatpush1.xpose.msra.mxu0 0.0
        %2562 = vmatprep.subr.mxu0 0.0
        %2563 = vmatpush1.xpose.msra.mxu0 0.0
        %2564 = vmatprep.subr.mxu0 0.0
        %2565 = vmatpush1.xpose.msra.mxu0 0.0
        %2566 = vmatprep.subr.mxu0 0.0
        %2567 = vmatpush1.xpose.msra.mxu0 0.0
        %2568 = vmatprep.subr.mxu0 0.0
        %2569 = vmatpush1.xpose.msra.mxu0 0.0
        %2570 = vmatprep.subr.mxu0 0.0
        %2571 = vmatpush1.xpose.msra.mxu0 0.0
        %2572 = vmatprep.subr.mxu0 0.0
        %2573 = vmatpush1.xpose.msra.mxu0 0.0
        %2574 = vmatprep.subr.mxu0 0.0
        %2575 = vmatpush1.xpose.msra.mxu0 0.0
        %2576 = vmatprep.subr.mxu0 0.0
        %2577 = vmatpush1.xpose.msra.mxu0 0.0
        %2578 = vmatprep.subr.mxu0 0.0
        %2579 = vmatpush1.xpose.msra.mxu0 0.0
        %2580 = vmatprep.subr.mxu0 0.0
        %2581 = vmatpush1.xpose.msra.mxu0 0.0
        %2582 = vmatprep.subr.mxu0 0.0
        %2583 = vmatpush1.xpose.msra.mxu0 0.0
        %2584 = vmatprep.subr.mxu0 0.0
        %2585 = vmatpush1.xpose.msra.mxu0 0.0
        %2586 = vmatprep.subr.mxu0 0.0
        %2587 = vmatpush1.xpose.msra.mxu0 0.0
        %2588 = vmatprep.subr.mxu0 0.0
        %2589 = vmatpush1.xpose.msra.mxu0 0.0
        %2590 = vmatprep.subr.mxu0 0.0
        %2591 = vmatpush1.xpose.msra.mxu0 0.0
        %2592 = vmatprep.subr.mxu0 0.0
        %2593 = vmatpush1.xpose.msra.mxu0 0.0
        %2594 = vmatprep.subr.mxu0 0.0
        %2595 = vmatpush1.xpose.msra.mxu0 0.0
        %2596 = vmatprep.subr.mxu0 0.0
        %2597 = vmatpush1.xpose.msra.mxu0 0.0
        %2598 = vmatprep.subr.mxu0 0.0
        %2599 = vmatpush1.xpose.msra.mxu0 0.0
        %2600 = vmatprep.subr.mxu0 0.0
        %2601 = vmatpush1.xpose.msra.mxu0 0.0
        %2602 = vmatprep.subr.mxu0 0.0
        %2603 = vmatpush1.xpose.msra.mxu0 0.0
        %2604 = vmatprep.subr.mxu0 0.0
        %2605 = vmatpush1.xpose.msra.mxu0 0.0
        %2606 = vmatprep.subr.mxu0 0.0
        %2607 = vmatpush1.xpose.msra.mxu0 0.0
        %2608 = vmatprep.subr.mxu0 0.0
        %2609 = vmatpush1.xpose.msra.mxu0 0.0
        %2610 = vmatprep.mubr.f32.mxu0 0.0
        %2611 = vmatmul.mubr.f32.gmra.mrb[0].mxu0 %v2541
        %v2612 = vpop.f32.mrb[0].mxu0
        %v2613 = vadd.f32 0.0, %v2612
        %v2614 = vpop.f32.mrb[0].mxu0
        %2615 = vdwg.mxu0
        %v2616 = vmul.f32 %v2613, 0.17677669
        %v2617 = vsel %vm1541, %v2616, -inf
        %2618 = vmax.xlane.f32.xlu0 %v2617
        %v2619 = vpop.xlane.xlu0 %2618
        %v2620 = vsub.f32 %v2616, %v2619
        %v2621 = vmul.f32 %v2620, 1.442695
        %v2622 = vpow.pop %v2621
        %v2623 = vsel %vm1541, %v2622, 0.0
        %2624 = vadd.xlane.f32.xlu0 %v2623
        %v2625 = vpop.xlane.xlu0 %2624
        %v2626 = vrcp.pop %v2625
        %v2627 = vmul.f32 %v2622, %v2626
        %v2629 = vsel %vm1541, %v2627, 0
        %2631 = vmatprep.subr.mxu0 0.0
        %2632 = vmatpush1.msra.mxu0 %v2520
        %2633 = vmatprep.subr.mxu0 0.0
        %2634 = vmatpush1.msra.mxu0 0.0
        %2635 = vmatprep.subr.mxu0 0.0
        %2636 = vmatpush1.msra.mxu0 0.0
        %2637 = vmatprep.subr.mxu0 0.0
        %2638 = vmatpush1.msra.mxu0 0.0
        %2639 = vmatprep.subr.mxu0 0.0
        %2640 = vmatpush1.msra.mxu0 0.0
        %2641 = vmatprep.subr.mxu0 0.0
        %2642 = vmatpush1.msra.mxu0 0.0
        %2643 = vmatprep.subr.mxu0 0.0
        %2644 = vmatpush1.msra.mxu0 0.0
        %2645 = vmatprep.subr.mxu0 0.0
        %2646 = vmatpush1.msra.mxu0 0.0
        %2647 = vmatprep.subr.mxu0 0.0
        %2648 = vmatpush1.msra.mxu0 0.0
        %2649 = vmatprep.subr.mxu0 0.0
        %2650 = vmatpush1.msra.mxu0 0.0
        %2651 = vmatprep.subr.mxu0 0.0
        %2652 = vmatpush1.msra.mxu0 0.0
        %2653 = vmatprep.subr.mxu0 0.0
        %2654 = vmatpush1.msra.mxu0 0.0
        %2655 = vmatprep.subr.mxu0 0.0
        %2656 = vmatpush1.msra.mxu0 0.0
        %2657 = vmatprep.subr.mxu0 0.0
        %2658 = vmatpush1.msra.mxu0 0.0
        %2659 = vmatprep.subr.mxu0 0.0
        %2660 = vmatpush1.msra.mxu0 0.0
        %2661 = vmatprep.subr.mxu0 0.0
        %2662 = vmatpush1.msra.mxu0 0.0
        %2663 = vmatprep.subr.mxu0 0.0
        %2664 = vmatpush1.msra.mxu0 0.0
        %2665 = vmatprep.subr.mxu0 0.0
        %2666 = vmatpush1.msra.mxu0 0.0
        %2667 = vmatprep.subr.mxu0 0.0
        %2668 = vmatpush1.msra.mxu0 0.0
        %2669 = vmatprep.subr.mxu0 0.0
        %2670 = vmatpush1.msra.mxu0 0.0
        %2671 = vmatprep.subr.mxu0 0.0
        %2672 = vmatpush1.msra.mxu0 0.0
        %2673 = vmatprep.subr.mxu0 0.0
        %2674 = vmatpush1.msra.mxu0 0.0
        %2675 = vmatprep.subr.mxu0 0.0
        %2676 = vmatpush1.msra.mxu0 0.0
        %2677 = vmatprep.subr.mxu0 0.0
        %2678 = vmatpush1.msra.mxu0 0.0
        %2679 = vmatprep.subr.mxu0 0.0
        %2680 = vmatpush1.msra.mxu0 0.0
        %2681 = vmatprep.subr.mxu0 0.0
        %2682 = vmatpush1.msra.mxu0 0.0
        %2683 = vmatprep.subr.mxu0 0.0
        %2684 = vmatpush1.msra.mxu0 0.0
        %2685 = vmatprep.subr.mxu0 0.0
        %2686 = vmatpush1.msra.mxu0 0.0
        %2687 = vmatprep.subr.mxu0 0.0
        %2688 = vmatpush1.msra.mxu0 0.0
        %2689 = vmatprep.subr.mxu0 0.0
        %2690 = vmatpush1.msra.mxu0 0.0
        %2691 = vmatprep.subr.mxu0 0.0
        %2692 = vmatpush1.msra.mxu0 0.0
        %2693 = vmatprep.subr.mxu0 0.0
        %2694 = vmatpush1.msra.mxu0 0.0
        %2695 = vmatprep.mubr.f32.mxu0 0.0
        %2696 = vmatmul.mubr.f32.gmra.mrb[0].mxu0 %v2629
        %v2697 = vpop.f32.mrb[0].mxu0
        %v2698 = vadd.f32 0.0, %v2697
        %v2699 = vpop.f32.mrb[0].mxu0
        %2700 = vdwg.mxu0
        %2701 = vrot.lane.b32.xlu0 %v2449, 96
        %v2702 = vpop.permute.xlu0 %2701
        %2703 = vrot.lane.b32.xlu0 %v2451, 96
        %v2704 = vpop.permute.xlu0 %2703
        %v2705 = vsel %vm1456, %v2702, 0
        %v2707 = vsel %vm1456, %v2704, 0
        %2709 = vmatprep.subr.mxu0 0.0
        %2710 = vmatpush1.xpose.msra.mxu0 %v2707
        %2711 = vmatprep.subr.mxu0 0.0
        %2712 = vmatpush1.xpose.msra.mxu0 0.0
        %2713 = vmatprep.subr.mxu0 0.0
        %2714 = vmatpush1.xpose.msra.mxu0 0.0
        %2715 = vmatprep.subr.mxu0 0.0
        %2716 = vmatpush1.xpose.msra.mxu0 0.0
        %2717 = vmatprep.subr.mxu0 0.0
        %2718 = vmatpush1.xpose.msra.mxu0 0.0
        %2719 = vmatprep.subr.mxu0 0.0
        %2720 = vmatpush1.xpose.msra.mxu0 0.0
        %2721 = vmatprep.subr.mxu0 0.0
        %2722 = vmatpush1.xpose.msra.mxu0 0.0
        %2723 = vmatprep.subr.mxu0 0.0
        %2724 = vmatpush1.xpose.msra.mxu0 0.0
        %2725 = vmatprep.subr.mxu0 0.0
        %2726 = vmatpush1.xpose.msra.mxu0 0.0
        %2727 = vmatprep.subr.mxu0 0.0
        %2728 = vmatpush1.xpose.msra.mxu0 0.0
        %2729 = vmatprep.subr.mxu0 0.0
        %2730 = vmatpush1.xpose.msra.mxu0 0.0
        %2731 = vmatprep.subr.mxu0 0.0
        %2732 = vmatpush1.xpose.msra.mxu0 0.0
        %2733 = vmatprep.subr.mxu0 0.0
        %2734 = vmatpush1.xpose.msra.mxu0 0.0
        %2735 = vmatprep.subr.mxu0 0.0
        %2736 = vmatpush1.xpose.msra.mxu0 0.0
        %2737 = vmatprep.subr.mxu0 0.0
        %2738 = vmatpush1.xpose.msra.mxu0 0.0
        %2739 = vmatprep.subr.mxu0 0.0
        %2740 = vmatpush1.xpose.msra.mxu0 0.0
        %2741 = vmatprep.subr.mxu0 0.0
        %2742 = vmatpush1.xpose.msra.mxu0 0.0
        %2743 = vmatprep.subr.mxu0 0.0
        %2744 = vmatpush1.xpose.msra.mxu0 0.0
        %2745 = vmatprep.subr.mxu0 0.0
        %2746 = vmatpush1.xpose.msra.mxu0 0.0
        %2747 = vmatprep.subr.mxu0 0.0
        %2748 = vmatpush1.xpose.msra.mxu0 0.0
        %2749 = vmatprep.subr.mxu0 0.0
        %2750 = vmatpush1.xpose.msra.mxu0 0.0
        %2751 = vmatprep.subr.mxu0 0.0
        %2752 = vmatpush1.xpose.msra.mxu0 0.0
        %2753 = vmatprep.subr.mxu0 0.0
        %2754 = vmatpush1.xpose.msra.mxu0 0.0
        %2755 = vmatprep.subr.mxu0 0.0
        %2756 = vmatpush1.xpose.msra.mxu0 0.0
        %2757 = vmatprep.subr.mxu0 0.0
        %2758 = vmatpush1.xpose.msra.mxu0 0.0
        %2759 = vmatprep.subr.mxu0 0.0
        %2760 = vmatpush1.xpose.msra.mxu0 0.0
        %2761 = vmatprep.subr.mxu0 0.0
        %2762 = vmatpush1.xpose.msra.mxu0 0.0
        %2763 = vmatprep.subr.mxu0 0.0
        %2764 = vmatpush1.xpose.msra.mxu0 0.0
        %2765 = vmatprep.subr.mxu0 0.0
        %2766 = vmatpush1.xpose.msra.mxu0 0.0
        %2767 = vmatprep.subr.mxu0 0.0
        %2768 = vmatpush1.xpose.msra.mxu0 0.0
        %2769 = vmatprep.subr.mxu0 0.0
        %2770 = vmatpush1.xpose.msra.mxu0 0.0
        %2771 = vmatprep.subr.mxu0 0.0
        %2772 = vmatpush1.xpose.msra.mxu0 0.0
        %2773 = vmatprep.mubr.f32.mxu0 0.0
        %2774 = vmatmul.mubr.f32.gmra.mrb[0].mxu0 %v2705
        %v2775 = vpop.f32.mrb[0].mxu0
        %v2776 = vadd.f32 0.0, %v2775
        %v2777 = vpop.f32.mrb[0].mxu0
        %2778 = vdwg.mxu0
        %v2779 = vmul.f32 %v2776, 0.17677669
        %v2780 = vsel %vm1541, %v2779, -inf
        %2781 = vmax.xlane.f32.xlu0 %v2780
        %v2782 = vpop.xlane.xlu0 %2781
        %v2783 = vsub.f32 %v2779, %v2782
        %v2784 = vmul.f32 %v2783, 1.442695
        %v2785 = vpow.pop %v2784
        %v2786 = vsel %vm1541, %v2785, 0.0
        %2787 = vadd.xlane.f32.xlu0 %v2786
        %v2788 = vpop.xlane.xlu0 %2787
        %v2789 = vrcp.pop %v2788
        %v2790 = vmul.f32 %v2785, %v2789
        %2792 = vrot.lane.b32.xlu0 %v2520, 96
        %v2793 = vpop.permute.xlu0 %2792
        %v2796 = vsel %vm1541, %v2790, 0
        %2798 = vmatprep.subr.mxu0 0.0
        %2799 = vmatpush1.msra.mxu0 %v2793
        %2800 = vmatprep.subr.mxu0 0.0
        %2801 = vmatpush1.msra.mxu0 0.0
        %2802 = vmatprep.subr.mxu0 0.0
        %2803 = vmatpush1.msra.mxu0 0.0
        %2804 = vmatprep.subr.mxu0 0.0
        %2805 = vmatpush1.msra.mxu0 0.0
        %2806 = vmatprep.subr.mxu0 0.0
        %2807 = vmatpush1.msra.mxu0 0.0
        %2808 = vmatprep.subr.mxu0 0.0
        %2809 = vmatpush1.msra.mxu0 0.0
        %2810 = vmatprep.subr.mxu0 0.0
        %2811 = vmatpush1.msra.mxu0 0.0
        %2812 = vmatprep.subr.mxu0 0.0
        %2813 = vmatpush1.msra.mxu0 0.0
        %2814 = vmatprep.subr.mxu0 0.0
        %2815 = vmatpush1.msra.mxu0 0.0
        %2816 = vmatprep.subr.mxu0 0.0
        %2817 = vmatpush1.msra.mxu0 0.0
        %2818 = vmatprep.subr.mxu0 0.0
        %2819 = vmatpush1.msra.mxu0 0.0
        %2820 = vmatprep.subr.mxu0 0.0
        %2821 = vmatpush1.msra.mxu0 0.0
        %2822 = vmatprep.subr.mxu0 0.0
        %2823 = vmatpush1.msra.mxu0 0.0
        %2824 = vmatprep.subr.mxu0 0.0
        %2825 = vmatpush1.msra.mxu0 0.0
        %2826 = vmatprep.subr.mxu0 0.0
        %2827 = vmatpush1.msra.mxu0 0.0
        %2828 = vmatprep.subr.mxu0 0.0
        %2829 = vmatpush1.msra.mxu0 0.0
        %2830 = vmatprep.subr.mxu0 0.0
        %2831 = vmatpush1.msra.mxu0 0.0
        %2832 = vmatprep.subr.mxu0 0.0
        %2833 = vmatpush1.msra.mxu0 0.0
        %2834 = vmatprep.subr.mxu0 0.0
        %2835 = vmatpush1.msra.mxu0 0.0
        %2836 = vmatprep.subr.mxu0 0.0
        %2837 = vmatpush1.msra.mxu0 0.0
        %2838 = vmatprep.subr.mxu0 0.0
        %2839 = vmatpush1.msra.mxu0 0.0
        %2840 = vmatprep.subr.mxu0 0.0
        %2841 = vmatpush1.msra.mxu0 0.0
        %2842 = vmatprep.subr.mxu0 0.0
        %2843 = vmatpush1.msra.mxu0 0.0
        %2844 = vmatprep.subr.mxu0 0.0
        %2845 = vmatpush1.msra.mxu0 0.0
        %2846 = vmatprep.subr.mxu0 0.0
        %2847 = vmatpush1.msra.mxu0 0.0
        %2848 = vmatprep.subr.mxu0 0.0
        %2849 = vmatpush1.msra.mxu0 0.0
        %2850 = vmatprep.subr.mxu0 0.0
        %2851 = vmatpush1.msra.mxu0 0.0
        %2852 = vmatprep.subr.mxu0 0.0
        %2853 = vmatpush1.msra.mxu0 0.0
        %2854 = vmatprep.subr.mxu0 0.0
        %2855 = vmatpush1.msra.mxu0 0.0
        %2856 = vmatprep.subr.mxu0 0.0
        %2857 = vmatpush1.msra.mxu0 0.0
        %2858 = vmatprep.subr.mxu0 0.0
        %2859 = vmatpush1.msra.mxu0 0.0
        %2860 = vmatprep.subr.mxu0 0.0
        %2861 = vmatpush1.msra.mxu0 0.0
        %2862 = vmatprep.mubr.f32.mxu0 0.0
        %2863 = vmatmul.mubr.f32.gmra.mrb[0].mxu0 %v2796
        %v2864 = vpop.f32.mrb[0].mxu0
        %v2865 = vadd.f32 0.0, %v2864
        %v2866 = vpop.f32.mrb[0].mxu0
        %2867 = vdwg.mxu0
        %v2869 = vsel %vm1456, %v2865, 0
        %2871 = vmatprep.subr.mxu0 0.0
        %2872 = vmatpush1.msra.mxu0 %v2527
        %2873 = vmatprep.subr.mxu0 0.0
        %2874 = vmatpush1.msra.mxu0 %v2528
        %2875 = vmatprep.subr.mxu0 0.0
        %2876 = vmatpush1.msra.mxu0 %v2529
        %2877 = vmatprep.subr.mxu0 0.0
        %2878 = vmatpush1.msra.mxu0 %v2530
        %2879 = vmatprep.subr.mxu0 0.0
        %2880 = vmatpush1.msra.mxu0 0.0
        %2881 = vmatprep.subr.mxu0 0.0
        %2882 = vmatpush1.msra.mxu0 0.0
        %2883 = vmatprep.subr.mxu0 0.0
        %2884 = vmatpush1.msra.mxu0 0.0
        %2885 = vmatprep.subr.mxu0 0.0
        %2886 = vmatpush1.msra.mxu0 0.0
        %2887 = vmatprep.subr.mxu0 0.0
        %2888 = vmatpush1.msra.mxu0 0.0
        %2889 = vmatprep.subr.mxu0 0.0
        %2890 = vmatpush1.msra.mxu0 0.0
        %2891 = vmatprep.subr.mxu0 0.0
        %2892 = vmatpush1.msra.mxu0 0.0
        %2893 = vmatprep.subr.mxu0 0.0
        %2894 = vmatpush1.msra.mxu0 0.0
        %2895 = vmatprep.subr.mxu0 0.0
        %2896 = vmatpush1.msra.mxu0 0.0
        %2897 = vmatprep.subr.mxu0 0.0
        %2898 = vmatpush1.msra.mxu0 0.0
        %2899 = vmatprep.subr.mxu0 0.0
        %2900 = vmatpush1.msra.mxu0 0.0
        %2901 = vmatprep.subr.mxu0 0.0
        %2902 = vmatpush1.msra.mxu0 0.0
        %2903 = vmatprep.subr.mxu0 0.0
        %2904 = vmatpush1.msra.mxu0 0.0
        %2905 = vmatprep.subr.mxu0 0.0
        %2906 = vmatpush1.msra.mxu0 0.0
        %2907 = vmatprep.subr.mxu0 0.0
        %2908 = vmatpush1.msra.mxu0 0.0
        %2909 = vmatprep.subr.mxu0 0.0
        %2910 = vmatpush1.msra.mxu0 0.0
        %2911 = vmatprep.subr.mxu0 0.0
        %2912 = vmatpush1.msra.mxu0 0.0
        %2913 = vmatprep.subr.mxu0 0.0
        %2914 = vmatpush1.msra.mxu0 0.0
        %2915 = vmatprep.subr.mxu0 0.0
        %2916 = vmatpush1.msra.mxu0 0.0
        %2917 = vmatprep.subr.mxu0 0.0
        %2918 = vmatpush1.msra.mxu0 0.0
        %2919 = vmatprep.subr.mxu0 0.0
        %2920 = vmatpush1.msra.mxu0 0.0
        %2921 = vmatprep.subr.mxu0 0.0
        %2922 = vmatpush1.msra.mxu0 0.0
        %2923 = vmatprep.subr.mxu0 0.0
        %2924 = vmatpush1.msra.mxu0 0.0
        %2925 = vmatprep.subr.mxu0 0.0
        %2926 = vmatpush1.msra.mxu0 0.0
        %2927 = vmatprep.subr.mxu0 0.0
        %2928 = vmatpush1.msra.mxu0 0.0
        %2929 = vmatprep.subr.mxu0 0.0
        %2930 = vmatpush1.msra.mxu0 0.0
        %2931 = vmatprep.subr.mxu0 0.0
        %2932 = vmatpush1.msra.mxu0 0.0
        %2933 = vmatprep.subr.mxu0 0.0
        %2934 = vmatpush1.msra.mxu0 0.0
        %2935 = vmatprep.mubr.f32.mxu0 0.0
        %2936 = vmatmul.mubr.f32.gmra.mrb[0].mxu0 %v2869
        %v2937 = vpop.f32.mrb[0].mxu0
        %v2938 = vadd.f32 0.0, %v2937
        %v2939 = vpop.f32.mrb[0].mxu0
        %2940 = vdwg.mxu0
        %v2942 = vsel %vm1456, %v2698, 0
        %2944 = vmatprep.subr.mxu0 0.0
        %2945 = vmatpush1.msra.mxu0 %v2523
        %2946 = vmatprep.subr.mxu0 0.0
        %2947 = vmatpush1.msra.mxu0 %v2524
        %2948 = vmatprep.subr.mxu0 0.0
        %2949 = vmatpush1.msra.mxu0 %v2525
        %2950 = vmatprep.subr.mxu0 0.0
        %2951 = vmatpush1.msra.mxu0 %v2526
        %2952 = vmatprep.subr.mxu0 0.0
        %2953 = vmatpush1.msra.mxu0 0.0
        %2954 = vmatprep.subr.mxu0 0.0
        %2955 = vmatpush1.msra.mxu0 0.0
        %2956 = vmatprep.subr.mxu0 0.0
        %2957 = vmatpush1.msra.mxu0 0.0
        %2958 = vmatprep.subr.mxu0 0.0
        %2959 = vmatpush1.msra.mxu0 0.0
        %2960 = vmatprep.subr.mxu0 0.0
        %2961 = vmatpush1.msra.mxu0 0.0
        %2962 = vmatprep.subr.mxu0 0.0
        %2963 = vmatpush1.msra.mxu0 0.0
        %2964 = vmatprep.subr.mxu0 0.0
        %2965 = vmatpush1.msra.mxu0 0.0
        %2966 = vmatprep.subr.mxu0 0.0
        %2967 = vmatpush1.msra.mxu0 0.0
        %2968 = vmatprep.subr.mxu0 0.0
        %2969 = vmatpush1.msra.mxu0 0.0
        %2970 = vmatprep.subr.mxu0 0.0
        %2971 = vmatpush1.msra.mxu0 0.0
        %2972 = vmatprep.subr.mxu0 0.0
        %2973 = vmatpush1.msra.mxu0 0.0
        %2974 = vmatprep.subr.mxu0 0.0
        %2975 = vmatpush1.msra.mxu0 0.0
        %2976 = vmatprep.subr.mxu0 0.0
        %2977 = vmatpush1.msra.mxu0 0.0
        %2978 = vmatprep.subr.mxu0 0.0
        %2979 = vmatpush1.msra.mxu0 0.0
        %2980 = vmatprep.subr.mxu0 0.0
        %2981 = vmatpush1.msra.mxu0 0.0
        %2982 = vmatprep.subr.mxu0 0.0
        %2983 = vmatpush1.msra.mxu0 0.0
        %2984 = vmatprep.subr.mxu0 0.0
        %2985 = vmatpush1.msra.mxu0 0.0
        %2986 = vmatprep.subr.mxu0 0.0
        %2987 = vmatpush1.msra.mxu0 0.0
        %2988 = vmatprep.subr.mxu0 0.0
        %2989 = vmatpush1.msra.mxu0 0.0
        %2990 = vmatprep.subr.mxu0 0.0
        %2991 = vmatpush1.msra.mxu0 0.0
        %2992 = vmatprep.subr.mxu0 0.0
        %2993 = vmatpush1.msra.mxu0 0.0
        %2994 = vmatprep.subr.mxu0 0.0
        %2995 = vmatpush1.msra.mxu0 0.0
        %2996 = vmatprep.subr.mxu0 0.0
        %2997 = vmatpush1.msra.mxu0 0.0
        %2998 = vmatprep.subr.mxu0 0.0
        %2999 = vmatpush1.msra.mxu0 0.0
        %3000 = vmatprep.subr.mxu0 0.0
        %3001 = vmatpush1.msra.mxu0 0.0
        %3002 = vmatprep.subr.mxu0 0.0
        %3003 = vmatpush1.msra.mxu0 0.0
        %3004 = vmatprep.subr.mxu0 0.0
        %3005 = vmatpush1.msra.mxu0 0.0
        %3006 = vmatprep.subr.mxu0 0.0
        %3007 = vmatpush1.msra.mxu0 0.0
        %3008 = vmatprep.mubr.f32.mxu0 0.0
        %3009 = vmatmul.mubr.f32.gmra.mrb[0].mxu0 %v2942
        %v3010 = vpop.f32.mrb[0].mxu0
        %v3011 = vadd.f32 %v2938, %v3010
        %v3012 = vpop.f32.mrb[0].mxu0
        %3013 = vdwg.mxu0
        %3014 = vrot.lane.b32.xlu0 %v2449, 64
        %v3015 = vpop.permute.xlu0 %3014
        %3016 = vrot.lane.b32.xlu0 %v2451, 64
        %v3017 = vpop.permute.xlu0 %3016
        %v3018 = vsel %vm1456, %v3015, 0
        %v3020 = vsel %vm1456, %v3017, 0
        %3022 = vmatprep.subr.mxu0 0.0
        %3023 = vmatpush1.xpose.msra.mxu0 %v3020
        %3024 = vmatprep.subr.mxu0 0.0
        %3025 = vmatpush1.xpose.msra.mxu0 0.0
        %3026 = vmatprep.subr.mxu0 0.0
        %3027 = vmatpush1.xpose.msra.mxu0 0.0
        %3028 = vmatprep.subr.mxu0 0.0
        %3029 = vmatpush1.xpose.msra.mxu0 0.0
        %3030 = vmatprep.subr.mxu0 0.0
        %3031 = vmatpush1.xpose.msra.mxu0 0.0
        %3032 = vmatprep.subr.mxu0 0.0
        %3033 = vmatpush1.xpose.msra.mxu0 0.0
        %3034 = vmatprep.subr.mxu0 0.0
        %3035 = vmatpush1.xpose.msra.mxu0 0.0
        %3036 = vmatprep.subr.mxu0 0.0
        %3037 = vmatpush1.xpose.msra.mxu0 0.0
        %3038 = vmatprep.subr.mxu0 0.0
        %3039 = vmatpush1.xpose.msra.mxu0 0.0
        %3040 = vmatprep.subr.mxu0 0.0
        %3041 = vmatpush1.xpose.msra.mxu0 0.0
        %3042 = vmatprep.subr.mxu0 0.0
        %3043 = vmatpush1.xpose.msra.mxu0 0.0
        %3044 = vmatprep.subr.mxu0 0.0
        %3045 = vmatpush1.xpose.msra.mxu0 0.0
        %3046 = vmatprep.subr.mxu0 0.0
        %3047 = vmatpush1.xpose.msra.mxu0 0.0
        %3048 = vmatprep.subr.mxu0 0.0
        %3049 = vmatpush1.xpose.msra.mxu0 0.0
        %3050 = vmatprep.subr.mxu0 0.0
        %3051 = vmatpush1.xpose.msra.mxu0 0.0
        %3052 = vmatprep.subr.mxu0 0.0
        %3053 = vmatpush1.xpose.msra.mxu0 0.0
        %3054 = vmatprep.subr.mxu0 0.0
        %3055 = vmatpush1.xpose.msra.mxu0 0.0
        %3056 = vmatprep.subr.mxu0 0.0
        %3057 = vmatpush1.xpose.msra.mxu0 0.0
        %3058 = vmatprep.subr.mxu0 0.0
        %3059 = vmatpush1.xpose.msra.mxu0 0.0
        %3060 = vmatprep.subr.mxu0 0.0
        %3061 = vmatpush1.xpose.msra.mxu0 0.0
        %3062 = vmatprep.subr.mxu0 0.0
        %3063 = vmatpush1.xpose.msra.mxu0 0.0
        %3064 = vmatprep.subr.mxu0 0.0
        %3065 = vmatpush1.xpose.msra.mxu0 0.0
        %3066 = vmatprep.subr.mxu0 0.0
        %3067 = vmatpush1.xpose.msra.mxu0 0.0
        %3068 = vmatprep.subr.mxu0 0.0
        %3069 = vmatpush1.xpose.msra.mxu0 0.0
        %3070 = vmatprep.subr.mxu0 0.0
        %3071 = vmatpush1.xpose.msra.mxu0 0.0
        %3072 = vmatprep.subr.mxu0 0.0
        %3073 = vmatpush1.xpose.msra.mxu0 0.0
        %3074 = vmatprep.subr.mxu0 0.0
        %3075 = vmatpush1.xpose.msra.mxu0 0.0
        %3076 = vmatprep.subr.mxu0 0.0
        %3077 = vmatpush1.xpose.msra.mxu0 0.0
        %3078 = vmatprep.subr.mxu0 0.0
        %3079 = vmatpush1.xpose.msra.mxu0 0.0
        %3080 = vmatprep.subr.mxu0 0.0
        %3081 = vmatpush1.xpose.msra.mxu0 0.0
        %3082 = vmatprep.subr.mxu0 0.0
        %3083 = vmatpush1.xpose.msra.mxu0 0.0
        %3084 = vmatprep.subr.mxu0 0.0
        %3085 = vmatpush1.xpose.msra.mxu0 0.0
        %3086 = vmatprep.mubr.f32.mxu0 0.0
        %3087 = vmatmul.mubr.f32.gmra.mrb[0].mxu0 %v3018
        %v3088 = vpop.f32.mrb[0].mxu0
        %v3089 = vadd.f32 0.0, %v3088
        %v3090 = vpop.f32.mrb[0].mxu0
        %3091 = vdwg.mxu0
        %v3092 = vmul.f32 %v3089, 0.17677669
        %v3093 = vsel %vm1541, %v3092, -inf
        %3094 = vmax.xlane.f32.xlu0 %v3093
        %v3095 = vpop.xlane.xlu0 %3094
        %v3096 = vsub.f32 %v3092, %v3095
        %v3097 = vmul.f32 %v3096, 1.442695
        %v3098 = vpow.pop %v3097
        %v3099 = vsel %vm1541, %v3098, 0.0
        %3100 = vadd.xlane.f32.xlu0 %v3099
        %v3101 = vpop.xlane.xlu0 %3100
        %v3102 = vrcp.pop %v3101
        %v3103 = vmul.f32 %v3098, %v3102
        %3104 = vrot.lane.b32.xlu0 %v2520, 64
        %v3105 = vpop.permute.xlu0 %3104
        %v3108 = vsel %vm1541, %v3103, 0
        %3110 = vmatprep.subr.mxu0 0.0
        %3111 = vmatpush1.msra.mxu0 %v3105
        %3112 = vmatprep.subr.mxu0 0.0
        %3113 = vmatpush1.msra.mxu0 0.0
        %3114 = vmatprep.subr.mxu0 0.0
        %3115 = vmatpush1.msra.mxu0 0.0
        %3116 = vmatprep.subr.mxu0 0.0
        %3117 = vmatpush1.msra.mxu0 0.0
        %3118 = vmatprep.subr.mxu0 0.0
        %3119 = vmatpush1.msra.mxu0 0.0
        %3120 = vmatprep.subr.mxu0 0.0
        %3121 = vmatpush1.msra.mxu0 0.0
        %3122 = vmatprep.subr.mxu0 0.0
        %3123 = vmatpush1.msra.mxu0 0.0
        %3124 = vmatprep.subr.mxu0 0.0
        %3125 = vmatpush1.msra.mxu0 0.0
        %3126 = vmatprep.subr.mxu0 0.0
        %3127 = vmatpush1.msra.mxu0 0.0
        %3128 = vmatprep.subr.mxu0 0.0
        %3129 = vmatpush1.msra.mxu0 0.0
        %3130 = vmatprep.subr.mxu0 0.0
        %3131 = vmatpush1.msra.mxu0 0.0
        %3132 = vmatprep.subr.mxu0 0.0
        %3133 = vmatpush1.msra.mxu0 0.0
        %3134 = vmatprep.subr.mxu0 0.0
        %3135 = vmatpush1.msra.mxu0 0.0
        %3136 = vmatprep.subr.mxu0 0.0
        %3137 = vmatpush1.msra.mxu0 0.0
        %3138 = vmatprep.subr.mxu0 0.0
        %3139 = vmatpush1.msra.mxu0 0.0
        %3140 = vmatprep.subr.mxu0 0.0
        %3141 = vmatpush1.msra.mxu0 0.0
        %3142 = vmatprep.subr.mxu0 0.0
        %3143 = vmatpush1.msra.mxu0 0.0
        %3144 = vmatprep.subr.mxu0 0.0
        %3145 = vmatpush1.msra.mxu0 0.0
        %3146 = vmatprep.subr.mxu0 0.0
        %3147 = vmatpush1.msra.mxu0 0.0
        %3148 = vmatprep.subr.mxu0 0.0
        %3149 = vmatpush1.msra.mxu0 0.0
        %3150 = vmatprep.subr.mxu0 0.0
        %3151 = vmatpush1.msra.mxu0 0.0
        %3152 = vmatprep.subr.mxu0 0.0
        %3153 = vmatpush1.msra.mxu0 0.0
        %3154 = vmatprep.subr.mxu0 0.0
        %3155 = vmatpush1.msra.mxu0 0.0
        %3156 = vmatprep.subr.mxu0 0.0
        %3157 = vmatpush1.msra.mxu0 0.0
        %3158 = vmatprep.subr.mxu0 0.0
        %3159 = vmatpush1.msra.mxu0 0.0
        %3160 = vmatprep.subr.mxu0 0.0
        %3161 = vmatpush1.msra.mxu0 0.0
        %3162 = vmatprep.subr.mxu0 0.0
        %3163 = vmatpush1.msra.mxu0 0.0
        %3164 = vmatprep.subr.mxu0 0.0
        %3165 = vmatpush1.msra.mxu0 0.0
        %3166 = vmatprep.subr.mxu0 0.0
        %3167 = vmatpush1.msra.mxu0 0.0
        %3168 = vmatprep.subr.mxu0 0.0
        %3169 = vmatpush1.msra.mxu0 0.0
        %3170 = vmatprep.subr.mxu0 0.0
        %3171 = vmatpush1.msra.mxu0 0.0
        %3172 = vmatprep.subr.mxu0 0.0
        %3173 = vmatpush1.msra.mxu0 0.0
        %3174 = vmatprep.mubr.f32.mxu0 0.0
        %3175 = vmatmul.mubr.f32.gmra.mrb[0].mxu0 %v3108
        %v3176 = vpop.f32.mrb[0].mxu0
        %v3177 = vadd.f32 0.0, %v3176
        %v3178 = vpop.f32.mrb[0].mxu0
        %3179 = vdwg.mxu0
        %v3181 = vsel %vm1456, %v3177, 0
        %3183 = vmatprep.subr.mxu0 0.0
        %3184 = vmatpush1.msra.mxu0 %v2531
        %3185 = vmatprep.subr.mxu0 0.0
        %3186 = vmatpush1.msra.mxu0 %v2532
        %3187 = vmatprep.subr.mxu0 0.0
        %3188 = vmatpush1.msra.mxu0 %v2533
        %3189 = vmatprep.subr.mxu0 0.0
        %3190 = vmatpush1.msra.mxu0 %v2534
        %3191 = vmatprep.subr.mxu0 0.0
        %3192 = vmatpush1.msra.mxu0 0.0
        %3193 = vmatprep.subr.mxu0 0.0
        %3194 = vmatpush1.msra.mxu0 0.0
        %3195 = vmatprep.subr.mxu0 0.0
        %3196 = vmatpush1.msra.mxu0 0.0
        %3197 = vmatprep.subr.mxu0 0.0
        %3198 = vmatpush1.msra.mxu0 0.0
        %3199 = vmatprep.subr.mxu0 0.0
        %3200 = vmatpush1.msra.mxu0 0.0
        %3201 = vmatprep.subr.mxu0 0.0
        %3202 = vmatpush1.msra.mxu0 0.0
        %3203 = vmatprep.subr.mxu0 0.0
        %3204 = vmatpush1.msra.mxu0 0.0
        %3205 = vmatprep.subr.mxu0 0.0
        %3206 = vmatpush1.msra.mxu0 0.0
        %3207 = vmatprep.subr.mxu0 0.0
        %3208 = vmatpush1.msra.mxu0 0.0
        %3209 = vmatprep.subr.mxu0 0.0
        %3210 = vmatpush1.msra.mxu0 0.0
        %3211 = vmatprep.subr.mxu0 0.0
        %3212 = vmatpush1.msra.mxu0 0.0
        %3213 = vmatprep.subr.mxu0 0.0
        %3214 = vmatpush1.msra.mxu0 0.0
        %3215 = vmatprep.subr.mxu0 0.0
        %3216 = vmatpush1.msra.mxu0 0.0
        %3217 = vmatprep.subr.mxu0 0.0
        %3218 = vmatpush1.msra.mxu0 0.0
        %3219 = vmatprep.subr.mxu0 0.0
        %3220 = vmatpush1.msra.mxu0 0.0
        %3221 = vmatprep.subr.mxu0 0.0
        %3222 = vmatpush1.msra.mxu0 0.0
        %3223 = vmatprep.subr.mxu0 0.0
        %3224 = vmatpush1.msra.mxu0 0.0
        %3225 = vmatprep.subr.mxu0 0.0
        %3226 = vmatpush1.msra.mxu0 0.0
        %3227 = vmatprep.subr.mxu0 0.0
        %3228 = vmatpush1.msra.mxu0 0.0
        %3229 = vmatprep.subr.mxu0 0.0
        %3230 = vmatpush1.msra.mxu0 0.0
        %3231 = vmatprep.subr.mxu0 0.0
        %3232 = vmatpush1.msra.mxu0 0.0
        %3233 = vmatprep.subr.mxu0 0.0
        %3234 = vmatpush1.msra.mxu0 0.0
        %3235 = vmatprep.subr.mxu0 0.0
        %3236 = vmatpush1.msra.mxu0 0.0
        %3237 = vmatprep.subr.mxu0 0.0
        %3238 = vmatpush1.msra.mxu0 0.0
        %3239 = vmatprep.subr.mxu0 0.0
        %3240 = vmatpush1.msra.mxu0 0.0
        %3241 = vmatprep.subr.mxu0 0.0
        %3242 = vmatpush1.msra.mxu0 0.0
        %3243 = vmatprep.subr.mxu0 0.0
        %3244 = vmatpush1.msra.mxu0 0.0
        %3245 = vmatprep.subr.mxu0 0.0
        %3246 = vmatpush1.msra.mxu0 0.0
        %3247 = vmatprep.mubr.f32.mxu0 0.0
        %3248 = vmatmul.mubr.f32.gmra.mrb[0].mxu0 %v3181
        %v3249 = vpop.f32.mrb[0].mxu0
        %v3250 = vadd.f32 0.0, %v3249
        %v3251 = vpop.f32.mrb[0].mxu0
        %3252 = vdwg.mxu0
        %v3253 = vadd.f32 %v3011, %v3250
        %3254 = vrot.lane.b32.xlu0 %v2449, 32
        %v3255 = vpop.permute.xlu0 %3254
        %3256 = vrot.lane.b32.xlu0 %v2451, 32
        %v3257 = vpop.permute.xlu0 %3256
        %v3258 = vsel %vm1456, %v3255, 0
        %v3260 = vsel %vm1456, %v3257, 0
        %3262 = vmatprep.subr.mxu0 0.0
        %3263 = vmatpush1.xpose.msra.mxu0 %v3260
        %3264 = vmatprep.subr.mxu0 0.0
        %3265 = vmatpush1.xpose.msra.mxu0 0.0
        %3266 = vmatprep.subr.mxu0 0.0
        %3267 = vmatpush1.xpose.msra.mxu0 0.0
        %3268 = vmatprep.subr.mxu0 0.0
        %3269 = vmatpush1.xpose.msra.mxu0 0.0
        %3270 = vmatprep.subr.mxu0 0.0
        %3271 = vmatpush1.xpose.msra.mxu0 0.0
        %3272 = vmatprep.subr.mxu0 0.0
        %3273 = vmatpush1.xpose.msra.mxu0 0.0
        %3274 = vmatprep.subr.mxu0 0.0
        %3275 = vmatpush1.xpose.msra.mxu0 0.0
        %3276 = vmatprep.subr.mxu0 0.0
        %3277 = vmatpush1.xpose.msra.mxu0 0.0
        %3278 = vmatprep.subr.mxu0 0.0
        %3279 = vmatpush1.xpose.msra.mxu0 0.0
        %3280 = vmatprep.subr.mxu0 0.0
        %3281 = vmatpush1.xpose.msra.mxu0 0.0
        %3282 = vmatprep.subr.mxu0 0.0
        %3283 = vmatpush1.xpose.msra.mxu0 0.0
        %3284 = vmatprep.subr.mxu0 0.0
        %3285 = vmatpush1.xpose.msra.mxu0 0.0
        %3286 = vmatprep.subr.mxu0 0.0
        %3287 = vmatpush1.xpose.msra.mxu0 0.0
        %3288 = vmatprep.subr.mxu0 0.0
        %3289 = vmatpush1.xpose.msra.mxu0 0.0
        %3290 = vmatprep.subr.mxu0 0.0
        %3291 = vmatpush1.xpose.msra.mxu0 0.0
        %3292 = vmatprep.subr.mxu0 0.0
        %3293 = vmatpush1.xpose.msra.mxu0 0.0
        %3294 = vmatprep.subr.mxu0 0.0
        %3295 = vmatpush1.xpose.msra.mxu0 0.0
        %3296 = vmatprep.subr.mxu0 0.0
        %3297 = vmatpush1.xpose.msra.mxu0 0.0
        %3298 = vmatprep.subr.mxu0 0.0
        %3299 = vmatpush1.xpose.msra.mxu0 0.0
        %3300 = vmatprep.subr.mxu0 0.0
        %3301 = vmatpush1.xpose.msra.mxu0 0.0
        %3302 = vmatprep.subr.mxu0 0.0
        %3303 = vmatpush1.xpose.msra.mxu0 0.0
        %3304 = vmatprep.subr.mxu0 0.0
        %3305 = vmatpush1.xpose.msra.mxu0 0.0
        %3306 = vmatprep.subr.mxu0 0.0
        %3307 = vmatpush1.xpose.msra.mxu0 0.0
        %3308 = vmatprep.subr.mxu0 0.0
        %3309 = vmatpush1.xpose.msra.mxu0 0.0
        %3310 = vmatprep.subr.mxu0 0.0
        %3311 = vmatpush1.xpose.msra.mxu0 0.0
        %3312 = vmatprep.subr.mxu0 0.0
        %3313 = vmatpush1.xpose.msra.mxu0 0.0
        %3314 = vmatprep.subr.mxu0 0.0
        %3315 = vmatpush1.xpose.msra.mxu0 0.0
        %3316 = vmatprep.subr.mxu0 0.0
        %3317 = vmatpush1.xpose.msra.mxu0 0.0
        %3318 = vmatprep.subr.mxu0 0.0
        %3319 = vmatpush1.xpose.msra.mxu0 0.0
        %3320 = vmatprep.subr.mxu0 0.0
        %3321 = vmatpush1.xpose.msra.mxu0 0.0
        %3322 = vmatprep.subr.mxu0 0.0
        %3323 = vmatpush1.xpose.msra.mxu0 0.0
        %3324 = vmatprep.subr.mxu0 0.0
        %3325 = vmatpush1.xpose.msra.mxu0 0.0
        %3326 = vmatprep.mubr.f32.mxu0 0.0
        %3327 = vmatmul.mubr.f32.gmra.mrb[0].mxu0 %v3258
        %v3328 = vpop.f32.mrb[0].mxu0
        %v3329 = vadd.f32 0.0, %v3328
        %v3330 = vpop.f32.mrb[0].mxu0
        %3331 = vdwg.mxu0
        %v3332 = vmul.f32 %v3329, 0.17677669
        %v3333 = vsel %vm1541, %v3332, -inf
        %3334 = vmax.xlane.f32.xlu0 %v3333
        %v3335 = vpop.xlane.xlu0 %3334
        %v3336 = vsub.f32 %v3332, %v3335
        %v3337 = vmul.f32 %v3336, 1.442695
        %v3338 = vpow.pop %v3337
        %v3339 = vsel %vm1541, %v3338, 0.0
        %3340 = vadd.xlane.f32.xlu0 %v3339
        %v3341 = vpop.xlane.xlu0 %3340
        %v3342 = vrcp.pop %v3341
        %v3343 = vmul.f32 %v3338, %v3342
        %3344 = vrot.lane.b32.xlu0 %v2520, 32
        %v3345 = vpop.permute.xlu0 %3344
        %v3348 = vsel %vm1541, %v3343, 0
        %3350 = vmatprep.subr.mxu0 0.0
        %3351 = vmatpush1.msra.mxu0 %v3345
        %3352 = vmatprep.subr.mxu0 0.0
        %3353 = vmatpush1.msra.mxu0 0.0
        %3354 = vmatprep.subr.mxu0 0.0
        %3355 = vmatpush1.msra.mxu0 0.0
        %3356 = vmatprep.subr.mxu0 0.0
        %3357 = vmatpush1.msra.mxu0 0.0
        %3358 = vmatprep.subr.mxu0 0.0
        %3359 = vmatpush1.msra.mxu0 0.0
        %3360 = vmatprep.subr.mxu0 0.0
        %3361 = vmatpush1.msra.mxu0 0.0
        %3362 = vmatprep.subr.mxu0 0.0
        %3363 = vmatpush1.msra.mxu0 0.0
        %3364 = vmatprep.subr.mxu0 0.0
        %3365 = vmatpush1.msra.mxu0 0.0
        %3366 = vmatprep.subr.mxu0 0.0
        %3367 = vmatpush1.msra.mxu0 0.0
        %3368 = vmatprep.subr.mxu0 0.0
        %3369 = vmatpush1.msra.mxu0 0.0
        %3370 = vmatprep.subr.mxu0 0.0
        %3371 = vmatpush1.msra.mxu0 0.0
        %3372 = vmatprep.subr.mxu0 0.0
        %3373 = vmatpush1.msra.mxu0 0.0
        %3374 = vmatprep.subr.mxu0 0.0
        %3375 = vmatpush1.msra.mxu0 0.0
        %3376 = vmatprep.subr.mxu0 0.0
        %3377 = vmatpush1.msra.mxu0 0.0
        %3378 = vmatprep.subr.mxu0 0.0
        %3379 = vmatpush1.msra.mxu0 0.0
        %3380 = vmatprep.subr.mxu0 0.0
        %3381 = vmatpush1.msra.mxu0 0.0
        %3382 = vmatprep.subr.mxu0 0.0
        %3383 = vmatpush1.msra.mxu0 0.0
        %3384 = vmatprep.subr.mxu0 0.0
        %3385 = vmatpush1.msra.mxu0 0.0
        %3386 = vmatprep.subr.mxu0 0.0
        %3387 = vmatpush1.msra.mxu0 0.0
        %3388 = vmatprep.subr.mxu0 0.0
        %3389 = vmatpush1.msra.mxu0 0.0
        %3390 = vmatprep.subr.mxu0 0.0
        %3391 = vmatpush1.msra.mxu0 0.0
        %3392 = vmatprep.subr.mxu0 0.0
        %3393 = vmatpush1.msra.mxu0 0.0
        %3394 = vmatprep.subr.mxu0 0.0
        %3395 = vmatpush1.msra.mxu0 0.0
        %3396 = vmatprep.subr.mxu0 0.0
        %3397 = vmatpush1.msra.mxu0 0.0
        %3398 = vmatprep.subr.mxu0 0.0
        %3399 = vmatpush1.msra.mxu0 0.0
        %3400 = vmatprep.subr.mxu0 0.0
        %3401 = vmatpush1.msra.mxu0 0.0
        %3402 = vmatprep.subr.mxu0 0.0
        %3403 = vmatpush1.msra.mxu0 0.0
        %3404 = vmatprep.subr.mxu0 0.0
        %3405 = vmatpush1.msra.mxu0 0.0
        %3406 = vmatprep.subr.mxu0 0.0
        %3407 = vmatpush1.msra.mxu0 0.0
        %3408 = vmatprep.subr.mxu0 0.0
        %3409 = vmatpush1.msra.mxu0 0.0
        %3410 = vmatprep.subr.mxu0 0.0
        %3411 = vmatpush1.msra.mxu0 0.0
        %3412 = vmatprep.subr.mxu0 0.0
        %3413 = vmatpush1.msra.mxu0 0.0
        %3414 = vmatprep.mubr.f32.mxu0 0.0
        %3415 = vmatmul.mubr.f32.gmra.mrb[0].mxu0 %v3348
        %v3416 = vpop.f32.mrb[0].mxu0
        %v3417 = vadd.f32 0.0, %v3416
        %v3418 = vpop.f32.mrb[0].mxu0
        %3419 = vdwg.mxu0
        %v3421 = vsel %vm1456, %v3417, 0
        %3423 = vmatprep.subr.mxu0 0.0
        %3424 = vmatpush1.msra.mxu0 %v2535
        %3425 = vmatprep.subr.mxu0 0.0
        %3426 = vmatpush1.msra.mxu0 %v2536
        %3427 = vmatprep.subr.mxu0 0.0
        %3428 = vmatpush1.msra.mxu0 %v2537
        %3429 = vmatprep.subr.mxu0 0.0
        %3430 = vmatpush1.msra.mxu0 %v2538
        %3431 = vmatprep.subr.mxu0 0.0
        %3432 = vmatpush1.msra.mxu0 0.0
        %3433 = vmatprep.subr.mxu0 0.0
        %3434 = vmatpush1.msra.mxu0 0.0
        %3435 = vmatprep.subr.mxu0 0.0
        %3436 = vmatpush1.msra.mxu0 0.0
        %3437 = vmatprep.subr.mxu0 0.0
        %3438 = vmatpush1.msra.mxu0 0.0
        %3439 = vmatprep.subr.mxu0 0.0
        %3440 = vmatpush1.msra.mxu0 0.0
        %3441 = vmatprep.subr.mxu0 0.0
        %3442 = vmatpush1.msra.mxu0 0.0
        %3443 = vmatprep.subr.mxu0 0.0
        %3444 = vmatpush1.msra.mxu0 0.0
        %3445 = vmatprep.subr.mxu0 0.0
        %3446 = vmatpush1.msra.mxu0 0.0
        %3447 = vmatprep.subr.mxu0 0.0
        %3448 = vmatpush1.msra.mxu0 0.0
        %3449 = vmatprep.subr.mxu0 0.0
        %3450 = vmatpush1.msra.mxu0 0.0
        %3451 = vmatprep.subr.mxu0 0.0
        %3452 = vmatpush1.msra.mxu0 0.0
        %3453 = vmatprep.subr.mxu0 0.0
        %3454 = vmatpush1.msra.mxu0 0.0
        %3455 = vmatprep.subr.mxu0 0.0
        %3456 = vmatpush1.msra.mxu0 0.0
        %3457 = vmatprep.subr.mxu0 0.0
        %3458 = vmatpush1.msra.mxu0 0.0
        %3459 = vmatprep.subr.mxu0 0.0
        %3460 = vmatpush1.msra.mxu0 0.0
        %3461 = vmatprep.subr.mxu0 0.0
        %3462 = vmatpush1.msra.mxu0 0.0
        %3463 = vmatprep.subr.mxu0 0.0
        %3464 = vmatpush1.msra.mxu0 0.0
        %3465 = vmatprep.subr.mxu0 0.0
        %3466 = vmatpush1.msra.mxu0 0.0
        %3467 = vmatprep.subr.mxu0 0.0
        %3468 = vmatpush1.msra.mxu0 0.0
        %3469 = vmatprep.subr.mxu0 0.0
        %3470 = vmatpush1.msra.mxu0 0.0
        %3471 = vmatprep.subr.mxu0 0.0
        %3472 = vmatpush1.msra.mxu0 0.0
        %3473 = vmatprep.subr.mxu0 0.0
        %3474 = vmatpush1.msra.mxu0 0.0
        %3475 = vmatprep.subr.mxu0 0.0
        %3476 = vmatpush1.msra.mxu0 0.0
        %3477 = vmatprep.subr.mxu0 0.0
        %3478 = vmatpush1.msra.mxu0 0.0
        %3479 = vmatprep.subr.mxu0 0.0
        %3480 = vmatpush1.msra.mxu0 0.0
        %3481 = vmatprep.subr.mxu0 0.0
        %3482 = vmatpush1.msra.mxu0 0.0
        %3483 = vmatprep.subr.mxu0 0.0
        %3484 = vmatpush1.msra.mxu0 0.0
        %3485 = vmatprep.subr.mxu0 0.0
        %3486 = vmatpush1.msra.mxu0 0.0
        %3487 = vmatprep.mubr.f32.mxu0 0.0
        %3488 = vmatmul.mubr.f32.gmra.mrb[0].mxu0 %v3421
        %v3489 = vpop.f32.mrb[0].mxu0
        %v3490 = vadd.f32 0.0, %v3489
        %v3491 = vpop.f32.mrb[0].mxu0
        %3492 = vdwg.mxu0
        %v3493 = vadd.f32 %v3253, %v3490
        %v3495 = vlaneseq
        %v3496 = vshrl.u32 %v3495, 7
        %v3497 = vsub.s32 0, %v3496
        %v3498 = vrot.slane %v2539, %v3497
        %v3500 = vadd.f32 %v3493, %v3498
        %v3501 = vadd.f32 %v2288, %v3500
        %v3502 = vld [vmem:[%s29] sm:$0x1]
        %v3503 = vld [vmem:[%s31] sm:$0x1]
        %3504 = vadd.xlane.f32.xlu0 %v3501
        %v3505 = vpop.xlane.xlu0 %3504
        %v3506 = vmul.f32 %v3505, %v2293
        %v3507 = vsub.f32 %v3501, %v3506
        %v3508 = vmul.f32 %v3507, %v3507
        %3509 = vadd.xlane.f32.xlu0 %v3508
        %v3510 = vpop.xlane.xlu0 %3509
        %v3511 = vmul.f32 %v3510, %v2293
        %v3512 = vadd.f32 %v3511, 1e-05
        %v3513 = vrsqrt.pop %v3512
        %v3514 = vmul.f32 %v3507, %v3513
        %v3516 = vlaneseq
        %v3517 = vshrl.u32 %v3516, 7
        %v3518 = vsub.s32 0, %v3517
        %v3519 = vrot.slane %v3502, %v3518
        %v3521 = vmul.f32 %v3514, %v3519
        %v3523 = vlaneseq
        %v3524 = vshrl.u32 %v3523, 7
        %v3525 = vsub.s32 0, %v3524
        %v3526 = vrot.slane %v3503, %v3525
        %v3528 = vadd.f32 %v3521, %v3526
        %v3529 = vld [vmem:[%s33] sm:$0xff]
        %v3530 = vld [vmem:[%s33 + $0x8] sm:$0xff]
        %v3531 = vld [vmem:[%s33 + $0x10] sm:$0xff]
        %v3532 = vld [vmem:[%s33 + $0x18] sm:$0xff]
        %v3533 = vld [vmem:[%s33 + $0x20] sm:$0xff]
        %v3534 = vld [vmem:[%s33 + $0x28] sm:$0xff]
        %v3535 = vld [vmem:[%s33 + $0x30] sm:$0xff]
        %v3536 = vld [vmem:[%s33 + $0x38] sm:$0xff]
        %v3537 = vld [vmem:[%s33 + $0x40] sm:$0xff]
        %v3538 = vld [vmem:[%s33 + $0x48] sm:$0xff]
        %v3539 = vld [vmem:[%s33 + $0x50] sm:$0xff]
        %v3540 = vld [vmem:[%s33 + $0x58] sm:$0xff]
        %v3541 = vld [vmem:[%s33 + $0x60] sm:$0xff]
        %v3542 = vld [vmem:[%s33 + $0x68] sm:$0xff]
        %v3543 = vld [vmem:[%s33 + $0x70] sm:$0xff]
        %v3544 = vld [vmem:[%s33 + $0x78] sm:$0xff]
        %v3545 = vld [vmem:[%s33 + $0x80] sm:$0xff]
        %v3546 = vld [vmem:[%s33 + $0x88] sm:$0xff]
        %v3547 = vld [vmem:[%s33 + $0x90] sm:$0xff]
        %v3548 = vld [vmem:[%s33 + $0x98] sm:$0xff]
        %v3549 = vld [vmem:[%s33 + $0xa0] sm:$0xff]
        %v3550 = vld [vmem:[%s33 + $0xa8] sm:$0xff]
        %v3551 = vld [vmem:[%s33 + $0xb0] sm:$0xff]
        %v3552 = vld [vmem:[%s33 + $0xb8] sm:$0xff]
        %v3553 = vld [vmem:[%s33 + $0xc0] sm:$0xff]
        %v3554 = vld [vmem:[%s33 + $0xc8] sm:$0xff]
        %v3555 = vld [vmem:[%s33 + $0xd0] sm:$0xff]
        %v3556 = vld [vmem:[%s33 + $0xd8] sm:$0xff]
        %v3557 = vld [vmem:[%s33 + $0xe0] sm:$0xff]
        %v3558 = vld [vmem:[%s33 + $0xe8] sm:$0xff]
        %v3559 = vld [vmem:[%s33 + $0xf0] sm:$0xff]
        %v3560 = vld [vmem:[%s33 + $0xf8] sm:$0xff]
        %v3561 = vld [vmem:[%s33 + $0x100] sm:$0xff]
        %v3562 = vld [vmem:[%s33 + $0x108] sm:$0xff]
        %v3563 = vld [vmem:[%s33 + $0x110] sm:$0xff]
        %v3564 = vld [vmem:[%s33 + $0x118] sm:$0xff]
        %v3565 = vld [vmem:[%s33 + $0x120] sm:$0xff]
        %v3566 = vld [vmem:[%s33 + $0x128] sm:$0xff]
        %v3567 = vld [vmem:[%s33 + $0x130] sm:$0xff]
        %v3568 = vld [vmem:[%s33 + $0x138] sm:$0xff]
        %v3569 = vld [vmem:[%s33 + $0x140] sm:$0xff]
        %v3570 = vld [vmem:[%s33 + $0x148] sm:$0xff]
        %v3571 = vld [vmem:[%s33 + $0x150] sm:$0xff]
        %v3572 = vld [vmem:[%s33 + $0x158] sm:$0xff]
        %v3573 = vld [vmem:[%s33 + $0x160] sm:$0xff]
        %v3574 = vld [vmem:[%s33 + $0x168] sm:$0xff]
        %v3575 = vld [vmem:[%s33 + $0x170] sm:$0xff]
        %v3576 = vld [vmem:[%s33 + $0x178] sm:$0xff]
        %v3577 = vld [vmem:[%s33 + $0x180] sm:$0xff]
        %v3578 = vld [vmem:[%s33 + $0x188] sm:$0xff]
        %v3579 = vld [vmem:[%s33 + $0x190] sm:$0xff]
        %v3580 = vld [vmem:[%s33 + $0x198] sm:$0xff]
        %v3581 = vld [vmem:[%s33 + $0x1a0] sm:$0xff]
        %v3582 = vld [vmem:[%s33 + $0x1a8] sm:$0xff]
        %v3583 = vld [vmem:[%s33 + $0x1b0] sm:$0xff]
        %v3584 = vld [vmem:[%s33 + $0x1b8] sm:$0xff]
        %v3585 = vld [vmem:[%s33 + $0x1c0] sm:$0xff]
        %v3586 = vld [vmem:[%s33 + $0x1c8] sm:$0xff]
        %v3587 = vld [vmem:[%s33 + $0x1d0] sm:$0xff]
        %v3588 = vld [vmem:[%s33 + $0x1d8] sm:$0xff]
        %v3589 = vld [vmem:[%s33 + $0x1e0] sm:$0xff]
        %v3590 = vld [vmem:[%s33 + $0x1e8] sm:$0xff]
        %v3591 = vld [vmem:[%s33 + $0x1f0] sm:$0xff]
        %v3592 = vld [vmem:[%s33 + $0x1f8] sm:$0xff]
        %v3593 = vld [vmem:[%s35] sm:$0xf]
        %v3595 = vlaneseq
        %v3596 = vshrl.u32 %v3595, 7
        %v3597 = vsub.s32 0, %v3596
        %v3598 = vrot.slane %v3593, %v3597
        %v3599 = vlaneseq
        %v3600 = vshrl.u32 %v3599, 7
        %v3601 = vsub.s32 1, %v3600
        %v3602 = vrot.slane %v3593, %v3601
        %v3603 = vlaneseq
        %v3604 = vshrl.u32 %v3603, 7
        %v3605 = vsub.s32 2, %v3604
        %v3606 = vrot.slane %v3593, %v3605
        %v3607 = vlaneseq
        %v3608 = vshrl.u32 %v3607, 7
        %v3609 = vsub.s32 3, %v3608
        %v3610 = vrot.slane %v3593, %v3609
        %3615 = vmatprep.subr.mxu0 %v3530
        %3616 = vmatpush1.msra.mxu0 %v3529
        %3617 = vmatprep.subr.mxu0 %v3534
        %3618 = vmatpush1.msra.mxu0 %v3533
        %3619 = vmatprep.subr.mxu0 %v3538
        %3620 = vmatpush1.msra.mxu0 %v3537
        %3621 = vmatprep.subr.mxu0 %v3542
        %3622 = vmatpush1.msra.mxu0 %v3541
        %3623 = vmatprep.subr.mxu0 %v3546
        %3624 = vmatpush1.msra.mxu0 %v3545
        %3625 = vmatprep.subr.mxu0 %v3550
        %3626 = vmatpush1.msra.mxu0 %v3549
        %3627 = vmatprep.subr.mxu0 %v3554
        %3628 = vmatpush1.msra.mxu0 %v3553
        %3629 = vmatprep.subr.mxu0 %v3558
        %3630 = vmatpush1.msra.mxu0 %v3557
        %3631 = vmatprep.subr.mxu0 %v3562
        %3632 = vmatpush1.msra.mxu0 %v3561
        %3633 = vmatprep.subr.mxu0 %v3566
        %3634 = vmatpush1.msra.mxu0 %v3565
        %3635 = vmatprep.subr.mxu0 %v3570
        %3636 = vmatpush1.msra.mxu0 %v3569
        %3637 = vmatprep.subr.mxu0 %v3574
        %3638 = vmatpush1.msra.mxu0 %v3573
        %3639 = vmatprep.subr.mxu0 %v3578
        %3640 = vmatpush1.msra.mxu0 %v3577
        %3641 = vmatprep.subr.mxu0 %v3582
        %3642 = vmatpush1.msra.mxu0 %v3581
        %3643 = vmatprep.subr.mxu0 %v3586
        %3644 = vmatpush1.msra.mxu0 %v3585
        %3645 = vmatprep.subr.mxu0 %v3590
        %3646 = vmatpush1.msra.mxu0 %v3589
        %3647 = vmatprep.subr.mxu0 0.0
        %3648 = vmatpush1.msra.mxu0 0.0
        %3649 = vmatprep.subr.mxu0 0.0
        %3650 = vmatpush1.msra.mxu0 0.0
        %3651 = vmatprep.subr.mxu0 0.0
        %3652 = vmatpush1.msra.mxu0 0.0
        %3653 = vmatprep.subr.mxu0 0.0
        %3654 = vmatpush1.msra.mxu0 0.0
        %3655 = vmatprep.subr.mxu0 0.0
        %3656 = vmatpush1.msra.mxu0 0.0
        %3657 = vmatprep.subr.mxu0 0.0
        %3658 = vmatpush1.msra.mxu0 0.0
        %3659 = vmatprep.subr.mxu0 0.0
        %3660 = vmatpush1.msra.mxu0 0.0
        %3661 = vmatprep.subr.mxu0 0.0
        %3662 = vmatpush1.msra.mxu0 0.0
        %3663 = vmatprep.subr.mxu0 0.0
        %3664 = vmatpush1.msra.mxu0 0.0
        %3665 = vmatprep.subr.mxu0 0.0
        %3666 = vmatpush1.msra.mxu0 0.0
        %3667 = vmatprep.subr.mxu0 0.0
        %3668 = vmatpush1.msra.mxu0 0.0
        %3669 = vmatprep.subr.mxu0 0.0
        %3670 = vmatpush1.msra.mxu0 0.0
        %3671 = vmatprep.subr.mxu0 0.0
        %3672 = vmatpush1.msra.mxu0 0.0
        %3673 = vmatprep.subr.mxu0 0.0
        %3674 = vmatpush1.msra.mxu0 0.0
        %3675 = vmatprep.subr.mxu0 0.0
        %3676 = vmatpush1.msra.mxu0 0.0
        %3677 = vmatprep.subr.mxu0 0.0
        %3678 = vmatpush1.msra.mxu0 0.0
        %3679 = vmatprep.mubr.f32.mxu0 0.0
        %3680 = vmatmul.mubr.f32.gmra.mrb[0].mxu0 %v3528
        %v3681 = vpop.f32.mrb[0].mxu0
        %v3682 = vadd.f32 %v3598, %v3681
        %v3683 = vpop.f32.mrb[0].mxu0
        %v3684 = vadd.f32 %v3602, %v3683
        %3685 = vdwg.mxu0
        %3686 = vmatprep.subr.mxu0 %v3532
        %3687 = vmatpush1.msra.mxu0 %v3531
        %3688 = vmatprep.subr.mxu0 %v3536
        %3689 = vmatpush1.msra.mxu0 %v3535
        %3690 = vmatprep.subr.mxu0 %v3540
        %3691 = vmatpush1.msra.mxu0 %v3539
        %3692 = vmatprep.subr.mxu0 %v3544
        %3693 = vmatpush1.msra.mxu0 %v3543
        %3694 = vmatprep.subr.mxu0 %v3548
        %3695 = vmatpush1.msra.mxu0 %v3547
        %3696 = vmatprep.subr.mxu0 %v3552
        %3697 = vmatpush1.msra.mxu0 %v3551
        %3698 = vmatprep.subr.mxu0 %v3556
        %3699 = vmatpush1.msra.mxu0 %v3555
        %3700 = vmatprep.subr.mxu0 %v3560
        %3701 = vmatpush1.msra.mxu0 %v3559
        %3702 = vmatprep.subr.mxu0 %v3564
        %3703 = vmatpush1.msra.mxu0 %v3563
        %3704 = vmatprep.subr.mxu0 %v3568
        %3705 = vmatpush1.msra.mxu0 %v3567
        %3706 = vmatprep.subr.mxu0 %v3572
        %3707 = vmatpush1.msra.mxu0 %v3571
        %3708 = vmatprep.subr.mxu0 %v3576
        %3709 = vmatpush1.msra.mxu0 %v3575
        %3710 = vmatprep.subr.mxu0 %v3580
        %3711 = vmatpush1.msra.mxu0 %v3579
        %3712 = vmatprep.subr.mxu0 %v3584
        %3713 = vmatpush1.msra.mxu0 %v3583
        %3714 = vmatprep.subr.mxu0 %v3588
        %3715 = vmatpush1.msra.mxu0 %v3587
        %3716 = vmatprep.subr.mxu0 %v3592
        %3717 = vmatpush1.msra.mxu0 %v3591
        %3718 = vmatprep.subr.mxu0 0.0
        %3719 = vmatpush1.msra.mxu0 0.0
        %3720 = vmatprep.subr.mxu0 0.0
        %3721 = vmatpush1.msra.mxu0 0.0
        %3722 = vmatprep.subr.mxu0 0.0
        %3723 = vmatpush1.msra.mxu0 0.0
        %3724 = vmatprep.subr.mxu0 0.0
        %3725 = vmatpush1.msra.mxu0 0.0
        %3726 = vmatprep.subr.mxu0 0.0
        %3727 = vmatpush1.msra.mxu0 0.0
        %3728 = vmatprep.subr.mxu0 0.0
        %3729 = vmatpush1.msra.mxu0 0.0
        %3730 = vmatprep.subr.mxu0 0.0
        %3731 = vmatpush1.msra.mxu0 0.0
        %3732 = vmatprep.subr.mxu0 0.0
        %3733 = vmatpush1.msra.mxu0 0.0
        %3734 = vmatprep.subr.mxu0 0.0
        %3735 = vmatpush1.msra.mxu0 0.0
        %3736 = vmatprep.subr.mxu0 0.0
        %3737 = vmatpush1.msra.mxu0 0.0
        %3738 = vmatprep.subr.mxu0 0.0
        %3739 = vmatpush1.msra.mxu0 0.0
        %3740 = vmatprep.subr.mxu0 0.0
        %3741 = vmatpush1.msra.mxu0 0.0
        %3742 = vmatprep.subr.mxu0 0.0
        %3743 = vmatpush1.msra.mxu0 0.0
        %3744 = vmatprep.subr.mxu0 0.0
        %3745 = vmatpush1.msra.mxu0 0.0
        %3746 = vmatprep.subr.mxu0 0.0
        %3747 = vmatpush1.msra.mxu0 0.0
        %3748 = vmatprep.subr.mxu0 0.0
        %3749 = vmatpush1.msra.mxu0 0.0
        %3750 = vmatprep.mubr.f32.mxu0 0.0
        %3751 = vmatmul.mubr.f32.gmra.mrb[0].mxu0 %v3528
        %v3752 = vpop.f32.mrb[0].mxu0
        %v3753 = vadd.f32 %v3606, %v3752
        %v3754 = vpop.f32.mrb[0].mxu0
        %v3755 = vadd.f32 %v3610, %v3754
        %3756 = vdwg.mxu0
        %v3757 = vmul.f32 %v3682, -1.702
        %v3758 = vmul.f32 %v3684, -1.702
        %v3759 = vmul.f32 %v3753, -1.702
        %v3760 = vmul.f32 %v3755, -1.702
        %v3761 = vmul.f32 %v3757, 1.442695
        %v3762 = vpow.pop %v3761
        %v3763 = vmul.f32 %v3758, 1.442695
        %v3764 = vpow.pop %v3763
        %v3765 = vmul.f32 %v3759, 1.442695
        %v3766 = vpow.pop %v3765
        %v3767 = vmul.f32 %v3760, 1.442695
        %v3768 = vpow.pop %v3767
        %v3769 = vadd.f32 %v3762, 1.0
        %v3770 = vadd.f32 %v3764, 1.0
        %v3771 = vadd.f32 %v3766, 1.0
        %v3772 = vadd.f32 %v3768, 1.0
        %v3773 = vrcp.pop %v3769
        %v3774 = vmul.f32 1.0, %v3773
        %v3775 = vrcp.pop %v3770
        %v3776 = vmul.f32 1.0, %v3775
        %v3777 = vrcp.pop %v3771
        %v3778 = vmul.f32 1.0, %v3777
        %v3779 = vrcp.pop %v3772
        %v3780 = vmul.f32 1.0, %v3779
        %v3781 = vmul.f32 %v3682, %v3774
        %v3782 = vmul.f32 %v3684, %v3776
        %v3783 = vmul.f32 %v3753, %v3778
        %v3784 = vmul.f32 %v3755, %v3780
        %v3785 = vld [vmem:[#allocation6] sm:$0xff]
        %v3786 = vld [vmem:[#allocation6 + $0x8] sm:$0xff]
        %v3787 = vld [vmem:[#allocation6 + $0x10] sm:$0xff]
        %v3788 = vld [vmem:[#allocation6 + $0x18] sm:$0xff]
        %v3789 = vld [vmem:[#allocation6 + $0x20] sm:$0xff]
        %v3790 = vld [vmem:[#allocation6 + $0x28] sm:$0xff]
        %v3791 = vld [vmem:[#allocation6 + $0x30] sm:$0xff]
        %v3792 = vld [vmem:[#allocation6 + $0x38] sm:$0xff]
        %v3793 = vld [vmem:[#allocation6 + $0x40] sm:$0xff]
        %v3794 = vld [vmem:[#allocation6 + $0x48] sm:$0xff]
        %v3795 = vld [vmem:[#allocation6 + $0x50] sm:$0xff]
        %v3796 = vld [vmem:[#allocation6 + $0x58] sm:$0xff]
        %v3797 = vld [vmem:[#allocation6 + $0x60] sm:$0xff]
        %v3798 = vld [vmem:[#allocation6 + $0x68] sm:$0xff]
        %v3799 = vld [vmem:[#allocation6 + $0x70] sm:$0xff]
        %v3800 = vld [vmem:[#allocation6 + $0x78] sm:$0xff]
        %v3801 = vld [vmem:[#allocation6 + $0x80] sm:$0xff]
        %v3802 = vld [vmem:[#allocation6 + $0x88] sm:$0xff]
        %v3803 = vld [vmem:[#allocation6 + $0x90] sm:$0xff]
        %v3804 = vld [vmem:[#allocation6 + $0x98] sm:$0xff]
        %v3805 = vld [vmem:[#allocation6 + $0xa0] sm:$0xff]
        %v3806 = vld [vmem:[#allocation6 + $0xa8] sm:$0xff]
        %v3807 = vld [vmem:[#allocation6 + $0xb0] sm:$0xff]
        %v3808 = vld [vmem:[#allocation6 + $0xb8] sm:$0xff]
        %v3809 = vld [vmem:[#allocation6 + $0xc0] sm:$0xff]
        %v3810 = vld [vmem:[#allocation6 + $0xc8] sm:$0xff]
        %v3811 = vld [vmem:[#allocation6 + $0xd0] sm:$0xff]
        %v3812 = vld [vmem:[#allocation6 + $0xd8] sm:$0xff]
        %v3813 = vld [vmem:[#allocation6 + $0xe0] sm:$0xff]
        %v3814 = vld [vmem:[#allocation6 + $0xe8] sm:$0xff]
        %v3815 = vld [vmem:[#allocation6 + $0xf0] sm:$0xff]
        %v3816 = vld [vmem:[#allocation6 + $0xf8] sm:$0xff]
        %v3817 = vld [vmem:[#allocation6 + $0x100] sm:$0xff]
        %v3818 = vld [vmem:[#allocation6 + $0x108] sm:$0xff]
        %v3819 = vld [vmem:[#allocation6 + $0x110] sm:$0xff]
        %v3820 = vld [vmem:[#allocation6 + $0x118] sm:$0xff]
        %v3821 = vld [vmem:[#allocation6 + $0x120] sm:$0xff]
        %v3822 = vld [vmem:[#allocation6 + $0x128] sm:$0xff]
        %v3823 = vld [vmem:[#allocation6 + $0x130] sm:$0xff]
        %v3824 = vld [vmem:[#allocation6 + $0x138] sm:$0xff]
        %v3825 = vld [vmem:[#allocation6 + $0x140] sm:$0xff]
        %v3826 = vld [vmem:[#allocation6 + $0x148] sm:$0xff]
        %v3827 = vld [vmem:[#allocation6 + $0x150] sm:$0xff]
        %v3828 = vld [vmem:[#allocation6 + $0x158] sm:$0xff]
        %v3829 = vld [vmem:[#allocation6 + $0x160] sm:$0xff]
        %v3830 = vld [vmem:[#allocation6 + $0x168] sm:$0xff]
        %v3831 = vld [vmem:[#allocation6 + $0x170] sm:$0xff]
        %v3832 = vld [vmem:[#allocation6 + $0x178] sm:$0xff]
        %v3833 = vld [vmem:[#allocation6 + $0x180] sm:$0xff]
        %v3834 = vld [vmem:[#allocation6 + $0x188] sm:$0xff]
        %v3835 = vld [vmem:[#allocation6 + $0x190] sm:$0xff]
        %v3836 = vld [vmem:[#allocation6 + $0x198] sm:$0xff]
        %v3837 = vld [vmem:[#allocation6 + $0x1a0] sm:$0xff]
        %v3838 = vld [vmem:[#allocation6 + $0x1a8] sm:$0xff]
        %v3839 = vld [vmem:[#allocation6 + $0x1b0] sm:$0xff]
        %v3840 = vld [vmem:[#allocation6 + $0x1b8] sm:$0xff]
        %v3841 = vld [vmem:[#allocation6 + $0x1c0] sm:$0xff]
        %v3842 = vld [vmem:[#allocation6 + $0x1c8] sm:$0xff]
        %v3843 = vld [vmem:[#allocation6 + $0x1d0] sm:$0xff]
        %v3844 = vld [vmem:[#allocation6 + $0x1d8] sm:$0xff]
        %v3845 = vld [vmem:[#allocation6 + $0x1e0] sm:$0xff]
        %v3846 = vld [vmem:[#allocation6 + $0x1e8] sm:$0xff]
        %v3847 = vld [vmem:[#allocation6 + $0x1f0] sm:$0xff]
        %v3848 = vld [vmem:[#allocation6 + $0x1f8] sm:$0xff]
        %3849 = vmatprep.subr.mxu0 0.0
        %3850 = vmatpush1.msra.mxu0 %v3785
        %3851 = vmatprep.subr.mxu0 0.0
        %3852 = vmatpush1.msra.mxu0 %v3786
        %3853 = vmatprep.subr.mxu0 0.0
        %3854 = vmatpush1.msra.mxu0 %v3787
        %3855 = vmatprep.subr.mxu0 0.0
        %3856 = vmatpush1.msra.mxu0 %v3788
        %3857 = vmatprep.subr.mxu0 0.0
        %3858 = vmatpush1.msra.mxu0 %v3789
        %3859 = vmatprep.subr.mxu0 0.0
        %3860 = vmatpush1.msra.mxu0 %v3790
        %3861 = vmatprep.subr.mxu0 0.0
        %3862 = vmatpush1.msra.mxu0 %v3791
        %3863 = vmatprep.subr.mxu0 0.0
        %3864 = vmatpush1.msra.mxu0 %v3792
        %3865 = vmatprep.subr.mxu0 0.0
        %3866 = vmatpush1.msra.mxu0 %v3793
        %3867 = vmatprep.subr.mxu0 0.0
        %3868 = vmatpush1.msra.mxu0 %v3794
        %3869 = vmatprep.subr.mxu0 0.0
        %3870 = vmatpush1.msra.mxu0 %v3795
        %3871 = vmatprep.subr.mxu0 0.0
        %3872 = vmatpush1.msra.mxu0 %v3796
        %3873 = vmatprep.subr.mxu0 0.0
        %3874 = vmatpush1.msra.mxu0 %v3797
        %3875 = vmatprep.subr.mxu0 0.0
        %3876 = vmatpush1.msra.mxu0 %v3798
        %3877 = vmatprep.subr.mxu0 0.0
        %3878 = vmatpush1.msra.mxu0 %v3799
        %3879 = vmatprep.subr.mxu0 0.0
        %3880 = vmatpush1.msra.mxu0 %v3800
        %3881 = vmatprep.subr.mxu0 0.0
        %3882 = vmatpush1.msra.mxu0 %v3801
        %3883 = vmatprep.subr.mxu0 0.0
        %3884 = vmatpush1.msra.mxu0 %v3802
        %3885 = vmatprep.subr.mxu0 0.0
        %3886 = vmatpush1.msra.mxu0 %v3803
        %3887 = vmatprep.subr.mxu0 0.0
        %3888 = vmatpush1.msra.mxu0 %v3804
        %3889 = vmatprep.subr.mxu0 0.0
        %3890 = vmatpush1.msra.mxu0 %v3805
        %3891 = vmatprep.subr.mxu0 0.0
        %3892 = vmatpush1.msra.mxu0 %v3806
        %3893 = vmatprep.subr.mxu0 0.0
        %3894 = vmatpush1.msra.mxu0 %v3807
        %3895 = vmatprep.subr.mxu0 0.0
        %3896 = vmatpush1.msra.mxu0 %v3808
        %3897 = vmatprep.subr.mxu0 0.0
        %3898 = vmatpush1.msra.mxu0 %v3809
        %3899 = vmatprep.subr.mxu0 0.0
        %3900 = vmatpush1.msra.mxu0 %v3810
        %3901 = vmatprep.subr.mxu0 0.0
        %3902 = vmatpush1.msra.mxu0 %v3811
        %3903 = vmatprep.subr.mxu0 0.0
        %3904 = vmatpush1.msra.mxu0 %v3812
        %3905 = vmatprep.subr.mxu0 0.0
        %3906 = vmatpush1.msra.mxu0 %v3813
        %3907 = vmatprep.subr.mxu0 0.0
        %3908 = vmatpush1.msra.mxu0 %v3814
        %3909 = vmatprep.subr.mxu0 0.0
        %3910 = vmatpush1.msra.mxu0 %v3815
        %3911 = vmatprep.subr.mxu0 0.0
        %3912 = vmatpush1.msra.mxu0 %v3816
        %3913 = vmatprep.mubr.f32.mxu0 %v3782
        %3914 = vmatmul.mubr.f32.gmra.mrb[0].mxu0 %v3781
        %v3915 = vpop.f32.mrb[0].mxu0
        %v3916 = vadd.f32 0.0, %v3915
        %v3917 = vpop.f32.mrb[0].mxu0
        %3918 = vdwg.mxu0
        %3919 = vmatprep.subr.mxu0 0.0
        %3920 = vmatpush1.msra.mxu0 %v3817
        %3921 = vmatprep.subr.mxu0 0.0
        %3922 = vmatpush1.msra.mxu0 %v3818
        %3923 = vmatprep.subr.mxu0 0.0
        %3924 = vmatpush1.msra.mxu0 %v3819
        %3925 = vmatprep.subr.mxu0 0.0
        %3926 = vmatpush1.msra.mxu0 %v3820
        %3927 = vmatprep.subr.mxu0 0.0
        %3928 = vmatpush1.msra.mxu0 %v3821
        %3929 = vmatprep.subr.mxu0 0.0
        %3930 = vmatpush1.msra.mxu0 %v3822
        %3931 = vmatprep.subr.mxu0 0.0
        %3932 = vmatpush1.msra.mxu0 %v3823
        %3933 = vmatprep.subr.mxu0 0.0
        %3934 = vmatpush1.msra.mxu0 %v3824
        %3935 = vmatprep.subr.mxu0 0.0
        %3936 = vmatpush1.msra.mxu0 %v3825
        %3937 = vmatprep.subr.mxu0 0.0
        %3938 = vmatpush1.msra.mxu0 %v3826
        %3939 = vmatprep.subr.mxu0 0.0
        %3940 = vmatpush1.msra.mxu0 %v3827
        %3941 = vmatprep.subr.mxu0 0.0
        %3942 = vmatpush1.msra.mxu0 %v3828
        %3943 = vmatprep.subr.mxu0 0.0
        %3944 = vmatpush1.msra.mxu0 %v3829
        %3945 = vmatprep.subr.mxu0 0.0
        %3946 = vmatpush1.msra.mxu0 %v3830
        %3947 = vmatprep.subr.mxu0 0.0
        %3948 = vmatpush1.msra.mxu0 %v3831
        %3949 = vmatprep.subr.mxu0 0.0
        %3950 = vmatpush1.msra.mxu0 %v3832
        %3951 = vmatprep.subr.mxu0 0.0
        %3952 = vmatpush1.msra.mxu0 %v3833
        %3953 = vmatprep.subr.mxu0 0.0
        %3954 = vmatpush1.msra.mxu0 %v3834
        %3955 = vmatprep.subr.mxu0 0.0
        %3956 = vmatpush1.msra.mxu0 %v3835
        %3957 = vmatprep.subr.mxu0 0.0
        %3958 = vmatpush1.msra.mxu0 %v3836
        %3959 = vmatprep.subr.mxu0 0.0
        %3960 = vmatpush1.msra.mxu0 %v3837
        %3961 = vmatprep.subr.mxu0 0.0
        %3962 = vmatpush1.msra.mxu0 %v3838
        %3963 = vmatprep.subr.mxu0 0.0
        %3964 = vmatpush1.msra.mxu0 %v3839
        %3965 = vmatprep.subr.mxu0 0.0
        %3966 = vmatpush1.msra.mxu0 %v3840
        %3967 = vmatprep.subr.mxu0 0.0
        %3968 = vmatpush1.msra.mxu0 %v3841
        %3969 = vmatprep.subr.mxu0 0.0
        %3970 = vmatpush1.msra.mxu0 %v3842
        %3971 = vmatprep.subr.mxu0 0.0
        %3972 = vmatpush1.msra.mxu0 %v3843
        %3973 = vmatprep.subr.mxu0 0.0
        %3974 = vmatpush1.msra.mxu0 %v3844
        %3975 = vmatprep.subr.mxu0 0.0
        %3976 = vmatpush1.msra.mxu0 %v3845
        %3977 = vmatprep.subr.mxu0 0.0
        %3978 = vmatpush1.msra.mxu0 %v3846
        %3979 = vmatprep.subr.mxu0 0.0
        %3980 = vmatpush1.msra.mxu0 %v3847
        %3981 = vmatprep.subr.mxu0 0.0
        %3982 = vmatpush1.msra.mxu0 %v3848
        %3983 = vmatprep.mubr.f32.mxu0 %v3784
        %3984 = vmatmul.mubr.f32.gmra.mrb[0].mxu0 %v3783
        %v3985 = vpop.f32.mrb[0].mxu0
        %v3986 = vadd.f32 %v3916, %v3985
        %v3987 = vpop.f32.mrb[0].mxu0
        %3988 = vdwg.mxu0
        %v3989 = vadd.f32 %v3501, %v3986
        %v3990 = vld [vmem:[%s39] sm:$0x1]
        %v3992 = vlaneseq
        %v3993 = vshrl.u32 %v3992, 7
        %v3994 = vsub.s32 0, %v3993
        %v3995 = vrot.slane %v3990, %v3994
        %v3997 = vadd.f32 %v3989, %v3995
        %3998 = vst [vmem:[%s1170] sm:$0xff] %v3997
        %p3999 = scmp.lt.s32.totalorder %s84, 1
        %s4000 = scalar_select %p3999, %s84, 1
        %s4001 = smul.addr %s4000, 8
        %s4002 = scalar_lea.vmem %s69, %s4001
        // Predicated region
        $region185: #{residual_attention_block_forward.1} parent=155 // pred_check
          %p4003 = pneg %p831
        $region186: #{residual_attention_block_forward.1} parent=155 // pred_check_branch
          %4005 = sbr.rel (%p4003) target = $region188
        $region187: #{residual_attention_block_forward.1} parent=155 // pred_region
          _
        $region188: #{residual_attention_block_forward.1} parent=155 // pred_fallthru
          _
      $region156: #{residual_attention_block_forward.1} parent=5 // pred_fallthru
        _
      %p4006 = scmp.le.s32.totalorder 2, %s79
      // Predicated region
      $region189: #{residual_attention_block_forward.1} parent=5 // pred_check
        %p4007 = pneg %p4006
      $region190: #{residual_attention_block_forward.1} parent=5 // pred_check_branch
        %4009 = sbr.rel (%p4007) target = $region192
      $region191: #{residual_attention_block_forward.1} parent=5 // pred_region
        %s4010 = ssub.s32 %s79, 2
        // Predicated region
        $region193: #{residual_attention_block_forward.1} parent=191 // pred_check
          %p4011 = pneg %p837
        $region194: #{residual_attention_block_forward.1} parent=191 // pred_check_branch
          %4013 = sbr.rel (%p4011) target = $region196
        $region195: #{residual_attention_block_forward.1} parent=191 // pred_region
          %p4014 = scmp.lt.s32.totalorder %s85, 1
          %s4015 = scalar_select %p4014, %s85, 1
          %s4016 = smul.addr %s4015, 8
          %s4017 = scalar_lea.vmem %s69, %s4016
        $region196: #{residual_attention_block_forward.1} parent=191 // pred_fallthru
          _
      $region192: #{residual_attention_block_forward.1} parent=5 // pred_fallthru
        _
    $region6: #{residual_attention_block_forward.1} parent=1 // loop_footer
      %s83 = sadd.s32 1, %s79
    $region7: #{residual_attention_block_forward.1} parent=1 // loop_footer_branch
      %78 = sbr.rel target = $region3
    $region8: #{residual_attention_block_forward.1} parent=1 // loop_exit
      _
    %4018 = vsyncpa [#allocation3], 1
    %s4019 = scalar_lea.sflag [#allocation3], 1
    %4020 = vsyncpa %s4019, 1
    %4021 = vsyncpa [#allocation5], 1
    %4022 = vsyncpa [#allocation8], 1
    %4023 = vsyncpa [#allocation11], 1

</llo_original>
